<compile_context>
chip_gen: v5e
topology: v5e:2x2
jax: 0.10.0
libtpu: 0.0.40
codegen_flags: <defaults>
</compile_context>

<pallas_src>
import math
from functools import partial

import jax
import jax.numpy as jnp
from jax.experimental import pallas as pl
from jax.experimental.pallas import tpu as pltpu

_VMEM = pl.BlockSpec(memory_space=pltpu.MemorySpace.VMEM)
_LN_EPS = 1e-5
_LEAKY_SLOPE = 0.01  # nn.LeakyReLU() default


# --------------------------------------------------------------------------
# Shared numerics helpers (used by BOTH the kernel and the JAX reference so
# the bf16 matmul rounding matches and the correctness check stays tight).
# --------------------------------------------------------------------------
def _mxu_dot(a, b):
    """bf16 x bf16 -> f32 accumulate: one MXU pass (per perf review)."""
    return jnp.dot(a.astype(jnp.bfloat16), b.astype(jnp.bfloat16),
                   preferred_element_type=jnp.float32)


def _mxu_einsum(eq, a, b):
    return jnp.einsum(eq, a.astype(jnp.bfloat16), b.astype(jnp.bfloat16),
                      preferred_element_type=jnp.float32)


def _layer_norm(x, gamma, beta):
    mu = jnp.mean(x, axis=-1, keepdims=True)
    var = jnp.mean((x - mu) ** 2, axis=-1, keepdims=True)
    return (x - mu) * jax.lax.rsqrt(var + _LN_EPS) * gamma + beta


# --------------------------------------------------------------------------
# Positional-encoding buffer (matches PyTorch PositionalEncoding.__init__).
# --------------------------------------------------------------------------
def make_positional_encoding(d_model: int, max_len: int = 64) -> jnp.ndarray:
    assert d_model % 2 == 0
    position = jnp.arange(max_len, dtype=jnp.float32)[:, None]
    div_term = jnp.exp(
        jnp.arange(0, d_model, 2, dtype=jnp.float32) * (-math.log(10000.0) / d_model))
    angles = position * div_term
    pe = jnp.zeros((max_len, d_model), dtype=jnp.float32)
    pe = pe.at[:, 0::2].set(jnp.sin(angles))
    pe = pe.at[:, 1::2].set(jnp.cos(angles))
    return pe  # (max_len, d_model)


# --------------------------------------------------------------------------
# The single fused forward kernel (grid-less, everything VMEM-resident).
# Per-layer vector slab rows: 0 bq, 1 bk, 2 bv, 3 bo, 4 g1, 5 be1, 6 b1,
#                             7 b2, 8 g2, 9 be2.
# Head slab rows: 0 fc1_b, 1 fc2_w^T, 2 fc2_b (padded).
# --------------------------------------------------------------------------
def _fused_forward_kernel(x_ref, emb_w_ref, pe_ref, wqkv_ref, wo_ref, w1_ref,
                          w2_ref, vec_ref, fc1_w_ref, head_ref, o_ref,
                          *, B, S, F, D, H, L):
    Hd = D // H
    M = B * S
    scale = 1.0 / math.sqrt(Hd)

    # Embedding Linear; PE slab already contains tiled PE + embedding bias.
    h = _mxu_dot(x_ref[...], emb_w_ref[...]) + pe_ref[...]            # (M, D) f32

    for l in range(L):  # static unroll over layers (L == 2)
        vec = vec_ref[l]                                               # (10, D)

        # One wide QKV GEMM: (M, D) @ (D, 3D).
        qkv = _mxu_dot(h, wqkv_ref[l])                                 # (M, 3D)
        q = qkv[:, 0:D] + vec[0:1, :]
        k = qkv[:, D:2 * D] + vec[1:2, :]
        v = qkv[:, 2 * D:3 * D] + vec[2:3, :]

        # Stack heads along a batch axis -> single batched einsum per stage.
        qh = jnp.concatenate([q[:, i * Hd:(i + 1) * Hd] for i in range(H)],
                             axis=0).reshape(H * B, S, Hd)
        kh = jnp.concatenate([k[:, i * Hd:(i + 1) * Hd] for i in range(H)],
                             axis=0).reshape(H * B, S, Hd)
        vh = jnp.concatenate([v[:, i * Hd:(i + 1) * Hd] for i in range(H)],
                             axis=0).reshape(H * B, S, Hd)

        s = _mxu_einsum("nqd,nkd->nqk", qh, kh) * scale                # (H*B, S, S)
        s = s - jnp.max(s, axis=-1, keepdims=True)
        p = jnp.exp(s)
        p = p / jnp.sum(p, axis=-1, keepdims=True)
        oh = _mxu_einsum("nqk,nkd->nqd", p, vh)                        # (H*B, S, Hd)

        # Heads back onto the lane dim (concat) + single out-projection GEMM.
        oh2 = oh.reshape(H, M, Hd)
        attn = jnp.concatenate([oh2[i] for i in range(H)], axis=-1)    # (M, D)
        attn = _mxu_dot(attn, wo_ref[l]) + vec[3:4, :]

        # Residual + post-LayerNorm 1 (dropout identity in eval mode).
        h1 = _layer_norm(h + attn, vec[4:5, :], vec[5:6, :])

        # FFN: Linear -> ReLU -> Linear (dim_feedforward == hidden_dim).
        ff = jnp.maximum(_mxu_dot(h1, w1_ref[l]) + vec[6:7, :], 0.0)
        ff = _mxu_dot(ff, w2_ref[l]) + vec[7:8, :]

        # Residual + post-LayerNorm 2.
        h = _layer_norm(h1 + ff, vec[8:9, :], vec[9:10, :])

    # Mean over sequence, then fc head (Linear -> LeakyReLU -> Linear).
    pooled = jnp.mean(h.reshape(B, S, D), axis=1)                      # (B, D)
    hv = head_ref[...]
    z = _mxu_dot(pooled, fc1_w_ref[...]) + hv[0:1, :]
    z = jnp.where(z > 0, z, _LEAKY_SLOPE * z)
    # fc2 (D -> 1) on the VPU: row-scale + lane reduce, no N=1 MXU dot.
    o_ref[...] = jnp.sum(z * hv[1:2, :], axis=-1, keepdims=True) + hv[2:3, 0:1]


@partial(jax.jit, static_argnames=("num_heads",))
def transformer_forward(x, params, *, num_heads):
    B, S, F = x.shape
    D = params["emb_w"].shape[1]
    L = params["wqkv"].shape[0]
    x2 = x.reshape(B * S, F)
    # Pre-tile PE to (B*S, D) and fold the embedding bias in (one add in-kernel).
    pe_slab = jnp.tile(params["pe"][:S], (B, 1)) + params["emb_b"]
    # ~2 MB total resident data -> comfortably under every generation's scoped
    # VMEM limit; no grid / no vmem_limit_bytes override needed at this size.
    return pl.pallas_call(
        partial(_fused_forward_kernel, B=B, S=S, F=F, D=D, H=num_heads, L=L),
        out_shape=jax.ShapeDtypeStruct((B, 1), jnp.float32),
        in_specs=[_VMEM] * 10,
        out_specs=_VMEM,
    )(x2, params["emb_w"], pe_slab, params["wqkv"], params["wo"],
      params["w1"], params["w2"], params["vecs"], params["fc1_w"],
      params["head_slab"])


# --------------------------------------------------------------------------
# Parameter init. Matmul weights stored bf16 (half the DMA bytes, 1 MXU pass);
# biases / LN params / PE stay f32. Per-layer weights stacked along axis 0.
# --------------------------------------------------------------------------
def init_params(key, input_dim, hidden_dim, output_dim, num_heads, num_layers,
                max_len=64):
    assert hidden_dim % num_heads == 0
    assert output_dim == 1
    D, F, L = hidden_dim, input_dim, num_layers
    keys = iter(jax.random.split(key, 8 + 16 * num_layers))

    def w(fan_in, fan_out):
        return (jax.random.normal(next(keys), (fan_in, fan_out), jnp.float32)
                / math.sqrt(fan_in))

    def b(n):
        return 0.1 * jax.random.normal(next(keys), (1, n), jnp.float32)

    def g(n):
        return 1.0 + 0.1 * jax.random.normal(next(keys), (1, n), jnp.float32)

    wqkv, wo, w1, w2, vecs = [], [], [], [], []
    for _ in range(L):
        wqkv.append(jnp.concatenate([w(D, D), w(D, D), w(D, D)], axis=1))  # (D, 3D)
        wo.append(w(D, D))
        w1.append(w(D, D))
        w2.append(w(D, D))
        # rows: bq, bk, bv, bo, g1, be1, b1, b2, g2, be2
        vecs.append(jnp.concatenate(
            [b(D), b(D), b(D), b(D), g(D), b(D), b(D), b(D), g(D), b(D)], axis=0))

    fc1_b = b(D)
    fc2_w = w(D, output_dim)          # (D, 1)
    fc2_b = b(output_dim)             # (1, 1)
    head_slab = jnp.concatenate(
        [fc1_b, fc2_w.T, jnp.pad(fc2_b, ((0, 0), (0, D - output_dim)))], axis=0)

    bf16 = jnp.bfloat16
    return {
        "emb_w": w(F, D).astype(bf16),
        "emb_b": b(D),
        "pe": make_positional_encoding(D, max_len),
        "wqkv": jnp.stack(wqkv).astype(bf16),   # (L, D, 3D)
        "wo": jnp.stack(wo).astype(bf16),       # (L, D, D)
        "w1": jnp.stack(w1).astype(bf16),
        "w2": jnp.stack(w2).astype(bf16),
        "vecs": jnp.stack(vecs),                # (L, 10, D) f32
        "fc1_w": w(D, D).astype(bf16),
        "head_slab": head_slab,                 # (3, D) f32
    }


# --------------------------------------------------------------------------
# Pure-JAX reference (textbook per-head MHA, same bf16 matmul rounding).
# --------------------------------------------------------------------------
def reference_forward(x, params, num_heads):
    B, S, F = x.shape
    D = params["emb_w"].shape[1]
    H, Hd = num_heads, D // num_heads
    scale = 1.0 / math.sqrt(Hd)
    L = params["wqkv"].shape[0]

    h = _mxu_dot(x.reshape(B * S, F), params["emb_w"])
    h = h + jnp.tile(params["pe"][:S], (B, 1)) + params["emb_b"]

    for l in range(L):
        vec = params["vecs"][l]
        qkv = _mxu_dot(h, params["wqkv"][l])
        q = qkv[:, 0:D] + vec[0:1]
        k = qkv[:, D:2 * D] + vec[1:2]
        v = qkv[:, 2 * D:3 * D] + vec[2:3]
        heads = []
        for hh in range(H):
            sl = slice(hh * Hd, (hh + 1) * Hd)
            qh = q[:, sl].reshape(B, S, Hd)
            kh = k[:, sl].reshape(B, S, Hd)
            vh = v[:, sl].reshape(B, S, Hd)
            s = _mxu_einsum("bqd,bkd->bqk", qh, kh) * scale
            s = s - jnp.max(s, axis=-1, keepdims=True)
            p = jnp.exp(s)
            p = p / jnp.sum(p, axis=-1, keepdims=True)
            heads.append(_mxu_einsum("bqk,bkd->bqd", p, vh).reshape(B * S, Hd))
        attn = _mxu_dot(jnp.concatenate(heads, axis=-1), params["wo"][l]) + vec[3:4]
        h1 = _layer_norm(h + attn, vec[4:5], vec[5:6])
        ff = jnp.maximum(_mxu_dot(h1, params["w1"][l]) + vec[6:7], 0.0)
        ff = _mxu_dot(ff, params["w2"][l]) + vec[7:8]
        h = _layer_norm(h1 + ff, vec[8:9], vec[9:10])

    pooled = jnp.mean(h.reshape(B, S, D), axis=1)
    hs = params["head_slab"]
    z = _mxu_dot(pooled, params["fc1_w"]) + hs[0:1]
    z = jnp.where(z > 0, z, _LEAKY_SLOPE * z)
    return jnp.sum(z * hs[1:2], axis=-1, keepdims=True) + hs[2:3, 0:1]


if __name__ == "__main__":
    B, S = 2, 8                       # batch, sequence length (<= max_len=64)
    INPUT_DIM, HIDDEN_DIM, OUTPUT_DIM = 16, 256, 1
    NUM_HEADS, NUM_LAYERS = 2, 2      # head_dim = 128 (lane-dense)

    key = jax.random.PRNGKey(0)
    kx, kp = jax.random.split(key)
    x = jax.random.normal(kx, (B, S, INPUT_DIM), dtype=jnp.float32)
    params = init_params(kp, INPUT_DIM, HIDDEN_DIM, OUTPUT_DIM, NUM_HEADS, NUM_LAYERS)

    out = transformer_forward(x, params, num_heads=NUM_HEADS)
    out = jax.block_until_ready(out)

    ref = reference_forward(x, params, NUM_HEADS)
    assert out.shape == (B, OUTPUT_DIM), out.shape
    max_diff = float(jnp.max(jnp.abs(out - ref)))
    assert jnp.allclose(out, ref, atol=2e-3, rtol=2e-3), (
        f"mismatch vs reference: max abs diff {max_diff}")

    print("KERNEL_OK")
</pallas_src>

<mosaic_0001>
module attributes {stable_mosaic.version = 11 : i64} {
  func.func @_fused_forward_kernel(%arg0: memref<16x16xf32, #tpu.memory_space<vmem>>, %arg1: memref<16x256xbf16, #tpu.memory_space<vmem>>, %arg2: memref<16x256xf32, #tpu.memory_space<vmem>>, %arg3: memref<2x256x768xbf16, #tpu.memory_space<vmem>>, %arg4: memref<2x256x256xbf16, #tpu.memory_space<vmem>>, %arg5: memref<2x256x256xbf16, #tpu.memory_space<vmem>>, %arg6: memref<2x256x256xbf16, #tpu.memory_space<vmem>>, %arg7: memref<2x10x256xf32, #tpu.memory_space<vmem>>, %arg8: memref<256x256xbf16, #tpu.memory_space<vmem>>, %arg9: memref<3x256xf32, #tpu.memory_space<vmem>>, %arg10: memref<2x1xf32, #tpu.memory_space<vmem>>) attributes {dimension_semantics = [], scalar_prefetch = 0 : i64, scratch_operands = 0 : i64, tpu.core_type = #tpu.core_type<tc>} {
    %c0 = arith.constant 0 : index
    %c0_0 = arith.constant 0 : index
    %0 = vector.load %arg0[%c0, %c0_0] : memref<16x16xf32, #tpu.memory_space<vmem>>, vector<16x16xf32>
    %c0_1 = arith.constant 0 : index
    %c0_2 = arith.constant 0 : index
    %1 = vector.load %arg1[%c0_1, %c0_2] : memref<16x256xbf16, #tpu.memory_space<vmem>>, vector<16x256xbf16>
    %2 = arith.truncf %0 : vector<16x16xf32> to vector<16x16xbf16>
    %cst = arith.constant dense<0.000000e+00> : vector<16x256xf32>
    %3 = tpu.matmul %2, %1, %cst {dimension_numbers = #tpu.dot_dimension_numbers<[1], [0], [0], [1], [0, 0, 1, 1], [], []>} : vector<16x16xbf16>, vector<16x256xbf16>, vector<16x256xf32> -> vector<16x256xf32>
    %c0_3 = arith.constant 0 : index
    %c0_4 = arith.constant 0 : index
    %4 = vector.load %arg2[%c0_3, %c0_4] : memref<16x256xf32, #tpu.memory_space<vmem>>, vector<16x256xf32>
    %5 = arith.addf %3, %4 : vector<16x256xf32>
    %c0_5 = arith.constant 0 : index
    %c0_6 = arith.constant 0 : index
    %c0_7 = arith.constant 0 : index
    %6 = vector.load %arg7[%c0_5, %c0_6, %c0_7] : memref<2x10x256xf32, #tpu.memory_space<vmem>>, vector<1x10x256xf32>
    %7 = vector.shape_cast %6 : vector<1x10x256xf32> to vector<10x256xf32>
    %c0_8 = arith.constant 0 : index
    %c0_9 = arith.constant 0 : index
    %c0_10 = arith.constant 0 : index
    %8 = vector.load %arg3[%c0_8, %c0_9, %c0_10] : memref<2x256x768xbf16, #tpu.memory_space<vmem>>, vector<1x256x768xbf16>
    %9 = vector.shape_cast %8 : vector<1x256x768xbf16> to vector<256x768xbf16>
    %10 = arith.truncf %5 : vector<16x256xf32> to vector<16x256xbf16>
    %cst_11 = arith.constant dense<0.000000e+00> : vector<16x768xf32>
    %11 = tpu.matmul %10, %9, %cst_11 {dimension_numbers = #tpu.dot_dimension_numbers<[1], [0], [0], [1], [0, 0, 1, 1], [], []>} : vector<16x256xbf16>, vector<256x768xbf16>, vector<16x768xf32> -> vector<16x768xf32>
    %12 = vector.extract_strided_slice %11 {offsets = [0, 0], sizes = [16, 256], strides = [1, 1]} : vector<16x768xf32> to vector<16x256xf32>
    %13 = vector.extract_strided_slice %7 {offsets = [0, 0], sizes = [1, 256], strides = [1, 1]} : vector<10x256xf32> to vector<1x256xf32>
    %14 = vector.broadcast %13 : vector<1x256xf32> to vector<16x256xf32>
    %15 = arith.addf %12, %14 : vector<16x256xf32>
    %16 = vector.extract_strided_slice %11 {offsets = [0, 256], sizes = [16, 256], strides = [1, 1]} : vector<16x768xf32> to vector<16x256xf32>
    %17 = vector.extract_strided_slice %7 {offsets = [1, 0], sizes = [1, 256], strides = [1, 1]} : vector<10x256xf32> to vector<1x256xf32>
    %18 = vector.broadcast %17 : vector<1x256xf32> to vector<16x256xf32>
    %19 = arith.addf %16, %18 : vector<16x256xf32>
    %20 = vector.extract_strided_slice %11 {offsets = [0, 512], sizes = [16, 256], strides = [1, 1]} : vector<16x768xf32> to vector<16x256xf32>
    %21 = vector.extract_strided_slice %7 {offsets = [2, 0], sizes = [1, 256], strides = [1, 1]} : vector<10x256xf32> to vector<1x256xf32>
    %22 = vector.broadcast %21 : vector<1x256xf32> to vector<16x256xf32>
    %23 = arith.addf %20, %22 : vector<16x256xf32>
    %24 = vector.extract_strided_slice %15 {offsets = [0, 0], sizes = [16, 128], strides = [1, 1]} : vector<16x256xf32> to vector<16x128xf32>
    %25 = vector.extract_strided_slice %15 {offsets = [0, 128], sizes = [16, 128], strides = [1, 1]} : vector<16x256xf32> to vector<16x128xf32>
    %26 = tpu.concatenate %24, %25 in 0 : vector<16x128xf32>, vector<16x128xf32> -> vector<32x128xf32>
    %27 = vector.shape_cast %26 : vector<32x128xf32> to vector<4x8x128xf32>
    %28 = vector.extract_strided_slice %19 {offsets = [0, 0], sizes = [16, 128], strides = [1, 1]} : vector<16x256xf32> to vector<16x128xf32>
    %29 = vector.extract_strided_slice %19 {offsets = [0, 128], sizes = [16, 128], strides = [1, 1]} : vector<16x256xf32> to vector<16x128xf32>
    %30 = tpu.concatenate %28, %29 in 0 : vector<16x128xf32>, vector<16x128xf32> -> vector<32x128xf32>
    %31 = vector.shape_cast %30 : vector<32x128xf32> to vector<4x8x128xf32>
    %32 = vector.extract_strided_slice %23 {offsets = [0, 0], sizes = [16, 128], strides = [1, 1]} : vector<16x256xf32> to vector<16x128xf32>
    %33 = vector.extract_strided_slice %23 {offsets = [0, 128], sizes = [16, 128], strides = [1, 1]} : vector<16x256xf32> to vector<16x128xf32>
    %34 = tpu.concatenate %32, %33 in 0 : vector<16x128xf32>, vector<16x128xf32> -> vector<32x128xf32>
    %35 = vector.shape_cast %34 : vector<32x128xf32> to vector<4x8x128xf32>
    %36 = arith.truncf %27 : vector<4x8x128xf32> to vector<4x8x128xbf16>
    %37 = arith.truncf %31 : vector<4x8x128xf32> to vector<4x8x128xbf16>
    "tpu.trace_start"() <{level = 10 : i32, message = "nqd,nkd->nqk"}> : () -> ()
    %cst_12 = arith.constant dense<0.000000e+00> : vector<4x8x8xf32>
    %38 = tpu.matmul %36, %37, %cst_12 {dimension_numbers = #tpu.dot_dimension_numbers<[2], [2], [1], [1], [0, 0, 0, 1, 1, 1], [0], [0]>} : vector<4x8x128xbf16>, vector<4x8x128xbf16>, vector<4x8x8xf32> -> vector<4x8x8xf32>
    "tpu.trace_stop"() : () -> ()
    %cst_13 = arith.constant 0.0883883461 : f32
    %39 = vector.broadcast %cst_13 : f32 to vector<4x8x8xf32>
    %40 = arith.mulf %38, %39 : vector<4x8x8xf32>
    %cst_14 = arith.constant dense<0xFF800000> : vector<4x8xf32>
    %41 = vector.multi_reduction <maximumf>, %40, %cst_14 [2] : vector<4x8x8xf32> to vector<4x8xf32>
    %42 = vector.shape_cast %41 : vector<4x8xf32> to vector<4x8x1xf32>
    %43 = vector.broadcast %42 : vector<4x8x1xf32> to vector<4x8x8xf32>
    %44 = arith.subf %40, %43 : vector<4x8x8xf32>
    %45 = math.exp %44 : vector<4x8x8xf32>
    %cst_15 = arith.constant dense<0.000000e+00> : vector<4x8xf32>
    %46 = vector.multi_reduction <add>, %45, %cst_15 [2] : vector<4x8x8xf32> to vector<4x8xf32>
    %47 = vector.shape_cast %46 : vector<4x8xf32> to vector<4x8x1xf32>
    %48 = vector.broadcast %47 : vector<4x8x1xf32> to vector<4x8x8xf32>
    %49 = arith.divf %45, %48 : vector<4x8x8xf32>
    %50 = arith.truncf %49 : vector<4x8x8xf32> to vector<4x8x8xbf16>
    %51 = arith.truncf %35 : vector<4x8x128xf32> to vector<4x8x128xbf16>
    "tpu.trace_start"() <{level = 10 : i32, message = "nqk,nkd->nqd"}> : () -> ()
    %cst_16 = arith.constant dense<0.000000e+00> : vector<4x8x128xf32>
    %52 = tpu.matmul %50, %51, %cst_16 {dimension_numbers = #tpu.dot_dimension_numbers<[2], [1], [1], [2], [0, 0, 0, 1, 1, 2], [0], [0]>} : vector<4x8x8xbf16>, vector<4x8x128xbf16>, vector<4x8x128xf32> -> vector<4x8x128xf32>
    "tpu.trace_stop"() : () -> ()
    %53 = vector.shape_cast %52 : vector<4x8x128xf32> to vector<2x16x128xf32>
    %54 = vector.extract_strided_slice %53 {offsets = [0, 0, 0], sizes = [1, 16, 128], strides = [1, 1, 1]} : vector<2x16x128xf32> to vector<1x16x128xf32>
    %55 = vector.shape_cast %54 : vector<1x16x128xf32> to vector<16x128xf32>
    %56 = vector.extract_strided_slice %53 {offsets = [1, 0, 0], sizes = [1, 16, 128], strides = [1, 1, 1]} : vector<2x16x128xf32> to vector<1x16x128xf32>
    %57 = vector.shape_cast %56 : vector<1x16x128xf32> to vector<16x128xf32>
    %58 = tpu.concatenate %55, %57 in 1 : vector<16x128xf32>, vector<16x128xf32> -> vector<16x256xf32>
    %c0_17 = arith.constant 0 : index
    %c0_18 = arith.constant 0 : index
    %c0_19 = arith.constant 0 : index
    %59 = vector.load %arg4[%c0_17, %c0_18, %c0_19] : memref<2x256x256xbf16, #tpu.memory_space<vmem>>, vector<1x256x256xbf16>
    %60 = vector.shape_cast %59 : vector<1x256x256xbf16> to vector<256x256xbf16>
    %61 = arith.truncf %58 : vector<16x256xf32> to vector<16x256xbf16>
    %cst_20 = arith.constant dense<0.000000e+00> : vector<16x256xf32>
    %62 = tpu.matmul %61, %60, %cst_20 {dimension_numbers = #tpu.dot_dimension_numbers<[1], [0], [0], [1], [0, 0, 1, 1], [], []>} : vector<16x256xbf16>, vector<256x256xbf16>, vector<16x256xf32> -> vector<16x256xf32>
    %63 = vector.extract_strided_slice %7 {offsets = [3, 0], sizes = [1, 256], strides = [1, 1]} : vector<10x256xf32> to vector<1x256xf32>
    %64 = vector.broadcast %63 : vector<1x256xf32> to vector<16x256xf32>
    %65 = arith.addf %62, %64 : vector<16x256xf32>
    %66 = arith.addf %5, %65 : vector<16x256xf32>
    %67 = vector.extract_strided_slice %7 {offsets = [4, 0], sizes = [1, 256], strides = [1, 1]} : vector<10x256xf32> to vector<1x256xf32>
    %68 = vector.extract_strided_slice %7 {offsets = [5, 0], sizes = [1, 256], strides = [1, 1]} : vector<10x256xf32> to vector<1x256xf32>
    %cst_21 = arith.constant dense<0.000000e+00> : vector<16xf32>
    %69 = vector.multi_reduction <add>, %66, %cst_21 [1] : vector<16x256xf32> to vector<16xf32>
    %70 = vector.shape_cast %69 : vector<16xf32> to vector<16x1xf32>
    %cst_22 = arith.constant 2.560000e+02 : f32
    %71 = vector.broadcast %cst_22 : f32 to vector<16x1xf32>
    %72 = arith.divf %70, %71 : vector<16x1xf32>
    %73 = vector.broadcast %72 : vector<16x1xf32> to vector<16x256xf32>
    %74 = arith.subf %66, %73 : vector<16x256xf32>
    %75 = arith.mulf %74, %74 : vector<16x256xf32>
    %cst_23 = arith.constant dense<0.000000e+00> : vector<16xf32>
    %76 = vector.multi_reduction <add>, %75, %cst_23 [1] : vector<16x256xf32> to vector<16xf32>
    %77 = vector.shape_cast %76 : vector<16xf32> to vector<16x1xf32>
    %cst_24 = arith.constant 2.560000e+02 : f32
    %78 = vector.broadcast %cst_24 : f32 to vector<16x1xf32>
    %79 = arith.divf %77, %78 : vector<16x1xf32>
    %80 = vector.broadcast %72 : vector<16x1xf32> to vector<16x256xf32>
    %81 = arith.subf %66, %80 : vector<16x256xf32>
    %cst_25 = arith.constant 9.99999974E-6 : f32
    %82 = vector.broadcast %cst_25 : f32 to vector<16x1xf32>
    %83 = arith.addf %79, %82 : vector<16x1xf32>
    %84 = math.rsqrt %83 : vector<16x1xf32>
    %85 = vector.broadcast %84 : vector<16x1xf32> to vector<16x256xf32>
    %86 = arith.mulf %81, %85 : vector<16x256xf32>
    %87 = vector.broadcast %67 : vector<1x256xf32> to vector<16x256xf32>
    %88 = arith.mulf %86, %87 : vector<16x256xf32>
    %89 = vector.broadcast %68 : vector<1x256xf32> to vector<16x256xf32>
    %90 = arith.addf %88, %89 : vector<16x256xf32>
    %c0_26 = arith.constant 0 : index
    %c0_27 = arith.constant 0 : index
    %c0_28 = arith.constant 0 : index
    %91 = vector.load %arg5[%c0_26, %c0_27, %c0_28] : memref<2x256x256xbf16, #tpu.memory_space<vmem>>, vector<1x256x256xbf16>
    %92 = vector.shape_cast %91 : vector<1x256x256xbf16> to vector<256x256xbf16>
    %93 = arith.truncf %90 : vector<16x256xf32> to vector<16x256xbf16>
    %cst_29 = arith.constant dense<0.000000e+00> : vector<16x256xf32>
    %94 = tpu.matmul %93, %92, %cst_29 {dimension_numbers = #tpu.dot_dimension_numbers<[1], [0], [0], [1], [0, 0, 1, 1], [], []>} : vector<16x256xbf16>, vector<256x256xbf16>, vector<16x256xf32> -> vector<16x256xf32>
    %95 = vector.extract_strided_slice %7 {offsets = [6, 0], sizes = [1, 256], strides = [1, 1]} : vector<10x256xf32> to vector<1x256xf32>
    %96 = vector.broadcast %95 : vector<1x256xf32> to vector<16x256xf32>
    %97 = arith.addf %94, %96 : vector<16x256xf32>
    %cst_30 = arith.constant 0.000000e+00 : f32
    %98 = vector.broadcast %cst_30 : f32 to vector<16x256xf32>
    %99 = arith.maximumf %97, %98 : vector<16x256xf32>
    %c0_31 = arith.constant 0 : index
    %c0_32 = arith.constant 0 : index
    %c0_33 = arith.constant 0 : index
    %100 = vector.load %arg6[%c0_31, %c0_32, %c0_33] : memref<2x256x256xbf16, #tpu.memory_space<vmem>>, vector<1x256x256xbf16>
    %101 = vector.shape_cast %100 : vector<1x256x256xbf16> to vector<256x256xbf16>
    %102 = arith.truncf %99 : vector<16x256xf32> to vector<16x256xbf16>
    %cst_34 = arith.constant dense<0.000000e+00> : vector<16x256xf32>
    %103 = tpu.matmul %102, %101, %cst_34 {dimension_numbers = #tpu.dot_dimension_numbers<[1], [0], [0], [1], [0, 0, 1, 1], [], []>} : vector<16x256xbf16>, vector<256x256xbf16>, vector<16x256xf32> -> vector<16x256xf32>
    %104 = vector.extract_strided_slice %7 {offsets = [7, 0], sizes = [1, 256], strides = [1, 1]} : vector<10x256xf32> to vector<1x256xf32>
    %105 = vector.broadcast %104 : vector<1x256xf32> to vector<16x256xf32>
    %106 = arith.addf %103, %105 : vector<16x256xf32>
    %107 = arith.addf %90, %106 : vector<16x256xf32>
    %108 = vector.extract_strided_slice %7 {offsets = [8, 0], sizes = [1, 256], strides = [1, 1]} : vector<10x256xf32> to vector<1x256xf32>
    %109 = vector.extract_strided_slice %7 {offsets = [9, 0], sizes = [1, 256], strides = [1, 1]} : vector<10x256xf32> to vector<1x256xf32>
    %cst_35 = arith.constant dense<0.000000e+00> : vector<16xf32>
    %110 = vector.multi_reduction <add>, %107, %cst_35 [1] : vector<16x256xf32> to vector<16xf32>
    %111 = vector.shape_cast %110 : vector<16xf32> to vector<16x1xf32>
    %cst_36 = arith.constant 2.560000e+02 : f32
    %112 = vector.broadcast %cst_36 : f32 to vector<16x1xf32>
    %113 = arith.divf %111, %112 : vector<16x1xf32>
    %114 = vector.broadcast %113 : vector<16x1xf32> to vector<16x256xf32>
    %115 = arith.subf %107, %114 : vector<16x256xf32>
    %116 = arith.mulf %115, %115 : vector<16x256xf32>
    %cst_37 = arith.constant dense<0.000000e+00> : vector<16xf32>
    %117 = vector.multi_reduction <add>, %116, %cst_37 [1] : vector<16x256xf32> to vector<16xf32>
    %118 = vector.shape_cast %117 : vector<16xf32> to vector<16x1xf32>
    %cst_38 = arith.constant 2.560000e+02 : f32
    %119 = vector.broadcast %cst_38 : f32 to vector<16x1xf32>
    %120 = arith.divf %118, %119 : vector<16x1xf32>
    %121 = vector.broadcast %113 : vector<16x1xf32> to vector<16x256xf32>
    %122 = arith.subf %107, %121 : vector<16x256xf32>
    %cst_39 = arith.constant 9.99999974E-6 : f32
    %123 = vector.broadcast %cst_39 : f32 to vector<16x1xf32>
    %124 = arith.addf %120, %123 : vector<16x1xf32>
    %125 = math.rsqrt %124 : vector<16x1xf32>
    %126 = vector.broadcast %125 : vector<16x1xf32> to vector<16x256xf32>
    %127 = arith.mulf %122, %126 : vector<16x256xf32>
    %128 = vector.broadcast %108 : vector<1x256xf32> to vector<16x256xf32>
    %129 = arith.mulf %127, %128 : vector<16x256xf32>
    %130 = vector.broadcast %109 : vector<1x256xf32> to vector<16x256xf32>
    %131 = arith.addf %129, %130 : vector<16x256xf32>
    %c1 = arith.constant 1 : index
    %c0_40 = arith.constant 0 : index
    %c0_41 = arith.constant 0 : index
    %132 = vector.load %arg7[%c1, %c0_40, %c0_41] : memref<2x10x256xf32, #tpu.memory_space<vmem>>, vector<1x10x256xf32>
    %133 = vector.shape_cast %132 : vector<1x10x256xf32> to vector<10x256xf32>
    %c1_42 = arith.constant 1 : index
    %c0_43 = arith.constant 0 : index
    %c0_44 = arith.constant 0 : index
    %134 = vector.load %arg3[%c1_42, %c0_43, %c0_44] : memref<2x256x768xbf16, #tpu.memory_space<vmem>>, vector<1x256x768xbf16>
    %135 = vector.shape_cast %134 : vector<1x256x768xbf16> to vector<256x768xbf16>
    %136 = arith.truncf %131 : vector<16x256xf32> to vector<16x256xbf16>
    %cst_45 = arith.constant dense<0.000000e+00> : vector<16x768xf32>
    %137 = tpu.matmul %136, %135, %cst_45 {dimension_numbers = #tpu.dot_dimension_numbers<[1], [0], [0], [1], [0, 0, 1, 1], [], []>} : vector<16x256xbf16>, vector<256x768xbf16>, vector<16x768xf32> -> vector<16x768xf32>
    %138 = vector.extract_strided_slice %137 {offsets = [0, 0], sizes = [16, 256], strides = [1, 1]} : vector<16x768xf32> to vector<16x256xf32>
    %139 = vector.extract_strided_slice %133 {offsets = [0, 0], sizes = [1, 256], strides = [1, 1]} : vector<10x256xf32> to vector<1x256xf32>
    %140 = vector.broadcast %139 : vector<1x256xf32> to vector<16x256xf32>
    %141 = arith.addf %138, %140 : vector<16x256xf32>
    %142 = vector.extract_strided_slice %137 {offsets = [0, 256], sizes = [16, 256], strides = [1, 1]} : vector<16x768xf32> to vector<16x256xf32>
    %143 = vector.extract_strided_slice %133 {offsets = [1, 0], sizes = [1, 256], strides = [1, 1]} : vector<10x256xf32> to vector<1x256xf32>
    %144 = vector.broadcast %143 : vector<1x256xf32> to vector<16x256xf32>
    %145 = arith.addf %142, %144 : vector<16x256xf32>
    %146 = vector.extract_strided_slice %137 {offsets = [0, 512], sizes = [16, 256], strides = [1, 1]} : vector<16x768xf32> to vector<16x256xf32>
    %147 = vector.extract_strided_slice %133 {offsets = [2, 0], sizes = [1, 256], strides = [1, 1]} : vector<10x256xf32> to vector<1x256xf32>
    %148 = vector.broadcast %147 : vector<1x256xf32> to vector<16x256xf32>
    %149 = arith.addf %146, %148 : vector<16x256xf32>
    %150 = vector.extract_strided_slice %141 {offsets = [0, 0], sizes = [16, 128], strides = [1, 1]} : vector<16x256xf32> to vector<16x128xf32>
    %151 = vector.extract_strided_slice %141 {offsets = [0, 128], sizes = [16, 128], strides = [1, 1]} : vector<16x256xf32> to vector<16x128xf32>
    %152 = tpu.concatenate %150, %151 in 0 : vector<16x128xf32>, vector<16x128xf32> -> vector<32x128xf32>
    %153 = vector.shape_cast %152 : vector<32x128xf32> to vector<4x8x128xf32>
    %154 = vector.extract_strided_slice %145 {offsets = [0, 0], sizes = [16, 128], strides = [1, 1]} : vector<16x256xf32> to vector<16x128xf32>
    %155 = vector.extract_strided_slice %145 {offsets = [0, 128], sizes = [16, 128], strides = [1, 1]} : vector<16x256xf32> to vector<16x128xf32>
    %156 = tpu.concatenate %154, %155 in 0 : vector<16x128xf32>, vector<16x128xf32> -> vector<32x128xf32>
    %157 = vector.shape_cast %156 : vector<32x128xf32> to vector<4x8x128xf32>
    %158 = vector.extract_strided_slice %149 {offsets = [0, 0], sizes = [16, 128], strides = [1, 1]} : vector<16x256xf32> to vector<16x128xf32>
    %159 = vector.extract_strided_slice %149 {offsets = [0, 128], sizes = [16, 128], strides = [1, 1]} : vector<16x256xf32> to vector<16x128xf32>
    %160 = tpu.concatenate %158, %159 in 0 : vector<16x128xf32>, vector<16x128xf32> -> vector<32x128xf32>
    %161 = vector.shape_cast %160 : vector<32x128xf32> to vector<4x8x128xf32>
    %162 = arith.truncf %153 : vector<4x8x128xf32> to vector<4x8x128xbf16>
    %163 = arith.truncf %157 : vector<4x8x128xf32> to vector<4x8x128xbf16>
    "tpu.trace_start"() <{level = 10 : i32, message = "nqd,nkd->nqk"}> : () -> ()
    %cst_46 = arith.constant dense<0.000000e+00> : vector<4x8x8xf32>
    %164 = tpu.matmul %162, %163, %cst_46 {dimension_numbers = #tpu.dot_dimension_numbers<[2], [2], [1], [1], [0, 0, 0, 1, 1, 1], [0], [0]>} : vector<4x8x128xbf16>, vector<4x8x128xbf16>, vector<4x8x8xf32> -> vector<4x8x8xf32>
    "tpu.trace_stop"() : () -> ()
    %cst_47 = arith.constant 0.0883883461 : f32
    %165 = vector.broadcast %cst_47 : f32 to vector<4x8x8xf32>
    %166 = arith.mulf %164, %165 : vector<4x8x8xf32>
    %cst_48 = arith.constant dense<0xFF800000> : vector<4x8xf32>
    %167 = vector.multi_reduction <maximumf>, %166, %cst_48 [2] : vector<4x8x8xf32> to vector<4x8xf32>
    %168 = vector.shape_cast %167 : vector<4x8xf32> to vector<4x8x1xf32>
    %169 = vector.broadcast %168 : vector<4x8x1xf32> to vector<4x8x8xf32>
    %170 = arith.subf %166, %169 : vector<4x8x8xf32>
    %171 = math.exp %170 : vector<4x8x8xf32>
    %cst_49 = arith.constant dense<0.000000e+00> : vector<4x8xf32>
    %172 = vector.multi_reduction <add>, %171, %cst_49 [2] : vector<4x8x8xf32> to vector<4x8xf32>
    %173 = vector.shape_cast %172 : vector<4x8xf32> to vector<4x8x1xf32>
    %174 = vector.broadcast %173 : vector<4x8x1xf32> to vector<4x8x8xf32>
    %175 = arith.divf %171, %174 : vector<4x8x8xf32>
    %176 = arith.truncf %175 : vector<4x8x8xf32> to vector<4x8x8xbf16>
    %177 = arith.truncf %161 : vector<4x8x128xf32> to vector<4x8x128xbf16>
    "tpu.trace_start"() <{level = 10 : i32, message = "nqk,nkd->nqd"}> : () -> ()
    %cst_50 = arith.constant dense<0.000000e+00> : vector<4x8x128xf32>
    %178 = tpu.matmul %176, %177, %cst_50 {dimension_numbers = #tpu.dot_dimension_numbers<[2], [1], [1], [2], [0, 0, 0, 1, 1, 2], [0], [0]>} : vector<4x8x8xbf16>, vector<4x8x128xbf16>, vector<4x8x128xf32> -> vector<4x8x128xf32>
    "tpu.trace_stop"() : () -> ()
    %179 = vector.shape_cast %178 : vector<4x8x128xf32> to vector<2x16x128xf32>
    %180 = vector.extract_strided_slice %179 {offsets = [0, 0, 0], sizes = [1, 16, 128], strides = [1, 1, 1]} : vector<2x16x128xf32> to vector<1x16x128xf32>
    %181 = vector.shape_cast %180 : vector<1x16x128xf32> to vector<16x128xf32>
    %182 = vector.extract_strided_slice %179 {offsets = [1, 0, 0], sizes = [1, 16, 128], strides = [1, 1, 1]} : vector<2x16x128xf32> to vector<1x16x128xf32>
    %183 = vector.shape_cast %182 : vector<1x16x128xf32> to vector<16x128xf32>
    %184 = tpu.concatenate %181, %183 in 1 : vector<16x128xf32>, vector<16x128xf32> -> vector<16x256xf32>
    %c1_51 = arith.constant 1 : index
    %c0_52 = arith.constant 0 : index
    %c0_53 = arith.constant 0 : index
    %185 = vector.load %arg4[%c1_51, %c0_52, %c0_53] : memref<2x256x256xbf16, #tpu.memory_space<vmem>>, vector<1x256x256xbf16>
    %186 = vector.shape_cast %185 : vector<1x256x256xbf16> to vector<256x256xbf16>
    %187 = arith.truncf %184 : vector<16x256xf32> to vector<16x256xbf16>
    %cst_54 = arith.constant dense<0.000000e+00> : vector<16x256xf32>
    %188 = tpu.matmul %187, %186, %cst_54 {dimension_numbers = #tpu.dot_dimension_numbers<[1], [0], [0], [1], [0, 0, 1, 1], [], []>} : vector<16x256xbf16>, vector<256x256xbf16>, vector<16x256xf32> -> vector<16x256xf32>
    %189 = vector.extract_strided_slice %133 {offsets = [3, 0], sizes = [1, 256], strides = [1, 1]} : vector<10x256xf32> to vector<1x256xf32>
    %190 = vector.broadcast %189 : vector<1x256xf32> to vector<16x256xf32>
    %191 = arith.addf %188, %190 : vector<16x256xf32>
    %192 = arith.addf %131, %191 : vector<16x256xf32>
    %193 = vector.extract_strided_slice %133 {offsets = [4, 0], sizes = [1, 256], strides = [1, 1]} : vector<10x256xf32> to vector<1x256xf32>
    %194 = vector.extract_strided_slice %133 {offsets = [5, 0], sizes = [1, 256], strides = [1, 1]} : vector<10x256xf32> to vector<1x256xf32>
    %cst_55 = arith.constant dense<0.000000e+00> : vector<16xf32>
    %195 = vector.multi_reduction <add>, %192, %cst_55 [1] : vector<16x256xf32> to vector<16xf32>
    %196 = vector.shape_cast %195 : vector<16xf32> to vector<16x1xf32>
    %cst_56 = arith.constant 2.560000e+02 : f32
    %197 = vector.broadcast %cst_56 : f32 to vector<16x1xf32>
    %198 = arith.divf %196, %197 : vector<16x1xf32>
    %199 = vector.broadcast %198 : vector<16x1xf32> to vector<16x256xf32>
    %200 = arith.subf %192, %199 : vector<16x256xf32>
    %201 = arith.mulf %200, %200 : vector<16x256xf32>
    %cst_57 = arith.constant dense<0.000000e+00> : vector<16xf32>
    %202 = vector.multi_reduction <add>, %201, %cst_57 [1] : vector<16x256xf32> to vector<16xf32>
    %203 = vector.shape_cast %202 : vector<16xf32> to vector<16x1xf32>
    %cst_58 = arith.constant 2.560000e+02 : f32
    %204 = vector.broadcast %cst_58 : f32 to vector<16x1xf32>
    %205 = arith.divf %203, %204 : vector<16x1xf32>
    %206 = vector.broadcast %198 : vector<16x1xf32> to vector<16x256xf32>
    %207 = arith.subf %192, %206 : vector<16x256xf32>
    %cst_59 = arith.constant 9.99999974E-6 : f32
    %208 = vector.broadcast %cst_59 : f32 to vector<16x1xf32>
    %209 = arith.addf %205, %208 : vector<16x1xf32>
    %210 = math.rsqrt %209 : vector<16x1xf32>
    %211 = vector.broadcast %210 : vector<16x1xf32> to vector<16x256xf32>
    %212 = arith.mulf %207, %211 : vector<16x256xf32>
    %213 = vector.broadcast %193 : vector<1x256xf32> to vector<16x256xf32>
    %214 = arith.mulf %212, %213 : vector<16x256xf32>
    %215 = vector.broadcast %194 : vector<1x256xf32> to vector<16x256xf32>
    %216 = arith.addf %214, %215 : vector<16x256xf32>
    %c1_60 = arith.constant 1 : index
    %c0_61 = arith.constant 0 : index
    %c0_62 = arith.constant 0 : index
    %217 = vector.load %arg5[%c1_60, %c0_61, %c0_62] : memref<2x256x256xbf16, #tpu.memory_space<vmem>>, vector<1x256x256xbf16>
    %218 = vector.shape_cast %217 : vector<1x256x256xbf16> to vector<256x256xbf16>
    %219 = arith.truncf %216 : vector<16x256xf32> to vector<16x256xbf16>
    %cst_63 = arith.constant dense<0.000000e+00> : vector<16x256xf32>
    %220 = tpu.matmul %219, %218, %cst_63 {dimension_numbers = #tpu.dot_dimension_numbers<[1], [0], [0], [1], [0, 0, 1, 1], [], []>} : vector<16x256xbf16>, vector<256x256xbf16>, vector<16x256xf32> -> vector<16x256xf32>
    %221 = vector.extract_strided_slice %133 {offsets = [6, 0], sizes = [1, 256], strides = [1, 1]} : vector<10x256xf32> to vector<1x256xf32>
    %222 = vector.broadcast %221 : vector<1x256xf32> to vector<16x256xf32>
    %223 = arith.addf %220, %222 : vector<16x256xf32>
    %cst_64 = arith.constant 0.000000e+00 : f32
    %224 = vector.broadcast %cst_64 : f32 to vector<16x256xf32>
    %225 = arith.maximumf %223, %224 : vector<16x256xf32>
    %c1_65 = arith.constant 1 : index
    %c0_66 = arith.constant 0 : index
    %c0_67 = arith.constant 0 : index
    %226 = vector.load %arg6[%c1_65, %c0_66, %c0_67] : memref<2x256x256xbf16, #tpu.memory_space<vmem>>, vector<1x256x256xbf16>
    %227 = vector.shape_cast %226 : vector<1x256x256xbf16> to vector<256x256xbf16>
    %228 = arith.truncf %225 : vector<16x256xf32> to vector<16x256xbf16>
    %cst_68 = arith.constant dense<0.000000e+00> : vector<16x256xf32>
    %229 = tpu.matmul %228, %227, %cst_68 {dimension_numbers = #tpu.dot_dimension_numbers<[1], [0], [0], [1], [0, 0, 1, 1], [], []>} : vector<16x256xbf16>, vector<256x256xbf16>, vector<16x256xf32> -> vector<16x256xf32>
    %230 = vector.extract_strided_slice %133 {offsets = [7, 0], sizes = [1, 256], strides = [1, 1]} : vector<10x256xf32> to vector<1x256xf32>
    %231 = vector.broadcast %230 : vector<1x256xf32> to vector<16x256xf32>
    %232 = arith.addf %229, %231 : vector<16x256xf32>
    %233 = arith.addf %216, %232 : vector<16x256xf32>
    %234 = vector.extract_strided_slice %133 {offsets = [8, 0], sizes = [1, 256], strides = [1, 1]} : vector<10x256xf32> to vector<1x256xf32>
    %235 = vector.extract_strided_slice %133 {offsets = [9, 0], sizes = [1, 256], strides = [1, 1]} : vector<10x256xf32> to vector<1x256xf32>
    %cst_69 = arith.constant dense<0.000000e+00> : vector<16xf32>
    %236 = vector.multi_reduction <add>, %233, %cst_69 [1] : vector<16x256xf32> to vector<16xf32>
    %237 = vector.shape_cast %236 : vector<16xf32> to vector<16x1xf32>
    %cst_70 = arith.constant 2.560000e+02 : f32
    %238 = vector.broadcast %cst_70 : f32 to vector<16x1xf32>
    %239 = arith.divf %237, %238 : vector<16x1xf32>
    %240 = vector.broadcast %239 : vector<16x1xf32> to vector<16x256xf32>
    %241 = arith.subf %233, %240 : vector<16x256xf32>
    %242 = arith.mulf %241, %241 : vector<16x256xf32>
    %cst_71 = arith.constant dense<0.000000e+00> : vector<16xf32>
    %243 = vector.multi_reduction <add>, %242, %cst_71 [1] : vector<16x256xf32> to vector<16xf32>
    %244 = vector.shape_cast %243 : vector<16xf32> to vector<16x1xf32>
    %cst_72 = arith.constant 2.560000e+02 : f32
    %245 = vector.broadcast %cst_72 : f32 to vector<16x1xf32>
    %246 = arith.divf %244, %245 : vector<16x1xf32>
    %247 = vector.broadcast %239 : vector<16x1xf32> to vector<16x256xf32>
    %248 = arith.subf %233, %247 : vector<16x256xf32>
    %cst_73 = arith.constant 9.99999974E-6 : f32
    %249 = vector.broadcast %cst_73 : f32 to vector<16x1xf32>
    %250 = arith.addf %246, %249 : vector<16x1xf32>
    %251 = math.rsqrt %250 : vector<16x1xf32>
    %252 = vector.broadcast %251 : vector<16x1xf32> to vector<16x256xf32>
    %253 = arith.mulf %248, %252 : vector<16x256xf32>
    %254 = vector.broadcast %234 : vector<1x256xf32> to vector<16x256xf32>
    %255 = arith.mulf %253, %254 : vector<16x256xf32>
    %256 = vector.broadcast %235 : vector<1x256xf32> to vector<16x256xf32>
    %257 = arith.addf %255, %256 : vector<16x256xf32>
    %258 = vector.shape_cast %257 : vector<16x256xf32> to vector<2x8x256xf32>
    %cst_74 = arith.constant dense<0.000000e+00> : vector<2x256xf32>
    %259 = vector.multi_reduction <add>, %258, %cst_74 [1] : vector<2x8x256xf32> to vector<2x256xf32>
    %cst_75 = arith.constant 8.000000e+00 : f32
    %260 = vector.broadcast %cst_75 : f32 to vector<2x256xf32>
    %261 = arith.divf %259, %260 : vector<2x256xf32>
    %c0_76 = arith.constant 0 : index
    %c0_77 = arith.constant 0 : index
    %262 = vector.load %arg9[%c0_76, %c0_77] : memref<3x256xf32, #tpu.memory_space<vmem>>, vector<3x256xf32>
    %c0_78 = arith.constant 0 : index
    %c0_79 = arith.constant 0 : index
    %263 = vector.load %arg8[%c0_78, %c0_79] : memref<256x256xbf16, #tpu.memory_space<vmem>>, vector<256x256xbf16>
    %264 = arith.truncf %261 : vector<2x256xf32> to vector<2x256xbf16>
    %cst_80 = arith.constant dense<0.000000e+00> : vector<2x256xf32>
    %265 = tpu.matmul %264, %263, %cst_80 {dimension_numbers = #tpu.dot_dimension_numbers<[1], [0], [0], [1], [0, 0, 1, 1], [], []>} : vector<2x256xbf16>, vector<256x256xbf16>, vector<2x256xf32> -> vector<2x256xf32>
    %266 = vector.extract_strided_slice %262 {offsets = [0, 0], sizes = [1, 256], strides = [1, 1]} : vector<3x256xf32> to vector<1x256xf32>
    %267 = vector.broadcast %266 : vector<1x256xf32> to vector<2x256xf32>
    %268 = arith.addf %265, %267 : vector<2x256xf32>
    %cst_81 = arith.constant 0.000000e+00 : f32
    %269 = vector.broadcast %cst_81 : f32 to vector<2x256xf32>
    %270 = arith.cmpf ogt, %268, %269 : vector<2x256xf32>
    %cst_82 = arith.constant 0.00999999977 : f32
    %271 = vector.broadcast %cst_82 : f32 to vector<2x256xf32>
    %272 = arith.mulf %271, %268 : vector<2x256xf32>
    %273 = arith.select %270, %268, %272 : vector<2x256xi1>, vector<2x256xf32>
    %274 = vector.extract_strided_slice %262 {offsets = [1, 0], sizes = [1, 256], strides = [1, 1]} : vector<3x256xf32> to vector<1x256xf32>
    %275 = vector.broadcast %274 : vector<1x256xf32> to vector<2x256xf32>
    %276 = arith.mulf %273, %275 : vector<2x256xf32>
    %cst_83 = arith.constant dense<0.000000e+00> : vector<2xf32>
    %277 = vector.multi_reduction <add>, %276, %cst_83 [1] : vector<2x256xf32> to vector<2xf32>
    %278 = vector.shape_cast %277 : vector<2xf32> to vector<2x1xf32>
    %279 = vector.extract_strided_slice %262 {offsets = [2, 0], sizes = [1, 1], strides = [1, 1]} : vector<3x256xf32> to vector<1x1xf32>
    %280 = vector.broadcast %279 : vector<1x1xf32> to vector<2x1xf32>
    %281 = arith.addf %278, %280 : vector<2x1xf32>
    %c0_84 = arith.constant 0 : index
    %c0_85 = arith.constant 0 : index
    %282 = vector.load %arg10[%c0_84, %c0_85] : memref<2x1xf32, #tpu.memory_space<vmem>>, vector<2x1xf32>
    tpu.vector_store %arg10[%c0_84, %c0_85], %281 {strides = array<i32>} : memref<2x1xf32, #tpu.memory_space<vmem>>, vector<2x1xf32>,
    return
  }
}

</mosaic_0001>

<llo_original>
// kernel: transformer_forward.1
$region0: #{transformer_forward.1}
  #allocation0 [shape = 'u32[]', space=smem, size = 0x4, offset = 0x4, fixed_abs, tag = 'smem constant byte address 0x4 - core index']
  #allocation1 [shape = 'u32[72,128]{1,0:T(1,128)}', space=vmem, size = 0x9000, scoped, tag = 'internal scratch']
  %s0 = inlined_call_operand.vmem [shape: f32[16,16], index: 0, kind: input, shape index: {}]
  %s1 = inlined_call_operand.vmem [shape: bf16[16,256], index: 1, kind: input, shape index: {}]
  %s2 = inlined_call_operand.vmem [shape: f32[16,256], index: 2, kind: input, shape index: {}]
  %s3 = inlined_call_operand.hbm [shape: bf16[2,256,768], index: 3, kind: input, shape index: {}]
  %s4 = inlined_call_operand.hbm [shape: bf16[2,256,256], index: 4, kind: input, shape index: {}]
  %s5 = inlined_call_operand.hbm [shape: bf16[2,256,256], index: 5, kind: input, shape index: {}]
  %s6 = inlined_call_operand.hbm [shape: bf16[2,256,256], index: 6, kind: input, shape index: {}]
  %s7 = inlined_call_operand.vmem [shape: f32[2,10,256], index: 7, kind: input, shape index: {}]
  %s8 = inlined_call_operand.hbm [shape: bf16[256,256], index: 8, kind: input, shape index: {}]
  %s9 = inlined_call_operand.vmem [shape: f32[3,256], index: 9, kind: input, shape index: {}]
  %s10 = inlined_call_operand.vmem [shape: f32[2,1], index: 10, kind: output, shape index: {}]
  %s11 = sld [smem:[#allocation0]]
  $region70: #{transformer_forward.1} parent=0
    _
  %s13 = ssub.s32 1, %s11
  %s14 = scalar_select 0, %s13, %s11
  $region1: #{transformer_forward.1} parent=0
    #allocation2 [shape = 'u8[786432]{0}', space=vmem, size = 0xc0000, scoped, tag = 'input window, operand 3, single buffered']
    #allocation3 [shape = 's32[1]{0}', space=sflag, size = 0x4, scoped, tag = 'scoped memory for transformer_forward.1']
    #allocation4 [shape = 'u8[262144]{0}', space=vmem, size = 0x40000, scoped, tag = 'input window, operand 4, single buffered']
    #allocation5 [shape = 's32[1]{0}', space=sflag, size = 0x4, scoped, tag = 'scoped memory for transformer_forward.1']
    #allocation6 [shape = 'u8[262144]{0}', space=vmem, size = 0x40000, scoped, tag = 'input window, operand 5, single buffered']
    #allocation7 [shape = 'u8[262144]{0}', space=vmem, size = 0x40000, scoped, tag = 'input window, operand 6, single buffered']
    #allocation8 [shape = 's32[1]{0}', space=sflag, size = 0x4, scoped, tag = 'scoped memory for transformer_forward.1']
    #allocation9 [shape = 'u8[131072]{0}', space=vmem, size = 0x20000, scoped, tag = 'input window, operand 8, single buffered']
    %15 = vsyncpa [#allocation3], 0
    %16 = vsyncpa [#allocation5], 0
    %17 = vsyncpa [#allocation8], 0
    // Predicated region
    $region2: #{transformer_forward.1} parent=1 // pred_check
      _
    $region3: #{transformer_forward.1} parent=1 // pred_check_branch
      %19 = sbr.rel (0) target = $region5
    $region4: #{transformer_forward.1} parent=1 // pred_region
      _
    $region5: #{transformer_forward.1} parent=1 // pred_fallthru
      _
    // Predicated region
    $region6: #{transformer_forward.1} parent=1 // pred_check
      _
    $region7: #{transformer_forward.1} parent=1 // pred_check_branch
      %21 = sbr.rel (0) target = $region9
    $region8: #{transformer_forward.1} parent=1 // pred_region
      _
    $region9: #{transformer_forward.1} parent=1 // pred_fallthru
      _
    // Predicated region
    $region10: #{transformer_forward.1} parent=1 // pred_check
      _
    $region11: #{transformer_forward.1} parent=1 // pred_check_branch
      %23 = sbr.rel (0) target = $region13
    $region12: #{transformer_forward.1} parent=1 // pred_region
      _
    $region13: #{transformer_forward.1} parent=1 // pred_fallthru
      _
    // Predicated region
    $region14: #{transformer_forward.1} parent=1 // pred_check
      _
    $region15: #{transformer_forward.1} parent=1 // pred_check_branch
      %25 = sbr.rel (0) target = $region17
    $region16: #{transformer_forward.1} parent=1 // pred_region
      %27 = vsyncadd [#allocation3], 0
      %s28 = sshll.u32 %s3, 4
      %s29 = int_to_ptr.hbm [resolvable:$true] %s28
      %s30 = sshll.u32 [#allocation2], 4
      %s31 = int_to_ptr.vmem [resolvable:$true] %s30
      %36 = dma.hbm_to_vmem [thread:$0]  %s29, 24576, %s31, [#allocation3], 384, 384, 24
    $region17: #{transformer_forward.1} parent=1 // pred_fallthru
      _
    // Predicated region
    $region18: #{transformer_forward.1} parent=1 // pred_check
      _
    $region19: #{transformer_forward.1} parent=1 // pred_check_branch
      %38 = sbr.rel (0) target = $region21
    $region20: #{transformer_forward.1} parent=1 // pred_region
      %40 = vsyncadd [#allocation5], 0
      %s41 = sshll.u32 %s4, 4
      %s42 = int_to_ptr.hbm [resolvable:$true] %s41
      %s43 = sshll.u32 [#allocation4], 4
      %s44 = int_to_ptr.vmem [resolvable:$true] %s43
      %49 = dma.hbm_to_vmem [thread:$0]  %s42, 8192, %s44, [#allocation5], 128, 128, 8
    $region21: #{transformer_forward.1} parent=1 // pred_fallthru
      _
    // Predicated region
    $region22: #{transformer_forward.1} parent=1 // pred_check
      _
    $region23: #{transformer_forward.1} parent=1 // pred_check_branch
      %51 = sbr.rel (0) target = $region25
    $region24: #{transformer_forward.1} parent=1 // pred_region
      %53 = vsyncadd [#allocation5], 0
      %s54 = sshll.u32 %s5, 4
      %s55 = int_to_ptr.hbm [resolvable:$true] %s54
      %s56 = sshll.u32 [#allocation6], 4
      %s57 = int_to_ptr.vmem [resolvable:$true] %s56
      %62 = dma.hbm_to_vmem [thread:$0]  %s55, 8192, %s57, [#allocation5], 128, 128, 8
    $region25: #{transformer_forward.1} parent=1 // pred_fallthru
      _
    // Predicated region
    $region26: #{transformer_forward.1} parent=1 // pred_check
      _
    $region27: #{transformer_forward.1} parent=1 // pred_check_branch
      %64 = sbr.rel (0) target = $region29
    $region28: #{transformer_forward.1} parent=1 // pred_region
      %66 = vsyncadd [#allocation8], 0
      %s67 = sshll.u32 %s6, 4
      %s68 = int_to_ptr.hbm [resolvable:$true] %s67
      %s69 = sshll.u32 [#allocation7], 4
      %s70 = int_to_ptr.vmem [resolvable:$true] %s69
      %75 = dma.hbm_to_vmem [thread:$0]  %s68, 8192, %s70, [#allocation8], 128, 128, 8
    $region29: #{transformer_forward.1} parent=1 // pred_fallthru
      _
    // Predicated region
    $region30: #{transformer_forward.1} parent=1 // pred_check
      _
    $region31: #{transformer_forward.1} parent=1 // pred_check_branch
      %77 = sbr.rel (0) target = $region33
    $region32: #{transformer_forward.1} parent=1 // pred_region
      _
    $region33: #{transformer_forward.1} parent=1 // pred_fallthru
      _
    // Predicated region
    $region34: #{transformer_forward.1} parent=1 // pred_check
      _
    $region35: #{transformer_forward.1} parent=1 // pred_check_branch
      %79 = sbr.rel (0) target = $region37
    $region36: #{transformer_forward.1} parent=1 // pred_region
      %81 = vsyncadd [#allocation8], 0
      %s82 = sshll.u32 %s8, 4
      %s83 = int_to_ptr.hbm [resolvable:$true] %s82
      %s84 = sshll.u32 [#allocation9], 4
      %s85 = int_to_ptr.vmem [resolvable:$true] %s84
      %90 = dma.hbm_to_vmem [thread:$0]  %s83, 4096, %s85, [#allocation8], 128, 128, 8
    $region37: #{transformer_forward.1} parent=1 // pred_fallthru
      _
    // Predicated region
    $region38: #{transformer_forward.1} parent=1 // pred_check
      _
    $region39: #{transformer_forward.1} parent=1 // pred_check_branch
      %92 = sbr.rel (0) target = $region41
    $region40: #{transformer_forward.1} parent=1 // pred_region
      _
    $region41: #{transformer_forward.1} parent=1 // pred_fallthru
      _
    // Predicated region
    $region42: #{transformer_forward.1} parent=1 // pred_check
      _
    $region43: #{transformer_forward.1} parent=1 // pred_check_branch
      %94 = sbr.rel (0) target = $region45
    $region44: #{transformer_forward.1} parent=1 // pred_region
      %96 = dma.done [#allocation3], 24576
    $region45: #{transformer_forward.1} parent=1 // pred_fallthru
      _
    // Predicated region
    $region46: #{transformer_forward.1} parent=1 // pred_check
      _
    $region47: #{transformer_forward.1} parent=1 // pred_check_branch
      %98 = sbr.rel (0) target = $region49
    $region48: #{transformer_forward.1} parent=1 // pred_region
      %100 = dma.done [#allocation5], 8192
    $region49: #{transformer_forward.1} parent=1 // pred_fallthru
      _
    // Predicated region
    $region50: #{transformer_forward.1} parent=1 // pred_check
      _
    $region51: #{transformer_forward.1} parent=1 // pred_check_branch
      %102 = sbr.rel (0) target = $region53
    $region52: #{transformer_forward.1} parent=1 // pred_region
      %104 = dma.done [#allocation5], 8192
    $region53: #{transformer_forward.1} parent=1 // pred_fallthru
      _
    // Predicated region
    $region54: #{transformer_forward.1} parent=1 // pred_check
      _
    $region55: #{transformer_forward.1} parent=1 // pred_check_branch
      %106 = sbr.rel (0) target = $region57
    $region56: #{transformer_forward.1} parent=1 // pred_region
      %108 = dma.done [#allocation8], 8192
    $region57: #{transformer_forward.1} parent=1 // pred_fallthru
      _
    // Predicated region
    $region58: #{transformer_forward.1} parent=1 // pred_check
      _
    $region59: #{transformer_forward.1} parent=1 // pred_check_branch
      %110 = sbr.rel (0) target = $region61
    $region60: #{transformer_forward.1} parent=1 // pred_region
      %112 = dma.done [#allocation8], 4096
    $region61: #{transformer_forward.1} parent=1 // pred_fallthru
      _
    %v114 = vld [vmem:[%s0] sm:$0xff]
    %v115 = vld [vmem:[%s0 + $0x8] sm:$0xff]
    %v116 = vld [vmem:[%s1] sm:$0xff]
    %v117 = vld [vmem:[%s1 + $0x8] sm:$0xff]
    %v118 = vpack.c.bf16 %v115, %v114
    %v119 = vld [vmem:[%s2] sm:$0xff]
    %v120 = vld [vmem:[%s2 + $0x8] sm:$0xff]
    %v121 = vld [vmem:[%s2 + $0x10] sm:$0xff]
    %v122 = vld [vmem:[%s2 + $0x18] sm:$0xff]
    %v125 = vunpack.c.l.b16 %v116
    %v126 = vunpack.c.h.b16 %v116
    %v127 = vunpack.c.l.b16 %v117
    %v128 = vunpack.c.h.b16 %v117
    %v129 = vpack.c.b16 %v127, %v125
    %v130 = vpack.c.b16 %v128, %v126
    %vm133 = vcmask 130048
    %v135 = vsel %vm133, %v118, 0
    %137 = vmatpush.bf16.msra.mxu0 0
    %138 = vmatpush.bf16.msra.mxu0 0
    %139 = vmatpush.bf16.msra.mxu0 0
    %140 = vmatpush.bf16.msra.mxu0 0
    %141 = vmatpush.bf16.msra.mxu0 0
    %142 = vmatpush.bf16.msra.mxu0 0
    %143 = vmatpush.bf16.msra.mxu0 0
    %144 = vmatpush.bf16.msra.mxu0 %v129
    %145 = vmatmul.bf16.gmra.mxu0 %v135
    %v146 = vpop.f32.mrf.mxu0
    %v147 = vadd.f32 %v119, %v146
    %v148 = vpop.f32.mrf.mxu0
    %v149 = vadd.f32 %v121, %v148
    %150 = vdwg.mxu0
    %151 = vmatpush.bf16.msra.mxu0 0
    %152 = vmatpush.bf16.msra.mxu0 0
    %153 = vmatpush.bf16.msra.mxu0 0
    %154 = vmatpush.bf16.msra.mxu0 0
    %155 = vmatpush.bf16.msra.mxu0 0
    %156 = vmatpush.bf16.msra.mxu0 0
    %157 = vmatpush.bf16.msra.mxu0 0
    %158 = vmatpush.bf16.msra.mxu0 %v130
    %159 = vmatmul.bf16.gmra.mxu0 %v135
    %v160 = vpop.f32.mrf.mxu0
    %v161 = vadd.f32 %v120, %v160
    %v162 = vpop.f32.mrf.mxu0
    %v163 = vadd.f32 %v122, %v162
    %164 = vdwg.mxu0
    %v165 = vld [vmem:[%s7] sm:$0xff]
    %v166 = vld [vmem:[%s7 + $0x8] sm:$0xff]
    %v167 = vld [vmem:[%s7 + $0x10] sm:$0x3]
    %v168 = vld [vmem:[%s7 + $0x18] sm:$0x3]
    %v169 = vld [vmem:[#allocation2] sm:$0xff]
    %v170 = vld [vmem:[#allocation2 + $0x8] sm:$0xff]
    %v171 = vld [vmem:[#allocation2 + $0x10] sm:$0xff]
    %v172 = vld [vmem:[#allocation2 + $0x18] sm:$0xff]
    %v173 = vld [vmem:[#allocation2 + $0x20] sm:$0xff]
    %v174 = vld [vmem:[#allocation2 + $0x28] sm:$0xff]
    %v175 = vld [vmem:[#allocation2 + $0x30] sm:$0xff]
    %v176 = vld [vmem:[#allocation2 + $0x38] sm:$0xff]
    %v177 = vld [vmem:[#allocation2 + $0x40] sm:$0xff]
    %v178 = vld [vmem:[#allocation2 + $0x48] sm:$0xff]
    %v179 = vld [vmem:[#allocation2 + $0x50] sm:$0xff]
    %v180 = vld [vmem:[#allocation2 + $0x58] sm:$0xff]
    %v181 = vld [vmem:[#allocation2 + $0x60] sm:$0xff]
    %v182 = vld [vmem:[#allocation2 + $0x68] sm:$0xff]
    %v183 = vld [vmem:[#allocation2 + $0x70] sm:$0xff]
    %v184 = vld [vmem:[#allocation2 + $0x78] sm:$0xff]
    %v185 = vld [vmem:[#allocation2 + $0x80] sm:$0xff]
    %v186 = vld [vmem:[#allocation2 + $0x88] sm:$0xff]
    %v187 = vld [vmem:[#allocation2 + $0x90] sm:$0xff]
    %v188 = vld [vmem:[#allocation2 + $0x98] sm:$0xff]
    %v189 = vld [vmem:[#allocation2 + $0xa0] sm:$0xff]
    %v190 = vld [vmem:[#allocation2 + $0xa8] sm:$0xff]
    %v191 = vld [vmem:[#allocation2 + $0xb0] sm:$0xff]
    %v192 = vld [vmem:[#allocation2 + $0xb8] sm:$0xff]
    %v193 = vld [vmem:[#allocation2 + $0xc0] sm:$0xff]
    %v194 = vld [vmem:[#allocation2 + $0xc8] sm:$0xff]
    %v195 = vld [vmem:[#allocation2 + $0xd0] sm:$0xff]
    %v196 = vld [vmem:[#allocation2 + $0xd8] sm:$0xff]
    %v197 = vld [vmem:[#allocation2 + $0xe0] sm:$0xff]
    %v198 = vld [vmem:[#allocation2 + $0xe8] sm:$0xff]
    %v199 = vld [vmem:[#allocation2 + $0xf0] sm:$0xff]
    %v200 = vld [vmem:[#allocation2 + $0xf8] sm:$0xff]
    %v201 = vld [vmem:[#allocation2 + $0x100] sm:$0xff]
    %v202 = vld [vmem:[#allocation2 + $0x108] sm:$0xff]
    %v203 = vld [vmem:[#allocation2 + $0x110] sm:$0xff]
    %v204 = vld [vmem:[#allocation2 + $0x118] sm:$0xff]
    %v205 = vld [vmem:[#allocation2 + $0x120] sm:$0xff]
    %v206 = vld [vmem:[#allocation2 + $0x128] sm:$0xff]
    %v207 = vld [vmem:[#allocation2 + $0x130] sm:$0xff]
    %v208 = vld [vmem:[#allocation2 + $0x138] sm:$0xff]
    %v209 = vld [vmem:[#allocation2 + $0x140] sm:$0xff]
    %v210 = vld [vmem:[#allocation2 + $0x148] sm:$0xff]
    %v211 = vld [vmem:[#allocation2 + $0x150] sm:$0xff]
    %v212 = vld [vmem:[#allocation2 + $0x158] sm:$0xff]
    %v213 = vld [vmem:[#allocation2 + $0x160] sm:$0xff]
    %v214 = vld [vmem:[#allocation2 + $0x168] sm:$0xff]
    %v215 = vld [vmem:[#allocation2 + $0x170] sm:$0xff]
    %v216 = vld [vmem:[#allocation2 + $0x178] sm:$0xff]
    %v217 = vld [vmem:[#allocation2 + $0x180] sm:$0xff]
    %v218 = vld [vmem:[#allocation2 + $0x188] sm:$0xff]
    %v219 = vld [vmem:[#allocation2 + $0x190] sm:$0xff]
    %v220 = vld [vmem:[#allocation2 + $0x198] sm:$0xff]
    %v221 = vld [vmem:[#allocation2 + $0x1a0] sm:$0xff]
    %v222 = vld [vmem:[#allocation2 + $0x1a8] sm:$0xff]
    %v223 = vld [vmem:[#allocation2 + $0x1b0] sm:$0xff]
    %v224 = vld [vmem:[#allocation2 + $0x1b8] sm:$0xff]
    %v225 = vld [vmem:[#allocation2 + $0x1c0] sm:$0xff]
    %v226 = vld [vmem:[#allocation2 + $0x1c8] sm:$0xff]
    %v227 = vld [vmem:[#allocation2 + $0x1d0] sm:$0xff]
    %v228 = vld [vmem:[#allocation2 + $0x1d8] sm:$0xff]
    %v229 = vld [vmem:[#allocation2 + $0x1e0] sm:$0xff]
    %v230 = vld [vmem:[#allocation2 + $0x1e8] sm:$0xff]
    %v231 = vld [vmem:[#allocation2 + $0x1f0] sm:$0xff]
    %v232 = vld [vmem:[#allocation2 + $0x1f8] sm:$0xff]
    %v233 = vld [vmem:[#allocation2 + $0x200] sm:$0xff]
    %v234 = vld [vmem:[#allocation2 + $0x208] sm:$0xff]
    %v235 = vld [vmem:[#allocation2 + $0x210] sm:$0xff]
    %v236 = vld [vmem:[#allocation2 + $0x218] sm:$0xff]
    %v237 = vld [vmem:[#allocation2 + $0x220] sm:$0xff]
    %v238 = vld [vmem:[#allocation2 + $0x228] sm:$0xff]
    %v239 = vld [vmem:[#allocation2 + $0x230] sm:$0xff]
    %v240 = vld [vmem:[#allocation2 + $0x238] sm:$0xff]
    %v241 = vld [vmem:[#allocation2 + $0x240] sm:$0xff]
    %v242 = vld [vmem:[#allocation2 + $0x248] sm:$0xff]
    %v243 = vld [vmem:[#allocation2 + $0x250] sm:$0xff]
    %v244 = vld [vmem:[#allocation2 + $0x258] sm:$0xff]
    %v245 = vld [vmem:[#allocation2 + $0x260] sm:$0xff]
    %v246 = vld [vmem:[#allocation2 + $0x268] sm:$0xff]
    %v247 = vld [vmem:[#allocation2 + $0x270] sm:$0xff]
    %v248 = vld [vmem:[#allocation2 + $0x278] sm:$0xff]
    %v249 = vld [vmem:[#allocation2 + $0x280] sm:$0xff]
    %v250 = vld [vmem:[#allocation2 + $0x288] sm:$0xff]
    %v251 = vld [vmem:[#allocation2 + $0x290] sm:$0xff]
    %v252 = vld [vmem:[#allocation2 + $0x298] sm:$0xff]
    %v253 = vld [vmem:[#allocation2 + $0x2a0] sm:$0xff]
    %v254 = vld [vmem:[#allocation2 + $0x2a8] sm:$0xff]
    %v255 = vld [vmem:[#allocation2 + $0x2b0] sm:$0xff]
    %v256 = vld [vmem:[#allocation2 + $0x2b8] sm:$0xff]
    %v257 = vld [vmem:[#allocation2 + $0x2c0] sm:$0xff]
    %v258 = vld [vmem:[#allocation2 + $0x2c8] sm:$0xff]
    %v259 = vld [vmem:[#allocation2 + $0x2d0] sm:$0xff]
    %v260 = vld [vmem:[#allocation2 + $0x2d8] sm:$0xff]
    %v261 = vld [vmem:[#allocation2 + $0x2e0] sm:$0xff]
    %v262 = vld [vmem:[#allocation2 + $0x2e8] sm:$0xff]
    %v263 = vld [vmem:[#allocation2 + $0x2f0] sm:$0xff]
    %v264 = vld [vmem:[#allocation2 + $0x2f8] sm:$0xff]
    %v265 = vpack.c.bf16 %v149, %v147
    %v266 = vpack.c.bf16 %v163, %v161
    %v363 = vunpack.c.l.b16 %v169
    %v364 = vunpack.c.h.b16 %v169
    %v365 = vunpack.c.l.b16 %v170
    %v366 = vunpack.c.h.b16 %v170
    %v367 = vunpack.c.l.b16 %v171
    %v368 = vunpack.c.h.b16 %v171
    %v369 = vunpack.c.l.b16 %v172
    %v370 = vunpack.c.h.b16 %v172
    %v371 = vunpack.c.l.b16 %v173
    %v372 = vunpack.c.h.b16 %v173
    %v373 = vunpack.c.l.b16 %v174
    %v374 = vunpack.c.h.b16 %v174
    %v375 = vunpack.c.l.b16 %v175
    %v376 = vunpack.c.h.b16 %v175
    %v377 = vunpack.c.l.b16 %v176
    %v378 = vunpack.c.h.b16 %v176
    %v379 = vunpack.c.l.b16 %v177
    %v380 = vunpack.c.h.b16 %v177
    %v381 = vunpack.c.l.b16 %v178
    %v382 = vunpack.c.h.b16 %v178
    %v383 = vunpack.c.l.b16 %v179
    %v384 = vunpack.c.h.b16 %v179
    %v385 = vunpack.c.l.b16 %v180
    %v386 = vunpack.c.h.b16 %v180
    %v387 = vunpack.c.l.b16 %v181
    %v388 = vunpack.c.h.b16 %v181
    %v389 = vunpack.c.l.b16 %v182
    %v390 = vunpack.c.h.b16 %v182
    %v391 = vunpack.c.l.b16 %v183
    %v392 = vunpack.c.h.b16 %v183
    %v393 = vunpack.c.l.b16 %v184
    %v394 = vunpack.c.h.b16 %v184
    %v395 = vunpack.c.l.b16 %v185
    %v396 = vunpack.c.h.b16 %v185
    %v397 = vunpack.c.l.b16 %v186
    %v398 = vunpack.c.h.b16 %v186
    %v399 = vunpack.c.l.b16 %v187
    %v400 = vunpack.c.h.b16 %v187
    %v401 = vunpack.c.l.b16 %v188
    %v402 = vunpack.c.h.b16 %v188
    %v403 = vunpack.c.l.b16 %v189
    %v404 = vunpack.c.h.b16 %v189
    %v405 = vunpack.c.l.b16 %v190
    %v406 = vunpack.c.h.b16 %v190
    %v407 = vunpack.c.l.b16 %v191
    %v408 = vunpack.c.h.b16 %v191
    %v409 = vunpack.c.l.b16 %v192
    %v410 = vunpack.c.h.b16 %v192
    %v411 = vunpack.c.l.b16 %v193
    %v412 = vunpack.c.h.b16 %v193
    %v413 = vunpack.c.l.b16 %v194
    %v414 = vunpack.c.h.b16 %v194
    %v415 = vunpack.c.l.b16 %v195
    %v416 = vunpack.c.h.b16 %v195
    %v417 = vunpack.c.l.b16 %v196
    %v418 = vunpack.c.h.b16 %v196
    %v419 = vunpack.c.l.b16 %v197
    %v420 = vunpack.c.h.b16 %v197
    %v421 = vunpack.c.l.b16 %v198
    %v422 = vunpack.c.h.b16 %v198
    %v423 = vunpack.c.l.b16 %v199
    %v424 = vunpack.c.h.b16 %v199
    %v425 = vunpack.c.l.b16 %v200
    %v426 = vunpack.c.h.b16 %v200
    %v427 = vunpack.c.l.b16 %v201
    %v428 = vunpack.c.h.b16 %v201
    %v429 = vunpack.c.l.b16 %v202
    %v430 = vunpack.c.h.b16 %v202
    %v431 = vunpack.c.l.b16 %v203
    %v432 = vunpack.c.h.b16 %v203
    %v433 = vunpack.c.l.b16 %v204
    %v434 = vunpack.c.h.b16 %v204
    %v435 = vunpack.c.l.b16 %v205
    %v436 = vunpack.c.h.b16 %v205
    %v437 = vunpack.c.l.b16 %v206
    %v438 = vunpack.c.h.b16 %v206
    %v439 = vunpack.c.l.b16 %v207
    %v440 = vunpack.c.h.b16 %v207
    %v441 = vunpack.c.l.b16 %v208
    %v442 = vunpack.c.h.b16 %v208
    %v443 = vunpack.c.l.b16 %v209
    %v444 = vunpack.c.h.b16 %v209
    %v445 = vunpack.c.l.b16 %v210
    %v446 = vunpack.c.h.b16 %v210
    %v447 = vunpack.c.l.b16 %v211
    %v448 = vunpack.c.h.b16 %v211
    %v449 = vunpack.c.l.b16 %v212
    %v450 = vunpack.c.h.b16 %v212
    %v451 = vunpack.c.l.b16 %v213
    %v452 = vunpack.c.h.b16 %v213
    %v453 = vunpack.c.l.b16 %v214
    %v454 = vunpack.c.h.b16 %v214
    %v455 = vunpack.c.l.b16 %v215
    %v456 = vunpack.c.h.b16 %v215
    %v457 = vunpack.c.l.b16 %v216
    %v458 = vunpack.c.h.b16 %v216
    %v459 = vunpack.c.l.b16 %v217
    %v460 = vunpack.c.h.b16 %v217
    %v461 = vunpack.c.l.b16 %v218
    %v462 = vunpack.c.h.b16 %v218
    %v463 = vunpack.c.l.b16 %v219
    %v464 = vunpack.c.h.b16 %v219
    %v465 = vunpack.c.l.b16 %v220
    %v466 = vunpack.c.h.b16 %v220
    %v467 = vunpack.c.l.b16 %v221
    %v468 = vunpack.c.h.b16 %v221
    %v469 = vunpack.c.l.b16 %v222
    %v470 = vunpack.c.h.b16 %v222
    %v471 = vunpack.c.l.b16 %v223
    %v472 = vunpack.c.h.b16 %v223
    %v473 = vunpack.c.l.b16 %v224
    %v474 = vunpack.c.h.b16 %v224
    %v475 = vunpack.c.l.b16 %v225
    %v476 = vunpack.c.h.b16 %v225
    %v477 = vunpack.c.l.b16 %v226
    %v478 = vunpack.c.h.b16 %v226
    %v479 = vunpack.c.l.b16 %v227
    %v480 = vunpack.c.h.b16 %v227
    %v481 = vunpack.c.l.b16 %v228
    %v482 = vunpack.c.h.b16 %v228
    %v483 = vunpack.c.l.b16 %v229
    %v484 = vunpack.c.h.b16 %v229
    %v485 = vunpack.c.l.b16 %v230
    %v486 = vunpack.c.h.b16 %v230
    %v487 = vunpack.c.l.b16 %v231
    %v488 = vunpack.c.h.b16 %v231
    %v489 = vunpack.c.l.b16 %v232
    %v490 = vunpack.c.h.b16 %v232
    %v491 = vunpack.c.l.b16 %v233
    %v492 = vunpack.c.h.b16 %v233
    %v493 = vunpack.c.l.b16 %v234
    %v494 = vunpack.c.h.b16 %v234
    %v495 = vunpack.c.l.b16 %v235
    %v496 = vunpack.c.h.b16 %v235
    %v497 = vunpack.c.l.b16 %v236
    %v498 = vunpack.c.h.b16 %v236
    %v499 = vunpack.c.l.b16 %v237
    %v500 = vunpack.c.h.b16 %v237
    %v501 = vunpack.c.l.b16 %v238
    %v502 = vunpack.c.h.b16 %v238
    %v503 = vunpack.c.l.b16 %v239
    %v504 = vunpack.c.h.b16 %v239
    %v505 = vunpack.c.l.b16 %v240
    %v506 = vunpack.c.h.b16 %v240
    %v507 = vunpack.c.l.b16 %v241
    %v508 = vunpack.c.h.b16 %v241
    %v509 = vunpack.c.l.b16 %v242
    %v510 = vunpack.c.h.b16 %v242
    %v511 = vunpack.c.l.b16 %v243
    %v512 = vunpack.c.h.b16 %v243
    %v513 = vunpack.c.l.b16 %v244
    %v514 = vunpack.c.h.b16 %v244
    %v515 = vunpack.c.l.b16 %v245
    %v516 = vunpack.c.h.b16 %v245
    %v517 = vunpack.c.l.b16 %v246
    %v518 = vunpack.c.h.b16 %v246
    %v519 = vunpack.c.l.b16 %v247
    %v520 = vunpack.c.h.b16 %v247
    %v521 = vunpack.c.l.b16 %v248
    %v522 = vunpack.c.h.b16 %v248
    %v523 = vunpack.c.l.b16 %v249
    %v524 = vunpack.c.h.b16 %v249
    %v525 = vunpack.c.l.b16 %v250
    %v526 = vunpack.c.h.b16 %v250
    %v527 = vunpack.c.l.b16 %v251
    %v528 = vunpack.c.h.b16 %v251
    %v529 = vunpack.c.l.b16 %v252
    %v530 = vunpack.c.h.b16 %v252
    %v531 = vunpack.c.l.b16 %v253
    %v532 = vunpack.c.h.b16 %v253
    %v533 = vunpack.c.l.b16 %v254
    %v534 = vunpack.c.h.b16 %v254
    %v535 = vunpack.c.l.b16 %v255
    %v536 = vunpack.c.h.b16 %v255
    %v537 = vunpack.c.l.b16 %v256
    %v538 = vunpack.c.h.b16 %v256
    %v539 = vunpack.c.l.b16 %v257
    %v540 = vunpack.c.h.b16 %v257
    %v541 = vunpack.c.l.b16 %v258
    %v542 = vunpack.c.h.b16 %v258
    %v543 = vunpack.c.l.b16 %v259
    %v544 = vunpack.c.h.b16 %v259
    %v545 = vunpack.c.l.b16 %v260
    %v546 = vunpack.c.h.b16 %v260
    %v547 = vunpack.c.l.b16 %v261
    %v548 = vunpack.c.h.b16 %v261
    %v549 = vunpack.c.l.b16 %v262
    %v550 = vunpack.c.h.b16 %v262
    %v551 = vunpack.c.l.b16 %v263
    %v552 = vunpack.c.h.b16 %v263
    %v553 = vunpack.c.l.b16 %v264
    %v554 = vunpack.c.h.b16 %v264
    %v555 = vpack.c.b16 %v369, %v363
    %v556 = vpack.c.b16 %v370, %v364
    %v557 = vpack.c.b16 %v371, %v365
    %v558 = vpack.c.b16 %v372, %v366
    %v559 = vpack.c.b16 %v373, %v367
    %v560 = vpack.c.b16 %v374, %v368
    %v561 = vpack.c.b16 %v381, %v375
    %v562 = vpack.c.b16 %v382, %v376
    %v563 = vpack.c.b16 %v383, %v377
    %v564 = vpack.c.b16 %v384, %v378
    %v565 = vpack.c.b16 %v385, %v379
    %v566 = vpack.c.b16 %v386, %v380
    %v567 = vpack.c.b16 %v393, %v387
    %v568 = vpack.c.b16 %v394, %v388
    %v569 = vpack.c.b16 %v395, %v389
    %v570 = vpack.c.b16 %v396, %v390
    %v571 = vpack.c.b16 %v397, %v391
    %v572 = vpack.c.b16 %v398, %v392
    %v573 = vpack.c.b16 %v405, %v399
    %v574 = vpack.c.b16 %v406, %v400
    %v575 = vpack.c.b16 %v407, %v401
    %v576 = vpack.c.b16 %v408, %v402
    %v577 = vpack.c.b16 %v409, %v403
    %v578 = vpack.c.b16 %v410, %v404
    %v579 = vpack.c.b16 %v417, %v411
    %v580 = vpack.c.b16 %v418, %v412
    %v581 = vpack.c.b16 %v419, %v413
    %v582 = vpack.c.b16 %v420, %v414
    %v583 = vpack.c.b16 %v421, %v415
    %v584 = vpack.c.b16 %v422, %v416
    %v585 = vpack.c.b16 %v429, %v423
    %v586 = vpack.c.b16 %v430, %v424
    %v587 = vpack.c.b16 %v431, %v425
    %v588 = vpack.c.b16 %v432, %v426
    %v589 = vpack.c.b16 %v433, %v427
    %v590 = vpack.c.b16 %v434, %v428
    %v591 = vpack.c.b16 %v441, %v435
    %v592 = vpack.c.b16 %v442, %v436
    %v593 = vpack.c.b16 %v443, %v437
    %v594 = vpack.c.b16 %v444, %v438
    %v595 = vpack.c.b16 %v445, %v439
    %v596 = vpack.c.b16 %v446, %v440
    %v597 = vpack.c.b16 %v453, %v447
    %v598 = vpack.c.b16 %v454, %v448
    %v599 = vpack.c.b16 %v455, %v449
    %v600 = vpack.c.b16 %v456, %v450
    %v601 = vpack.c.b16 %v457, %v451
    %v602 = vpack.c.b16 %v458, %v452
    %v603 = vpack.c.b16 %v465, %v459
    %v604 = vpack.c.b16 %v466, %v460
    %v605 = vpack.c.b16 %v467, %v461
    %v606 = vpack.c.b16 %v468, %v462
    %v607 = vpack.c.b16 %v469, %v463
    %v608 = vpack.c.b16 %v470, %v464
    %v609 = vpack.c.b16 %v477, %v471
    %v610 = vpack.c.b16 %v478, %v472
    %v611 = vpack.c.b16 %v479, %v473
    %v612 = vpack.c.b16 %v480, %v474
    %v613 = vpack.c.b16 %v481, %v475
    %v614 = vpack.c.b16 %v482, %v476
    %v615 = vpack.c.b16 %v489, %v483
    %v616 = vpack.c.b16 %v490, %v484
    %v617 = vpack.c.b16 %v491, %v485
    %v618 = vpack.c.b16 %v492, %v486
    %v619 = vpack.c.b16 %v493, %v487
    %v620 = vpack.c.b16 %v494, %v488
    %v621 = vpack.c.b16 %v501, %v495
    %v622 = vpack.c.b16 %v502, %v496
    %v623 = vpack.c.b16 %v503, %v497
    %v624 = vpack.c.b16 %v504, %v498
    %v625 = vpack.c.b16 %v505, %v499
    %v626 = vpack.c.b16 %v506, %v500
    %v627 = vpack.c.b16 %v513, %v507
    %v628 = vpack.c.b16 %v514, %v508
    %v629 = vpack.c.b16 %v515, %v509
    %v630 = vpack.c.b16 %v516, %v510
    %v631 = vpack.c.b16 %v517, %v511
    %v632 = vpack.c.b16 %v518, %v512
    %v633 = vpack.c.b16 %v525, %v519
    %v634 = vpack.c.b16 %v526, %v520
    %v635 = vpack.c.b16 %v527, %v521
    %v636 = vpack.c.b16 %v528, %v522
    %v637 = vpack.c.b16 %v529, %v523
    %v638 = vpack.c.b16 %v530, %v524
    %v639 = vpack.c.b16 %v537, %v531
    %v640 = vpack.c.b16 %v538, %v532
    %v641 = vpack.c.b16 %v539, %v533
    %v642 = vpack.c.b16 %v540, %v534
    %v643 = vpack.c.b16 %v541, %v535
    %v644 = vpack.c.b16 %v542, %v536
    %v645 = vpack.c.b16 %v549, %v543
    %v646 = vpack.c.b16 %v550, %v544
    %v647 = vpack.c.b16 %v551, %v545
    %v648 = vpack.c.b16 %v552, %v546
    %v649 = vpack.c.b16 %v553, %v547
    %v650 = vpack.c.b16 %v554, %v548
    %747 = vmatpush.bf16.msra.mxu0 %v597
    %748 = vmatpush.bf16.msra.mxu0 %v591
    %749 = vmatpush.bf16.msra.mxu0 %v585
    %750 = vmatpush.bf16.msra.mxu0 %v579
    %751 = vmatpush.bf16.msra.mxu0 %v573
    %752 = vmatpush.bf16.msra.mxu0 %v567
    %753 = vmatpush.bf16.msra.mxu0 %v561
    %754 = vmatpush.bf16.msra.mxu0 %v555
    %755 = vmatmul.bf16.gmra.mxu0 %v265
    %v756 = vpop.f32.mrf.mxu0
    %v757 = vadd.f32 0.0, %v756
    %v758 = vpop.f32.mrf.mxu0
    %v759 = vadd.f32 0.0, %v758
    %760 = vdwg.mxu0
    %761 = vmatpush.bf16.msra.mxu0 %v645
    %762 = vmatpush.bf16.msra.mxu0 %v639
    %763 = vmatpush.bf16.msra.mxu0 %v633
    %764 = vmatpush.bf16.msra.mxu0 %v627
    %765 = vmatpush.bf16.msra.mxu0 %v621
    %766 = vmatpush.bf16.msra.mxu0 %v615
    %767 = vmatpush.bf16.msra.mxu0 %v609
    %768 = vmatpush.bf16.msra.mxu0 %v603
    %769 = vmatmul.bf16.gmra.mxu0 %v266
    %v770 = vpop.f32.mrf.mxu0
    %v771 = vadd.f32 %v757, %v770
    %v772 = vpop.f32.mrf.mxu0
    %v773 = vadd.f32 %v759, %v772
    %774 = vdwg.mxu0
    %775 = vmatpush.bf16.msra.mxu0 %v598
    %776 = vmatpush.bf16.msra.mxu0 %v592
    %777 = vmatpush.bf16.msra.mxu0 %v586
    %778 = vmatpush.bf16.msra.mxu0 %v580
    %779 = vmatpush.bf16.msra.mxu0 %v574
    %780 = vmatpush.bf16.msra.mxu0 %v568
    %781 = vmatpush.bf16.msra.mxu0 %v562
    %782 = vmatpush.bf16.msra.mxu0 %v556
    %783 = vmatmul.bf16.gmra.mxu0 %v265
    %v784 = vpop.f32.mrf.mxu0
    %v785 = vadd.f32 0.0, %v784
    %v786 = vpop.f32.mrf.mxu0
    %v787 = vadd.f32 0.0, %v786
    %788 = vdwg.mxu0
    %789 = vmatpush.bf16.msra.mxu0 %v646
    %790 = vmatpush.bf16.msra.mxu0 %v640
    %791 = vmatpush.bf16.msra.mxu0 %v634
    %792 = vmatpush.bf16.msra.mxu0 %v628
    %793 = vmatpush.bf16.msra.mxu0 %v622
    %794 = vmatpush.bf16.msra.mxu0 %v616
    %795 = vmatpush.bf16.msra.mxu0 %v610
    %796 = vmatpush.bf16.msra.mxu0 %v604
    %797 = vmatmul.bf16.gmra.mxu0 %v266
    %v798 = vpop.f32.mrf.mxu0
    %v799 = vadd.f32 %v785, %v798
    %v800 = vpop.f32.mrf.mxu0
    %v801 = vadd.f32 %v787, %v800
    %802 = vdwg.mxu0
    %803 = vmatpush.bf16.msra.mxu0 %v599
    %804 = vmatpush.bf16.msra.mxu0 %v593
    %805 = vmatpush.bf16.msra.mxu0 %v587
    %806 = vmatpush.bf16.msra.mxu0 %v581
    %807 = vmatpush.bf16.msra.mxu0 %v575
    %808 = vmatpush.bf16.msra.mxu0 %v569
    %809 = vmatpush.bf16.msra.mxu0 %v563
    %810 = vmatpush.bf16.msra.mxu0 %v557
    %811 = vmatmul.bf16.gmra.mxu0 %v265
    %v812 = vpop.f32.mrf.mxu0
    %v813 = vadd.f32 0.0, %v812
    %v814 = vpop.f32.mrf.mxu0
    %v815 = vadd.f32 0.0, %v814
    %816 = vdwg.mxu0
    %817 = vmatpush.bf16.msra.mxu0 %v647
    %818 = vmatpush.bf16.msra.mxu0 %v641
    %819 = vmatpush.bf16.msra.mxu0 %v635
    %820 = vmatpush.bf16.msra.mxu0 %v629
    %821 = vmatpush.bf16.msra.mxu0 %v623
    %822 = vmatpush.bf16.msra.mxu0 %v617
    %823 = vmatpush.bf16.msra.mxu0 %v611
    %824 = vmatpush.bf16.msra.mxu0 %v605
    %825 = vmatmul.bf16.gmra.mxu0 %v266
    %v826 = vpop.f32.mrf.mxu0
    %v827 = vadd.f32 %v813, %v826
    %v828 = vpop.f32.mrf.mxu0
    %v829 = vadd.f32 %v815, %v828
    %830 = vdwg.mxu0
    %831 = vmatpush.bf16.msra.mxu0 %v600
    %832 = vmatpush.bf16.msra.mxu0 %v594
    %833 = vmatpush.bf16.msra.mxu0 %v588
    %834 = vmatpush.bf16.msra.mxu0 %v582
    %835 = vmatpush.bf16.msra.mxu0 %v576
    %836 = vmatpush.bf16.msra.mxu0 %v570
    %837 = vmatpush.bf16.msra.mxu0 %v564
    %838 = vmatpush.bf16.msra.mxu0 %v558
    %839 = vmatmul.bf16.gmra.mxu0 %v265
    %v840 = vpop.f32.mrf.mxu0
    %v841 = vadd.f32 0.0, %v840
    %v842 = vpop.f32.mrf.mxu0
    %v843 = vadd.f32 0.0, %v842
    %844 = vdwg.mxu0
    %845 = vmatpush.bf16.msra.mxu0 %v648
    %846 = vmatpush.bf16.msra.mxu0 %v642
    %847 = vmatpush.bf16.msra.mxu0 %v636
    %848 = vmatpush.bf16.msra.mxu0 %v630
    %849 = vmatpush.bf16.msra.mxu0 %v624
    %850 = vmatpush.bf16.msra.mxu0 %v618
    %851 = vmatpush.bf16.msra.mxu0 %v612
    %852 = vmatpush.bf16.msra.mxu0 %v606
    %853 = vmatmul.bf16.gmra.mxu0 %v266
    %v854 = vpop.f32.mrf.mxu0
    %v855 = vadd.f32 %v841, %v854
    %v856 = vpop.f32.mrf.mxu0
    %v857 = vadd.f32 %v843, %v856
    %858 = vdwg.mxu0
    %859 = vmatpush.bf16.msra.mxu0 %v601
    %860 = vmatpush.bf16.msra.mxu0 %v595
    %861 = vmatpush.bf16.msra.mxu0 %v589
    %862 = vmatpush.bf16.msra.mxu0 %v583
    %863 = vmatpush.bf16.msra.mxu0 %v577
    %864 = vmatpush.bf16.msra.mxu0 %v571
    %865 = vmatpush.bf16.msra.mxu0 %v565
    %866 = vmatpush.bf16.msra.mxu0 %v559
    %867 = vmatmul.bf16.gmra.mxu0 %v265
    %v868 = vpop.f32.mrf.mxu0
    %v869 = vadd.f32 0.0, %v868
    %v870 = vpop.f32.mrf.mxu0
    %v871 = vadd.f32 0.0, %v870
    %872 = vdwg.mxu0
    %873 = vmatpush.bf16.msra.mxu0 %v649
    %874 = vmatpush.bf16.msra.mxu0 %v643
    %875 = vmatpush.bf16.msra.mxu0 %v637
    %876 = vmatpush.bf16.msra.mxu0 %v631
    %877 = vmatpush.bf16.msra.mxu0 %v625
    %878 = vmatpush.bf16.msra.mxu0 %v619
    %879 = vmatpush.bf16.msra.mxu0 %v613
    %880 = vmatpush.bf16.msra.mxu0 %v607
    %881 = vmatmul.bf16.gmra.mxu0 %v266
    %v882 = vpop.f32.mrf.mxu0
    %v883 = vadd.f32 %v869, %v882
    %v884 = vpop.f32.mrf.mxu0
    %v885 = vadd.f32 %v871, %v884
    %886 = vdwg.mxu0
    %887 = vmatpush.bf16.msra.mxu0 %v602
    %888 = vmatpush.bf16.msra.mxu0 %v596
    %889 = vmatpush.bf16.msra.mxu0 %v590
    %890 = vmatpush.bf16.msra.mxu0 %v584
    %891 = vmatpush.bf16.msra.mxu0 %v578
    %892 = vmatpush.bf16.msra.mxu0 %v572
    %893 = vmatpush.bf16.msra.mxu0 %v566
    %894 = vmatpush.bf16.msra.mxu0 %v560
    %895 = vmatmul.bf16.gmra.mxu0 %v265
    %v896 = vpop.f32.mrf.mxu0
    %v897 = vadd.f32 0.0, %v896
    %v898 = vpop.f32.mrf.mxu0
    %v899 = vadd.f32 0.0, %v898
    %900 = vdwg.mxu0
    %901 = vmatpush.bf16.msra.mxu0 %v650
    %902 = vmatpush.bf16.msra.mxu0 %v644
    %903 = vmatpush.bf16.msra.mxu0 %v638
    %904 = vmatpush.bf16.msra.mxu0 %v632
    %905 = vmatpush.bf16.msra.mxu0 %v626
    %906 = vmatpush.bf16.msra.mxu0 %v620
    %907 = vmatpush.bf16.msra.mxu0 %v614
    %908 = vmatpush.bf16.msra.mxu0 %v608
    %909 = vmatmul.bf16.gmra.mxu0 %v266
    %v910 = vpop.f32.mrf.mxu0
    %v911 = vadd.f32 %v897, %v910
    %v912 = vpop.f32.mrf.mxu0
    %v913 = vadd.f32 %v899, %v912
    %914 = vdwg.mxu0
    %v915 = vperm.slane %v165, 0
    %v916 = vperm.slane %v166, 0
    %v917 = vadd.f32 %v771, %v915
    %v918 = vadd.f32 %v799, %v916
    %v919 = vadd.f32 %v773, %v915
    %v920 = vadd.f32 %v801, %v916
    %v921 = vperm.slane %v165, 1
    %v922 = vperm.slane %v166, 1
    %v923 = vadd.f32 %v827, %v921
    %v924 = vadd.f32 %v855, %v922
    %v925 = vadd.f32 %v829, %v921
    %v926 = vadd.f32 %v857, %v922
    %v927 = vperm.slane %v165, 2
    %v928 = vperm.slane %v166, 2
    %v929 = vadd.f32 %v883, %v927
    %v930 = vadd.f32 %v911, %v928
    %v931 = vadd.f32 %v885, %v927
    %v932 = vadd.f32 %v913, %v928
    %v933 = vpack.c.bf16 %v917, %v917
    %v934 = vpack.c.bf16 %v919, %v919
    %v935 = vpack.c.bf16 %v918, %v918
    %v936 = vpack.c.bf16 %v920, %v920
    %v937 = vpack.c.bf16 %v923, %v923
    %v938 = vpack.c.bf16 %v925, %v925
    %v939 = vpack.c.bf16 %v924, %v924
    %v940 = vpack.c.bf16 %v926, %v926
    %941 = vmatpush.bf16.xpose.msra.mxu0 0
    %942 = vmatpush.bf16.xpose.msra.mxu0 0
    %943 = vmatpush.bf16.xpose.msra.mxu0 0
    %944 = vmatpush.bf16.xpose.msra.mxu0 0
    %945 = vmatpush.bf16.xpose.msra.mxu0 0
    %946 = vmatpush.bf16.xpose.msra.mxu0 0
    %947 = vmatpush.bf16.xpose.msra.mxu0 0
    %948 = vmatpush.bf16.xpose.msra.mxu0 %v937
    %949 = vmatmul.bf16.gmra.mxu0 %v933
    %v950 = vpop.f32.mrf.mxu0
    %v951 = vadd.f32 0.0, %v950
    %v952 = vpop.f32.mrf.mxu0
    %953 = vdwg.mxu0
    %954 = vmatpush.bf16.xpose.msra.mxu0 0
    %955 = vmatpush.bf16.xpose.msra.mxu0 0
    %956 = vmatpush.bf16.xpose.msra.mxu0 0
    %957 = vmatpush.bf16.xpose.msra.mxu0 0
    %958 = vmatpush.bf16.xpose.msra.mxu0 0
    %959 = vmatpush.bf16.xpose.msra.mxu0 0
    %960 = vmatpush.bf16.xpose.msra.mxu0 0
    %961 = vmatpush.bf16.xpose.msra.mxu0 %v938
    %962 = vmatmul.bf16.gmra.mxu0 %v934
    %v963 = vpop.f32.mrf.mxu0
    %v964 = vadd.f32 0.0, %v963
    %v965 = vpop.f32.mrf.mxu0
    %966 = vdwg.mxu0
    %967 = vmatpush.bf16.xpose.msra.mxu0 0
    %968 = vmatpush.bf16.xpose.msra.mxu0 0
    %969 = vmatpush.bf16.xpose.msra.mxu0 0
    %970 = vmatpush.bf16.xpose.msra.mxu0 0
    %971 = vmatpush.bf16.xpose.msra.mxu0 0
    %972 = vmatpush.bf16.xpose.msra.mxu0 0
    %973 = vmatpush.bf16.xpose.msra.mxu0 0
    %974 = vmatpush.bf16.xpose.msra.mxu0 %v939
    %975 = vmatmul.bf16.gmra.mxu0 %v935
    %v976 = vpop.f32.mrf.mxu0
    %v977 = vadd.f32 0.0, %v976
    %v978 = vpop.f32.mrf.mxu0
    %979 = vdwg.mxu0
    %980 = vmatpush.bf16.xpose.msra.mxu0 0
    %981 = vmatpush.bf16.xpose.msra.mxu0 0
    %982 = vmatpush.bf16.xpose.msra.mxu0 0
    %983 = vmatpush.bf16.xpose.msra.mxu0 0
    %984 = vmatpush.bf16.xpose.msra.mxu0 0
    %985 = vmatpush.bf16.xpose.msra.mxu0 0
    %986 = vmatpush.bf16.xpose.msra.mxu0 0
    %987 = vmatpush.bf16.xpose.msra.mxu0 %v940
    %988 = vmatmul.bf16.gmra.mxu0 %v936
    %v989 = vpop.f32.mrf.mxu0
    %v990 = vadd.f32 0.0, %v989
    %v991 = vpop.f32.mrf.mxu0
    %992 = vdwg.mxu0
    %v993 = vmul.f32 %v951, 0.088388346
    %v994 = vmul.f32 %v964, 0.088388346
    %v995 = vmul.f32 %v977, 0.088388346
    %v996 = vmul.f32 %v990, 0.088388346
    %vm997 = vcmask 64512
    %v998 = vsel %vm997, %v993, -inf
    %999 = vmax.xlane.f32.xlu0 %v998
    %v1000 = vpop.xlane.xlu0 %999
    %v1001 = vsel %vm997, %v994, -inf
    %1002 = vmax.xlane.f32.xlu0 %v1001
    %v1003 = vpop.xlane.xlu0 %1002
    %v1004 = vsel %vm997, %v995, -inf
    %1005 = vmax.xlane.f32.xlu0 %v1004
    %v1006 = vpop.xlane.xlu0 %1005
    %v1007 = vsel %vm997, %v996, -inf
    %1008 = vmax.xlane.f32.xlu0 %v1007
    %v1009 = vpop.xlane.xlu0 %1008
    %v1010 = vsub.f32 %v993, %v1000
    %v1011 = vsub.f32 %v994, %v1003
    %v1012 = vsub.f32 %v995, %v1006
    %v1013 = vsub.f32 %v996, %v1009
    %v1014 = vmul.f32 %v1010, 1.442695
    %v1015 = vpow.pop %v1014
    %v1016 = vmul.f32 %v1011, 1.442695
    %v1017 = vpow.pop %v1016
    %v1018 = vmul.f32 %v1012, 1.442695
    %v1019 = vpow.pop %v1018
    %v1020 = vmul.f32 %v1013, 1.442695
    %v1021 = vpow.pop %v1020
    %v1022 = vsel %vm997, %v1015, 0.0
    %1023 = vadd.xlane.f32.xlu0 %v1022
    %v1024 = vpop.xlane.xlu0 %1023
    %v1025 = vsel %vm997, %v1017, 0.0
    %1026 = vadd.xlane.f32.xlu0 %v1025
    %v1027 = vpop.xlane.xlu0 %1026
    %v1028 = vsel %vm997, %v1019, 0.0
    %1029 = vadd.xlane.f32.xlu0 %v1028
    %v1030 = vpop.xlane.xlu0 %1029
    %v1031 = vsel %vm997, %v1021, 0.0
    %1032 = vadd.xlane.f32.xlu0 %v1031
    %v1033 = vpop.xlane.xlu0 %1032
    %v1034 = vrcp.pop %v1024
    %v1035 = vmul.f32 %v1024, %v1034
    %v1036 = vsub.f32 1.0, %v1035
    %v1037 = vmul.f32 %v1034, %v1036
    %v1038 = vadd.f32 %v1034, %v1037
    %vm1039 = vweird.f32 %v1024
    %vm1040 = vweird.f32 %v1034
    %vm1041 = vmor %vm1039, %vm1040
    %v1042 = vsel %vm1041, %v1034, %v1038
    %v1043 = vand.u32 2147483647, %v1024
    %vm1044 = vcmp.eq.f32.partialorder %v1043, 8.507059e+37
    %v1045 = vand.u32 %v1024, 2147483648
    %v1046 = vor.u32 1.1754944e-38, %v1045
    %v1047 = vsel %vm1044, %v1046, %v1042
    %v1048 = vmul.f32 %v1015, %v1047
    %v1049 = vrcp.pop %v1027
    %v1050 = vmul.f32 %v1027, %v1049
    %v1051 = vsub.f32 1.0, %v1050
    %v1052 = vmul.f32 %v1049, %v1051
    %v1053 = vadd.f32 %v1049, %v1052
    %vm1054 = vweird.f32 %v1027
    %vm1055 = vweird.f32 %v1049
    %vm1056 = vmor %vm1054, %vm1055
    %v1057 = vsel %vm1056, %v1049, %v1053
    %v1058 = vand.u32 2147483647, %v1027
    %vm1059 = vcmp.eq.f32.partialorder %v1058, 8.507059e+37
    %v1060 = vand.u32 %v1027, 2147483648
    %v1061 = vor.u32 1.1754944e-38, %v1060
    %v1062 = vsel %vm1059, %v1061, %v1057
    %v1063 = vmul.f32 %v1017, %v1062
    %v1064 = vrcp.pop %v1030
    %v1065 = vmul.f32 %v1030, %v1064
    %v1066 = vsub.f32 1.0, %v1065
    %v1067 = vmul.f32 %v1064, %v1066
    %v1068 = vadd.f32 %v1064, %v1067
    %vm1069 = vweird.f32 %v1030
    %vm1070 = vweird.f32 %v1064
    %vm1071 = vmor %vm1069, %vm1070
    %v1072 = vsel %vm1071, %v1064, %v1068
    %v1073 = vand.u32 2147483647, %v1030
    %vm1074 = vcmp.eq.f32.partialorder %v1073, 8.507059e+37
    %v1075 = vand.u32 %v1030, 2147483648
    %v1076 = vor.u32 1.1754944e-38, %v1075
    %v1077 = vsel %vm1074, %v1076, %v1072
    %v1078 = vmul.f32 %v1019, %v1077
    %v1079 = vrcp.pop %v1033
    %v1080 = vmul.f32 %v1033, %v1079
    %v1081 = vsub.f32 1.0, %v1080
    %v1082 = vmul.f32 %v1079, %v1081
    %v1083 = vadd.f32 %v1079, %v1082
    %vm1084 = vweird.f32 %v1033
    %vm1085 = vweird.f32 %v1079
    %vm1086 = vmor %vm1084, %vm1085
    %v1087 = vsel %vm1086, %v1079, %v1083
    %v1088 = vand.u32 2147483647, %v1033
    %vm1089 = vcmp.eq.f32.partialorder %v1088, 8.507059e+37
    %v1090 = vand.u32 %v1033, 2147483648
    %v1091 = vor.u32 1.1754944e-38, %v1090
    %v1092 = vsel %vm1089, %v1091, %v1087
    %v1093 = vmul.f32 %v1021, %v1092
    %v1094 = vpack.c.bf16 %v1048, %v1048
    %v1095 = vpack.c.bf16 %v1063, %v1063
    %v1096 = vpack.c.bf16 %v1078, %v1078
    %v1097 = vpack.c.bf16 %v1093, %v1093
    %v1098 = vpack.c.bf16 %v929, %v929
    %v1099 = vpack.c.bf16 %v931, %v931
    %v1100 = vpack.c.bf16 %v930, %v930
    %v1101 = vpack.c.bf16 %v932, %v932
    %v1103 = vsel %vm997, %v1094, 0
    %vm1105 = vcmask 1043456
    %v1107 = vsel %vm1105, %v1098, 0
    %1109 = vmatpush.bf16.msra.mxu0 0
    %1110 = vmatpush.bf16.msra.mxu0 0
    %1111 = vmatpush.bf16.msra.mxu0 0
    %1112 = vmatpush.bf16.msra.mxu0 0
    %1113 = vmatpush.bf16.msra.mxu0 0
    %1114 = vmatpush.bf16.msra.mxu0 0
    %1115 = vmatpush.bf16.msra.mxu0 0
    %1116 = vmatpush.bf16.msra.mxu0 %v1107
    %1117 = vmatmul.bf16.gmra.mxu0 %v1103
    %v1118 = vpop.f32.mrf.mxu0
    %v1119 = vadd.f32 0.0, %v1118
    %v1120 = vpop.f32.mrf.mxu0
    %1121 = vdwg.mxu0
    %v1123 = vsel %vm997, %v1095, 0
    %v1126 = vsel %vm1105, %v1099, 0
    %1128 = vmatpush.bf16.msra.mxu0 0
    %1129 = vmatpush.bf16.msra.mxu0 0
    %1130 = vmatpush.bf16.msra.mxu0 0
    %1131 = vmatpush.bf16.msra.mxu0 0
    %1132 = vmatpush.bf16.msra.mxu0 0
    %1133 = vmatpush.bf16.msra.mxu0 0
    %1134 = vmatpush.bf16.msra.mxu0 0
    %1135 = vmatpush.bf16.msra.mxu0 %v1126
    %1136 = vmatmul.bf16.gmra.mxu0 %v1123
    %v1137 = vpop.f32.mrf.mxu0
    %v1138 = vadd.f32 0.0, %v1137
    %v1139 = vpop.f32.mrf.mxu0
    %1140 = vdwg.mxu0
    %v1142 = vsel %vm997, %v1096, 0
    %v1145 = vsel %vm1105, %v1100, 0
    %1147 = vmatpush.bf16.msra.mxu0 0
    %1148 = vmatpush.bf16.msra.mxu0 0
    %1149 = vmatpush.bf16.msra.mxu0 0
    %1150 = vmatpush.bf16.msra.mxu0 0
    %1151 = vmatpush.bf16.msra.mxu0 0
    %1152 = vmatpush.bf16.msra.mxu0 0
    %1153 = vmatpush.bf16.msra.mxu0 0
    %1154 = vmatpush.bf16.msra.mxu0 %v1145
    %1155 = vmatmul.bf16.gmra.mxu0 %v1142
    %v1156 = vpop.f32.mrf.mxu0
    %v1157 = vadd.f32 0.0, %v1156
    %v1158 = vpop.f32.mrf.mxu0
    %1159 = vdwg.mxu0
    %v1161 = vsel %vm997, %v1097, 0
    %v1164 = vsel %vm1105, %v1101, 0
    %1166 = vmatpush.bf16.msra.mxu0 0
    %1167 = vmatpush.bf16.msra.mxu0 0
    %1168 = vmatpush.bf16.msra.mxu0 0
    %1169 = vmatpush.bf16.msra.mxu0 0
    %1170 = vmatpush.bf16.msra.mxu0 0
    %1171 = vmatpush.bf16.msra.mxu0 0
    %1172 = vmatpush.bf16.msra.mxu0 0
    %1173 = vmatpush.bf16.msra.mxu0 %v1164
    %1174 = vmatmul.bf16.gmra.mxu0 %v1161
    %v1175 = vpop.f32.mrf.mxu0
    %v1176 = vadd.f32 0.0, %v1175
    %v1177 = vpop.f32.mrf.mxu0
    %1178 = vdwg.mxu0
    %v1179 = vld [vmem:[#allocation4] sm:$0xff]
    %v1180 = vld [vmem:[#allocation4 + $0x8] sm:$0xff]
    %v1181 = vld [vmem:[#allocation4 + $0x10] sm:$0xff]
    %v1182 = vld [vmem:[#allocation4 + $0x18] sm:$0xff]
    %v1183 = vld [vmem:[#allocation4 + $0x20] sm:$0xff]
    %v1184 = vld [vmem:[#allocation4 + $0x28] sm:$0xff]
    %v1185 = vld [vmem:[#allocation4 + $0x30] sm:$0xff]
    %v1186 = vld [vmem:[#allocation4 + $0x38] sm:$0xff]
    %v1187 = vld [vmem:[#allocation4 + $0x40] sm:$0xff]
    %v1188 = vld [vmem:[#allocation4 + $0x48] sm:$0xff]
    %v1189 = vld [vmem:[#allocation4 + $0x50] sm:$0xff]
    %v1190 = vld [vmem:[#allocation4 + $0x58] sm:$0xff]
    %v1191 = vld [vmem:[#allocation4 + $0x60] sm:$0xff]
    %v1192 = vld [vmem:[#allocation4 + $0x68] sm:$0xff]
    %v1193 = vld [vmem:[#allocation4 + $0x70] sm:$0xff]
    %v1194 = vld [vmem:[#allocation4 + $0x78] sm:$0xff]
    %v1195 = vld [vmem:[#allocation4 + $0x80] sm:$0xff]
    %v1196 = vld [vmem:[#allocation4 + $0x88] sm:$0xff]
    %v1197 = vld [vmem:[#allocation4 + $0x90] sm:$0xff]
    %v1198 = vld [vmem:[#allocation4 + $0x98] sm:$0xff]
    %v1199 = vld [vmem:[#allocation4 + $0xa0] sm:$0xff]
    %v1200 = vld [vmem:[#allocation4 + $0xa8] sm:$0xff]
    %v1201 = vld [vmem:[#allocation4 + $0xb0] sm:$0xff]
    %v1202 = vld [vmem:[#allocation4 + $0xb8] sm:$0xff]
    %v1203 = vld [vmem:[#allocation4 + $0xc0] sm:$0xff]
    %v1204 = vld [vmem:[#allocation4 + $0xc8] sm:$0xff]
    %v1205 = vld [vmem:[#allocation4 + $0xd0] sm:$0xff]
    %v1206 = vld [vmem:[#allocation4 + $0xd8] sm:$0xff]
    %v1207 = vld [vmem:[#allocation4 + $0xe0] sm:$0xff]
    %v1208 = vld [vmem:[#allocation4 + $0xe8] sm:$0xff]
    %v1209 = vld [vmem:[#allocation4 + $0xf0] sm:$0xff]
    %v1210 = vld [vmem:[#allocation4 + $0xf8] sm:$0xff]
    %v1211 = vpack.c.bf16 %v1138, %v1119
    %v1212 = vpack.c.bf16 %v1176, %v1157
    %v1213 = vperm.slane %v165, 3
    %v1214 = vperm.slane %v166, 3
    %v1247 = vunpack.c.l.b16 %v1179
    %v1248 = vunpack.c.h.b16 %v1179
    %v1249 = vunpack.c.l.b16 %v1180
    %v1250 = vunpack.c.h.b16 %v1180
    %v1251 = vunpack.c.l.b16 %v1181
    %v1252 = vunpack.c.h.b16 %v1181
    %v1253 = vunpack.c.l.b16 %v1182
    %v1254 = vunpack.c.h.b16 %v1182
    %v1255 = vunpack.c.l.b16 %v1183
    %v1256 = vunpack.c.h.b16 %v1183
    %v1257 = vunpack.c.l.b16 %v1184
    %v1258 = vunpack.c.h.b16 %v1184
    %v1259 = vunpack.c.l.b16 %v1185
    %v1260 = vunpack.c.h.b16 %v1185
    %v1261 = vunpack.c.l.b16 %v1186
    %v1262 = vunpack.c.h.b16 %v1186
    %v1263 = vunpack.c.l.b16 %v1187
    %v1264 = vunpack.c.h.b16 %v1187
    %v1265 = vunpack.c.l.b16 %v1188
    %v1266 = vunpack.c.h.b16 %v1188
    %v1267 = vunpack.c.l.b16 %v1189
    %v1268 = vunpack.c.h.b16 %v1189
    %v1269 = vunpack.c.l.b16 %v1190
    %v1270 = vunpack.c.h.b16 %v1190
    %v1271 = vunpack.c.l.b16 %v1191
    %v1272 = vunpack.c.h.b16 %v1191
    %v1273 = vunpack.c.l.b16 %v1192
    %v1274 = vunpack.c.h.b16 %v1192
    %v1275 = vunpack.c.l.b16 %v1193
    %v1276 = vunpack.c.h.b16 %v1193
    %v1277 = vunpack.c.l.b16 %v1194
    %v1278 = vunpack.c.h.b16 %v1194
    %v1279 = vunpack.c.l.b16 %v1195
    %v1280 = vunpack.c.h.b16 %v1195
    %v1281 = vunpack.c.l.b16 %v1196
    %v1282 = vunpack.c.h.b16 %v1196
    %v1283 = vunpack.c.l.b16 %v1197
    %v1284 = vunpack.c.h.b16 %v1197
    %v1285 = vunpack.c.l.b16 %v1198
    %v1286 = vunpack.c.h.b16 %v1198
    %v1287 = vunpack.c.l.b16 %v1199
    %v1288 = vunpack.c.h.b16 %v1199
    %v1289 = vunpack.c.l.b16 %v1200
    %v1290 = vunpack.c.h.b16 %v1200
    %v1291 = vunpack.c.l.b16 %v1201
    %v1292 = vunpack.c.h.b16 %v1201
    %v1293 = vunpack.c.l.b16 %v1202
    %v1294 = vunpack.c.h.b16 %v1202
    %v1295 = vunpack.c.l.b16 %v1203
    %v1296 = vunpack.c.h.b16 %v1203
    %v1297 = vunpack.c.l.b16 %v1204
    %v1298 = vunpack.c.h.b16 %v1204
    %v1299 = vunpack.c.l.b16 %v1205
    %v1300 = vunpack.c.h.b16 %v1205
    %v1301 = vunpack.c.l.b16 %v1206
    %v1302 = vunpack.c.h.b16 %v1206
    %v1303 = vunpack.c.l.b16 %v1207
    %v1304 = vunpack.c.h.b16 %v1207
    %v1305 = vunpack.c.l.b16 %v1208
    %v1306 = vunpack.c.h.b16 %v1208
    %v1307 = vunpack.c.l.b16 %v1209
    %v1308 = vunpack.c.h.b16 %v1209
    %v1309 = vunpack.c.l.b16 %v1210
    %v1310 = vunpack.c.h.b16 %v1210
    %v1311 = vpack.c.b16 %v1249, %v1247
    %v1312 = vpack.c.b16 %v1250, %v1248
    %v1313 = vpack.c.b16 %v1253, %v1251
    %v1314 = vpack.c.b16 %v1254, %v1252
    %v1315 = vpack.c.b16 %v1257, %v1255
    %v1316 = vpack.c.b16 %v1258, %v1256
    %v1317 = vpack.c.b16 %v1261, %v1259
    %v1318 = vpack.c.b16 %v1262, %v1260
    %v1319 = vpack.c.b16 %v1265, %v1263
    %v1320 = vpack.c.b16 %v1266, %v1264
    %v1321 = vpack.c.b16 %v1269, %v1267
    %v1322 = vpack.c.b16 %v1270, %v1268
    %v1323 = vpack.c.b16 %v1273, %v1271
    %v1324 = vpack.c.b16 %v1274, %v1272
    %v1325 = vpack.c.b16 %v1277, %v1275
    %v1326 = vpack.c.b16 %v1278, %v1276
    %v1327 = vpack.c.b16 %v1281, %v1279
    %v1328 = vpack.c.b16 %v1282, %v1280
    %v1329 = vpack.c.b16 %v1285, %v1283
    %v1330 = vpack.c.b16 %v1286, %v1284
    %v1331 = vpack.c.b16 %v1289, %v1287
    %v1332 = vpack.c.b16 %v1290, %v1288
    %v1333 = vpack.c.b16 %v1293, %v1291
    %v1334 = vpack.c.b16 %v1294, %v1292
    %v1335 = vpack.c.b16 %v1297, %v1295
    %v1336 = vpack.c.b16 %v1298, %v1296
    %v1337 = vpack.c.b16 %v1301, %v1299
    %v1338 = vpack.c.b16 %v1302, %v1300
    %v1339 = vpack.c.b16 %v1305, %v1303
    %v1340 = vpack.c.b16 %v1306, %v1304
    %v1341 = vpack.c.b16 %v1309, %v1307
    %v1342 = vpack.c.b16 %v1310, %v1308
    %1375 = vmatpush.bf16.msra.mxu0 %v1325
    %1376 = vmatpush.bf16.msra.mxu0 %v1323
    %1377 = vmatpush.bf16.msra.mxu0 %v1321
    %1378 = vmatpush.bf16.msra.mxu0 %v1319
    %1379 = vmatpush.bf16.msra.mxu0 %v1317
    %1380 = vmatpush.bf16.msra.mxu0 %v1315
    %1381 = vmatpush.bf16.msra.mxu0 %v1313
    %1382 = vmatpush.bf16.msra.mxu0 %v1311
    %1383 = vmatmul.bf16.gmra.mxu0 %v1211
    %v1384 = vpop.f32.mrf.mxu0
    %v1385 = vadd.f32 %v1213, %v1384
    %v1386 = vpop.f32.mrf.mxu0
    %v1387 = vadd.f32 %v1213, %v1386
    %1388 = vdwg.mxu0
    %1389 = vmatpush.bf16.msra.mxu0 %v1341
    %1390 = vmatpush.bf16.msra.mxu0 %v1339
    %1391 = vmatpush.bf16.msra.mxu0 %v1337
    %1392 = vmatpush.bf16.msra.mxu0 %v1335
    %1393 = vmatpush.bf16.msra.mxu0 %v1333
    %1394 = vmatpush.bf16.msra.mxu0 %v1331
    %1395 = vmatpush.bf16.msra.mxu0 %v1329
    %1396 = vmatpush.bf16.msra.mxu0 %v1327
    %1397 = vmatmul.bf16.gmra.mxu0 %v1212
    %v1398 = vpop.f32.mrf.mxu0
    %v1399 = vadd.f32 %v1385, %v1398
    %v1400 = vpop.f32.mrf.mxu0
    %v1401 = vadd.f32 %v1387, %v1400
    %1402 = vdwg.mxu0
    %1403 = vmatpush.bf16.msra.mxu0 %v1326
    %1404 = vmatpush.bf16.msra.mxu0 %v1324
    %1405 = vmatpush.bf16.msra.mxu0 %v1322
    %1406 = vmatpush.bf16.msra.mxu0 %v1320
    %1407 = vmatpush.bf16.msra.mxu0 %v1318
    %1408 = vmatpush.bf16.msra.mxu0 %v1316
    %1409 = vmatpush.bf16.msra.mxu0 %v1314
    %1410 = vmatpush.bf16.msra.mxu0 %v1312
    %1411 = vmatmul.bf16.gmra.mxu0 %v1211
    %v1412 = vpop.f32.mrf.mxu0
    %v1413 = vadd.f32 %v1214, %v1412
    %v1414 = vpop.f32.mrf.mxu0
    %v1415 = vadd.f32 %v1214, %v1414
    %1416 = vdwg.mxu0
    %1417 = vmatpush.bf16.msra.mxu0 %v1342
    %1418 = vmatpush.bf16.msra.mxu0 %v1340
    %1419 = vmatpush.bf16.msra.mxu0 %v1338
    %1420 = vmatpush.bf16.msra.mxu0 %v1336
    %1421 = vmatpush.bf16.msra.mxu0 %v1334
    %1422 = vmatpush.bf16.msra.mxu0 %v1332
    %1423 = vmatpush.bf16.msra.mxu0 %v1330
    %1424 = vmatpush.bf16.msra.mxu0 %v1328
    %1425 = vmatmul.bf16.gmra.mxu0 %v1212
    %v1426 = vpop.f32.mrf.mxu0
    %v1427 = vadd.f32 %v1413, %v1426
    %v1428 = vpop.f32.mrf.mxu0
    %v1429 = vadd.f32 %v1415, %v1428
    %1430 = vdwg.mxu0
    %v1431 = vadd.f32 %v147, %v1399
    %v1432 = vadd.f32 %v161, %v1427
    %v1433 = vadd.f32 %v149, %v1401
    %v1434 = vadd.f32 %v163, %v1429
    %v1435 = vadd.f32 %v1431, %v1432
    %1436 = vadd.xlane.f32.xlu0 %v1435
    %v1437 = vpop.xlane.xlu0 %1436
    %v1438 = vadd.f32 %v1433, %v1434
    %1439 = vadd.xlane.f32.xlu0 %v1438
    %v1440 = vpop.xlane.xlu0 %1439
    %v1441 = vrcp.pop 256.0
    %v1442 = vmul.f32 256.0, %v1441
    %v1443 = vsub.f32 1.0, %v1442
    %v1444 = vmul.f32 %v1441, %v1443
    %v1445 = vadd.f32 %v1441, %v1444
    %vm1446 = vweird.f32 %v1441
    %v1447 = vsel %vm1446, %v1441, %v1445
    %v1448 = vmul.f32 %v1437, %v1447
    %v1449 = vmul.f32 %v1440, %v1447
    %v1450 = vsub.f32 %v1431, %v1448
    %v1451 = vsub.f32 %v1432, %v1448
    %v1452 = vsub.f32 %v1433, %v1449
    %v1453 = vsub.f32 %v1434, %v1449
    %v1454 = vmul.f32 %v1450, %v1450
    %v1455 = vmul.f32 %v1451, %v1451
    %v1456 = vmul.f32 %v1452, %v1452
    %v1457 = vmul.f32 %v1453, %v1453
    %v1458 = vadd.f32 %v1454, %v1455
    %1459 = vadd.xlane.f32.xlu0 %v1458
    %v1460 = vpop.xlane.xlu0 %1459
    %v1461 = vadd.f32 %v1456, %v1457
    %1462 = vadd.xlane.f32.xlu0 %v1461
    %v1463 = vpop.xlane.xlu0 %1462
    %v1464 = vmul.f32 %v1460, %v1447
    %v1465 = vmul.f32 %v1463, %v1447
    %v1466 = vadd.f32 %v1464, 1e-05
    %v1467 = vadd.f32 %v1465, 1e-05
    %v1468 = vrsqrt.pop %v1466
    %v1469 = vmul.f32 %v1468, %v1466
    %v1470 = vmul.f32 %v1469, %v1468
    %v1471 = vmul.f32 0.5, %v1470
    %v1472 = vsub.f32 1.5, %v1471
    %v1473 = vmul.f32 %v1468, %v1472
    %vm1474 = vweird.f32 %v1466
    %vm1475 = vweird.f32 %v1468
    %vm1476 = vmor %vm1474, %vm1475
    %v1477 = vsel %vm1476, %v1468, %v1473
    %v1478 = vrsqrt.pop %v1467
    %v1479 = vmul.f32 %v1478, %v1467
    %v1480 = vmul.f32 %v1479, %v1478
    %v1481 = vmul.f32 0.5, %v1480
    %v1482 = vsub.f32 1.5, %v1481
    %v1483 = vmul.f32 %v1478, %v1482
    %vm1484 = vweird.f32 %v1467
    %vm1485 = vweird.f32 %v1478
    %vm1486 = vmor %vm1484, %vm1485
    %v1487 = vsel %vm1486, %v1478, %v1483
    %v1488 = vmul.f32 %v1450, %v1477
    %v1489 = vmul.f32 %v1451, %v1477
    %v1490 = vmul.f32 %v1452, %v1487
    %v1491 = vmul.f32 %v1453, %v1487
    %v1492 = vperm.slane %v165, 4
    %v1493 = vperm.slane %v166, 4
    %v1494 = vmul.f32 %v1488, %v1492
    %v1495 = vmul.f32 %v1489, %v1493
    %v1496 = vmul.f32 %v1490, %v1492
    %v1497 = vmul.f32 %v1491, %v1493
    %v1498 = vperm.slane %v165, 5
    %v1499 = vperm.slane %v166, 5
    %v1500 = vadd.f32 %v1494, %v1498
    %v1501 = vadd.f32 %v1495, %v1499
    %v1502 = vadd.f32 %v1496, %v1498
    %v1503 = vadd.f32 %v1497, %v1499
    %v1504 = vld [vmem:[#allocation6] sm:$0xff]
    %v1505 = vld [vmem:[#allocation6 + $0x8] sm:$0xff]
    %v1506 = vld [vmem:[#allocation6 + $0x10] sm:$0xff]
    %v1507 = vld [vmem:[#allocation6 + $0x18] sm:$0xff]
    %v1508 = vld [vmem:[#allocation6 + $0x20] sm:$0xff]
    %v1509 = vld [vmem:[#allocation6 + $0x28] sm:$0xff]
    %v1510 = vld [vmem:[#allocation6 + $0x30] sm:$0xff]
    %v1511 = vld [vmem:[#allocation6 + $0x38] sm:$0xff]
    %v1512 = vld [vmem:[#allocation6 + $0x40] sm:$0xff]
    %v1513 = vld [vmem:[#allocation6 + $0x48] sm:$0xff]
    %v1514 = vld [vmem:[#allocation6 + $0x50] sm:$0xff]
    %v1515 = vld [vmem:[#allocation6 + $0x58] sm:$0xff]
    %v1516 = vld [vmem:[#allocation6 + $0x60] sm:$0xff]
    %v1517 = vld [vmem:[#allocation6 + $0x68] sm:$0xff]
    %v1518 = vld [vmem:[#allocation6 + $0x70] sm:$0xff]
    %v1519 = vld [vmem:[#allocation6 + $0x78] sm:$0xff]
    %v1520 = vld [vmem:[#allocation6 + $0x80] sm:$0xff]
    %v1521 = vld [vmem:[#allocation6 + $0x88] sm:$0xff]
    %v1522 = vld [vmem:[#allocation6 + $0x90] sm:$0xff]
    %v1523 = vld [vmem:[#allocation6 + $0x98] sm:$0xff]
    %v1524 = vld [vmem:[#allocation6 + $0xa0] sm:$0xff]
    %v1525 = vld [vmem:[#allocation6 + $0xa8] sm:$0xff]
    %v1526 = vld [vmem:[#allocation6 + $0xb0] sm:$0xff]
    %v1527 = vld [vmem:[#allocation6 + $0xb8] sm:$0xff]
    %v1528 = vld [vmem:[#allocation6 + $0xc0] sm:$0xff]
    %v1529 = vld [vmem:[#allocation6 + $0xc8] sm:$0xff]
    %v1530 = vld [vmem:[#allocation6 + $0xd0] sm:$0xff]
    %v1531 = vld [vmem:[#allocation6 + $0xd8] sm:$0xff]
    %v1532 = vld [vmem:[#allocation6 + $0xe0] sm:$0xff]
    %v1533 = vld [vmem:[#allocation6 + $0xe8] sm:$0xff]
    %v1534 = vld [vmem:[#allocation6 + $0xf0] sm:$0xff]
    %v1535 = vld [vmem:[#allocation6 + $0xf8] sm:$0xff]
    %v1536 = vpack.c.bf16 %v1502, %v1500
    %v1537 = vpack.c.bf16 %v1503, %v1501
    %v1538 = vperm.slane %v165, 6
    %v1539 = vperm.slane %v166, 6
    %v1572 = vunpack.c.l.b16 %v1504
    %v1573 = vunpack.c.h.b16 %v1504
    %v1574 = vunpack.c.l.b16 %v1505
    %v1575 = vunpack.c.h.b16 %v1505
    %v1576 = vunpack.c.l.b16 %v1506
    %v1577 = vunpack.c.h.b16 %v1506
    %v1578 = vunpack.c.l.b16 %v1507
    %v1579 = vunpack.c.h.b16 %v1507
    %v1580 = vunpack.c.l.b16 %v1508
    %v1581 = vunpack.c.h.b16 %v1508
    %v1582 = vunpack.c.l.b16 %v1509
    %v1583 = vunpack.c.h.b16 %v1509
    %v1584 = vunpack.c.l.b16 %v1510
    %v1585 = vunpack.c.h.b16 %v1510
    %v1586 = vunpack.c.l.b16 %v1511
    %v1587 = vunpack.c.h.b16 %v1511
    %v1588 = vunpack.c.l.b16 %v1512
    %v1589 = vunpack.c.h.b16 %v1512
    %v1590 = vunpack.c.l.b16 %v1513
    %v1591 = vunpack.c.h.b16 %v1513
    %v1592 = vunpack.c.l.b16 %v1514
    %v1593 = vunpack.c.h.b16 %v1514
    %v1594 = vunpack.c.l.b16 %v1515
    %v1595 = vunpack.c.h.b16 %v1515
    %v1596 = vunpack.c.l.b16 %v1516
    %v1597 = vunpack.c.h.b16 %v1516
    %v1598 = vunpack.c.l.b16 %v1517
    %v1599 = vunpack.c.h.b16 %v1517
    %v1600 = vunpack.c.l.b16 %v1518
    %v1601 = vunpack.c.h.b16 %v1518
    %v1602 = vunpack.c.l.b16 %v1519
    %v1603 = vunpack.c.h.b16 %v1519
    %v1604 = vunpack.c.l.b16 %v1520
    %v1605 = vunpack.c.h.b16 %v1520
    %v1606 = vunpack.c.l.b16 %v1521
    %v1607 = vunpack.c.h.b16 %v1521
    %v1608 = vunpack.c.l.b16 %v1522
    %v1609 = vunpack.c.h.b16 %v1522
    %v1610 = vunpack.c.l.b16 %v1523
    %v1611 = vunpack.c.h.b16 %v1523
    %v1612 = vunpack.c.l.b16 %v1524
    %v1613 = vunpack.c.h.b16 %v1524
    %v1614 = vunpack.c.l.b16 %v1525
    %v1615 = vunpack.c.h.b16 %v1525
    %v1616 = vunpack.c.l.b16 %v1526
    %v1617 = vunpack.c.h.b16 %v1526
    %v1618 = vunpack.c.l.b16 %v1527
    %v1619 = vunpack.c.h.b16 %v1527
    %v1620 = vunpack.c.l.b16 %v1528
    %v1621 = vunpack.c.h.b16 %v1528
    %v1622 = vunpack.c.l.b16 %v1529
    %v1623 = vunpack.c.h.b16 %v1529
    %v1624 = vunpack.c.l.b16 %v1530
    %v1625 = vunpack.c.h.b16 %v1530
    %v1626 = vunpack.c.l.b16 %v1531
    %v1627 = vunpack.c.h.b16 %v1531
    %v1628 = vunpack.c.l.b16 %v1532
    %v1629 = vunpack.c.h.b16 %v1532
    %v1630 = vunpack.c.l.b16 %v1533
    %v1631 = vunpack.c.h.b16 %v1533
    %v1632 = vunpack.c.l.b16 %v1534
    %v1633 = vunpack.c.h.b16 %v1534
    %v1634 = vunpack.c.l.b16 %v1535
    %v1635 = vunpack.c.h.b16 %v1535
    %v1636 = vpack.c.b16 %v1574, %v1572
    %v1637 = vpack.c.b16 %v1575, %v1573
    %v1638 = vpack.c.b16 %v1578, %v1576
    %v1639 = vpack.c.b16 %v1579, %v1577
    %v1640 = vpack.c.b16 %v1582, %v1580
    %v1641 = vpack.c.b16 %v1583, %v1581
    %v1642 = vpack.c.b16 %v1586, %v1584
    %v1643 = vpack.c.b16 %v1587, %v1585
    %v1644 = vpack.c.b16 %v1590, %v1588
    %v1645 = vpack.c.b16 %v1591, %v1589
    %v1646 = vpack.c.b16 %v1594, %v1592
    %v1647 = vpack.c.b16 %v1595, %v1593
    %v1648 = vpack.c.b16 %v1598, %v1596
    %v1649 = vpack.c.b16 %v1599, %v1597
    %v1650 = vpack.c.b16 %v1602, %v1600
    %v1651 = vpack.c.b16 %v1603, %v1601
    %v1652 = vpack.c.b16 %v1606, %v1604
    %v1653 = vpack.c.b16 %v1607, %v1605
    %v1654 = vpack.c.b16 %v1610, %v1608
    %v1655 = vpack.c.b16 %v1611, %v1609
    %v1656 = vpack.c.b16 %v1614, %v1612
    %v1657 = vpack.c.b16 %v1615, %v1613
    %v1658 = vpack.c.b16 %v1618, %v1616
    %v1659 = vpack.c.b16 %v1619, %v1617
    %v1660 = vpack.c.b16 %v1622, %v1620
    %v1661 = vpack.c.b16 %v1623, %v1621
    %v1662 = vpack.c.b16 %v1626, %v1624
    %v1663 = vpack.c.b16 %v1627, %v1625
    %v1664 = vpack.c.b16 %v1630, %v1628
    %v1665 = vpack.c.b16 %v1631, %v1629
    %v1666 = vpack.c.b16 %v1634, %v1632
    %v1667 = vpack.c.b16 %v1635, %v1633
    %1700 = vmatpush.bf16.msra.mxu0 %v1650
    %1701 = vmatpush.bf16.msra.mxu0 %v1648
    %1702 = vmatpush.bf16.msra.mxu0 %v1646
    %1703 = vmatpush.bf16.msra.mxu0 %v1644
    %1704 = vmatpush.bf16.msra.mxu0 %v1642
    %1705 = vmatpush.bf16.msra.mxu0 %v1640
    %1706 = vmatpush.bf16.msra.mxu0 %v1638
    %1707 = vmatpush.bf16.msra.mxu0 %v1636
    %1708 = vmatmul.bf16.gmra.mxu0 %v1536
    %v1709 = vpop.f32.mrf.mxu0
    %v1710 = vadd.f32 %v1538, %v1709
    %v1711 = vpop.f32.mrf.mxu0
    %v1712 = vadd.f32 %v1538, %v1711
    %1713 = vdwg.mxu0
    %1714 = vmatpush.bf16.msra.mxu0 %v1666
    %1715 = vmatpush.bf16.msra.mxu0 %v1664
    %1716 = vmatpush.bf16.msra.mxu0 %v1662
    %1717 = vmatpush.bf16.msra.mxu0 %v1660
    %1718 = vmatpush.bf16.msra.mxu0 %v1658
    %1719 = vmatpush.bf16.msra.mxu0 %v1656
    %1720 = vmatpush.bf16.msra.mxu0 %v1654
    %1721 = vmatpush.bf16.msra.mxu0 %v1652
    %1722 = vmatmul.bf16.gmra.mxu0 %v1537
    %v1723 = vpop.f32.mrf.mxu0
    %v1724 = vadd.f32 %v1710, %v1723
    %v1725 = vpop.f32.mrf.mxu0
    %v1726 = vadd.f32 %v1712, %v1725
    %1727 = vdwg.mxu0
    %1728 = vmatpush.bf16.msra.mxu0 %v1651
    %1729 = vmatpush.bf16.msra.mxu0 %v1649
    %1730 = vmatpush.bf16.msra.mxu0 %v1647
    %1731 = vmatpush.bf16.msra.mxu0 %v1645
    %1732 = vmatpush.bf16.msra.mxu0 %v1643
    %1733 = vmatpush.bf16.msra.mxu0 %v1641
    %1734 = vmatpush.bf16.msra.mxu0 %v1639
    %1735 = vmatpush.bf16.msra.mxu0 %v1637
    %1736 = vmatmul.bf16.gmra.mxu0 %v1536
    %v1737 = vpop.f32.mrf.mxu0
    %v1738 = vadd.f32 %v1539, %v1737
    %v1739 = vpop.f32.mrf.mxu0
    %v1740 = vadd.f32 %v1539, %v1739
    %1741 = vdwg.mxu0
    %1742 = vmatpush.bf16.msra.mxu0 %v1667
    %1743 = vmatpush.bf16.msra.mxu0 %v1665
    %1744 = vmatpush.bf16.msra.mxu0 %v1663
    %1745 = vmatpush.bf16.msra.mxu0 %v1661
    %1746 = vmatpush.bf16.msra.mxu0 %v1659
    %1747 = vmatpush.bf16.msra.mxu0 %v1657
    %1748 = vmatpush.bf16.msra.mxu0 %v1655
    %1749 = vmatpush.bf16.msra.mxu0 %v1653
    %1750 = vmatmul.bf16.gmra.mxu0 %v1537
    %v1751 = vpop.f32.mrf.mxu0
    %v1752 = vadd.f32 %v1738, %v1751
    %v1753 = vpop.f32.mrf.mxu0
    %v1754 = vadd.f32 %v1740, %v1753
    %1755 = vdwg.mxu0
    %v1756 = vmax.f32 %v1724, 0.0
    %v1757 = vmax.f32 %v1752, 0.0
    %v1758 = vmax.f32 %v1726, 0.0
    %v1759 = vmax.f32 %v1754, 0.0
    %v1760 = vld [vmem:[#allocation7] sm:$0xff]
    %v1761 = vld [vmem:[#allocation7 + $0x8] sm:$0xff]
    %v1762 = vld [vmem:[#allocation7 + $0x10] sm:$0xff]
    %v1763 = vld [vmem:[#allocation7 + $0x18] sm:$0xff]
    %v1764 = vld [vmem:[#allocation7 + $0x20] sm:$0xff]
    %v1765 = vld [vmem:[#allocation7 + $0x28] sm:$0xff]
    %v1766 = vld [vmem:[#allocation7 + $0x30] sm:$0xff]
    %v1767 = vld [vmem:[#allocation7 + $0x38] sm:$0xff]
    %v1768 = vld [vmem:[#allocation7 + $0x40] sm:$0xff]
    %v1769 = vld [vmem:[#allocation7 + $0x48] sm:$0xff]
    %v1770 = vld [vmem:[#allocation7 + $0x50] sm:$0xff]
    %v1771 = vld [vmem:[#allocation7 + $0x58] sm:$0xff]
    %v1772 = vld [vmem:[#allocation7 + $0x60] sm:$0xff]
    %v1773 = vld [vmem:[#allocation7 + $0x68] sm:$0xff]
    %v1774 = vld [vmem:[#allocation7 + $0x70] sm:$0xff]
    %v1775 = vld [vmem:[#allocation7 + $0x78] sm:$0xff]
    %v1776 = vld [vmem:[#allocation7 + $0x80] sm:$0xff]
    %v1777 = vld [vmem:[#allocation7 + $0x88] sm:$0xff]
    %v1778 = vld [vmem:[#allocation7 + $0x90] sm:$0xff]
    %v1779 = vld [vmem:[#allocation7 + $0x98] sm:$0xff]
    %v1780 = vld [vmem:[#allocation7 + $0xa0] sm:$0xff]
    %v1781 = vld [vmem:[#allocation7 + $0xa8] sm:$0xff]
    %v1782 = vld [vmem:[#allocation7 + $0xb0] sm:$0xff]
    %v1783 = vld [vmem:[#allocation7 + $0xb8] sm:$0xff]
    %v1784 = vld [vmem:[#allocation7 + $0xc0] sm:$0xff]
    %v1785 = vld [vmem:[#allocation7 + $0xc8] sm:$0xff]
    %v1786 = vld [vmem:[#allocation7 + $0xd0] sm:$0xff]
    %v1787 = vld [vmem:[#allocation7 + $0xd8] sm:$0xff]
    %v1788 = vld [vmem:[#allocation7 + $0xe0] sm:$0xff]
    %v1789 = vld [vmem:[#allocation7 + $0xe8] sm:$0xff]
    %v1790 = vld [vmem:[#allocation7 + $0xf0] sm:$0xff]
    %v1791 = vld [vmem:[#allocation7 + $0xf8] sm:$0xff]
    %v1792 = vpack.c.bf16 %v1758, %v1756
    %v1793 = vpack.c.bf16 %v1759, %v1757
    %v1794 = vperm.slane %v165, 7
    %v1795 = vperm.slane %v166, 7
    %v1828 = vunpack.c.l.b16 %v1760
    %v1829 = vunpack.c.h.b16 %v1760
    %v1830 = vunpack.c.l.b16 %v1761
    %v1831 = vunpack.c.h.b16 %v1761
    %v1832 = vunpack.c.l.b16 %v1762
    %v1833 = vunpack.c.h.b16 %v1762
    %v1834 = vunpack.c.l.b16 %v1763
    %v1835 = vunpack.c.h.b16 %v1763
    %v1836 = vunpack.c.l.b16 %v1764
    %v1837 = vunpack.c.h.b16 %v1764
    %v1838 = vunpack.c.l.b16 %v1765
    %v1839 = vunpack.c.h.b16 %v1765
    %v1840 = vunpack.c.l.b16 %v1766
    %v1841 = vunpack.c.h.b16 %v1766
    %v1842 = vunpack.c.l.b16 %v1767
    %v1843 = vunpack.c.h.b16 %v1767
    %v1844 = vunpack.c.l.b16 %v1768
    %v1845 = vunpack.c.h.b16 %v1768
    %v1846 = vunpack.c.l.b16 %v1769
    %v1847 = vunpack.c.h.b16 %v1769
    %v1848 = vunpack.c.l.b16 %v1770
    %v1849 = vunpack.c.h.b16 %v1770
    %v1850 = vunpack.c.l.b16 %v1771
    %v1851 = vunpack.c.h.b16 %v1771
    %v1852 = vunpack.c.l.b16 %v1772
    %v1853 = vunpack.c.h.b16 %v1772
    %v1854 = vunpack.c.l.b16 %v1773
    %v1855 = vunpack.c.h.b16 %v1773
    %v1856 = vunpack.c.l.b16 %v1774
    %v1857 = vunpack.c.h.b16 %v1774
    %v1858 = vunpack.c.l.b16 %v1775
    %v1859 = vunpack.c.h.b16 %v1775
    %v1860 = vunpack.c.l.b16 %v1776
    %v1861 = vunpack.c.h.b16 %v1776
    %v1862 = vunpack.c.l.b16 %v1777
    %v1863 = vunpack.c.h.b16 %v1777
    %v1864 = vunpack.c.l.b16 %v1778
    %v1865 = vunpack.c.h.b16 %v1778
    %v1866 = vunpack.c.l.b16 %v1779
    %v1867 = vunpack.c.h.b16 %v1779
    %v1868 = vunpack.c.l.b16 %v1780
    %v1869 = vunpack.c.h.b16 %v1780
    %v1870 = vunpack.c.l.b16 %v1781
    %v1871 = vunpack.c.h.b16 %v1781
    %v1872 = vunpack.c.l.b16 %v1782
    %v1873 = vunpack.c.h.b16 %v1782
    %v1874 = vunpack.c.l.b16 %v1783
    %v1875 = vunpack.c.h.b16 %v1783
    %v1876 = vunpack.c.l.b16 %v1784
    %v1877 = vunpack.c.h.b16 %v1784
    %v1878 = vunpack.c.l.b16 %v1785
    %v1879 = vunpack.c.h.b16 %v1785
    %v1880 = vunpack.c.l.b16 %v1786
    %v1881 = vunpack.c.h.b16 %v1786
    %v1882 = vunpack.c.l.b16 %v1787
    %v1883 = vunpack.c.h.b16 %v1787
    %v1884 = vunpack.c.l.b16 %v1788
    %v1885 = vunpack.c.h.b16 %v1788
    %v1886 = vunpack.c.l.b16 %v1789
    %v1887 = vunpack.c.h.b16 %v1789
    %v1888 = vunpack.c.l.b16 %v1790
    %v1889 = vunpack.c.h.b16 %v1790
    %v1890 = vunpack.c.l.b16 %v1791
    %v1891 = vunpack.c.h.b16 %v1791
    %v1892 = vpack.c.b16 %v1830, %v1828
    %v1893 = vpack.c.b16 %v1831, %v1829
    %v1894 = vpack.c.b16 %v1834, %v1832
    %v1895 = vpack.c.b16 %v1835, %v1833
    %v1896 = vpack.c.b16 %v1838, %v1836
    %v1897 = vpack.c.b16 %v1839, %v1837
    %v1898 = vpack.c.b16 %v1842, %v1840
    %v1899 = vpack.c.b16 %v1843, %v1841
    %v1900 = vpack.c.b16 %v1846, %v1844
    %v1901 = vpack.c.b16 %v1847, %v1845
    %v1902 = vpack.c.b16 %v1850, %v1848
    %v1903 = vpack.c.b16 %v1851, %v1849
    %v1904 = vpack.c.b16 %v1854, %v1852
    %v1905 = vpack.c.b16 %v1855, %v1853
    %v1906 = vpack.c.b16 %v1858, %v1856
    %v1907 = vpack.c.b16 %v1859, %v1857
    %v1908 = vpack.c.b16 %v1862, %v1860
    %v1909 = vpack.c.b16 %v1863, %v1861
    %v1910 = vpack.c.b16 %v1866, %v1864
    %v1911 = vpack.c.b16 %v1867, %v1865
    %v1912 = vpack.c.b16 %v1870, %v1868
    %v1913 = vpack.c.b16 %v1871, %v1869
    %v1914 = vpack.c.b16 %v1874, %v1872
    %v1915 = vpack.c.b16 %v1875, %v1873
    %v1916 = vpack.c.b16 %v1878, %v1876
    %v1917 = vpack.c.b16 %v1879, %v1877
    %v1918 = vpack.c.b16 %v1882, %v1880
    %v1919 = vpack.c.b16 %v1883, %v1881
    %v1920 = vpack.c.b16 %v1886, %v1884
    %v1921 = vpack.c.b16 %v1887, %v1885
    %v1922 = vpack.c.b16 %v1890, %v1888
    %v1923 = vpack.c.b16 %v1891, %v1889
    %1956 = vmatpush.bf16.msra.mxu0 %v1906
    %1957 = vmatpush.bf16.msra.mxu0 %v1904
    %1958 = vmatpush.bf16.msra.mxu0 %v1902
    %1959 = vmatpush.bf16.msra.mxu0 %v1900
    %1960 = vmatpush.bf16.msra.mxu0 %v1898
    %1961 = vmatpush.bf16.msra.mxu0 %v1896
    %1962 = vmatpush.bf16.msra.mxu0 %v1894
    %1963 = vmatpush.bf16.msra.mxu0 %v1892
    %1964 = vmatmul.bf16.gmra.mxu0 %v1792
    %v1965 = vpop.f32.mrf.mxu0
    %v1966 = vadd.f32 %v1794, %v1965
    %v1967 = vpop.f32.mrf.mxu0
    %v1968 = vadd.f32 %v1794, %v1967
    %1969 = vdwg.mxu0
    %1970 = vmatpush.bf16.msra.mxu0 %v1922
    %1971 = vmatpush.bf16.msra.mxu0 %v1920
    %1972 = vmatpush.bf16.msra.mxu0 %v1918
    %1973 = vmatpush.bf16.msra.mxu0 %v1916
    %1974 = vmatpush.bf16.msra.mxu0 %v1914
    %1975 = vmatpush.bf16.msra.mxu0 %v1912
    %1976 = vmatpush.bf16.msra.mxu0 %v1910
    %1977 = vmatpush.bf16.msra.mxu0 %v1908
    %1978 = vmatmul.bf16.gmra.mxu0 %v1793
    %v1979 = vpop.f32.mrf.mxu0
    %v1980 = vadd.f32 %v1966, %v1979
    %v1981 = vpop.f32.mrf.mxu0
    %v1982 = vadd.f32 %v1968, %v1981
    %1983 = vdwg.mxu0
    %1984 = vmatpush.bf16.msra.mxu0 %v1907
    %1985 = vmatpush.bf16.msra.mxu0 %v1905
    %1986 = vmatpush.bf16.msra.mxu0 %v1903
    %1987 = vmatpush.bf16.msra.mxu0 %v1901
    %1988 = vmatpush.bf16.msra.mxu0 %v1899
    %1989 = vmatpush.bf16.msra.mxu0 %v1897
    %1990 = vmatpush.bf16.msra.mxu0 %v1895
    %1991 = vmatpush.bf16.msra.mxu0 %v1893
    %1992 = vmatmul.bf16.gmra.mxu0 %v1792
    %v1993 = vpop.f32.mrf.mxu0
    %v1994 = vadd.f32 %v1795, %v1993
    %v1995 = vpop.f32.mrf.mxu0
    %v1996 = vadd.f32 %v1795, %v1995
    %1997 = vdwg.mxu0
    %1998 = vmatpush.bf16.msra.mxu0 %v1923
    %1999 = vmatpush.bf16.msra.mxu0 %v1921
    %2000 = vmatpush.bf16.msra.mxu0 %v1919
    %2001 = vmatpush.bf16.msra.mxu0 %v1917
    %2002 = vmatpush.bf16.msra.mxu0 %v1915
    %2003 = vmatpush.bf16.msra.mxu0 %v1913
    %2004 = vmatpush.bf16.msra.mxu0 %v1911
    %2005 = vmatpush.bf16.msra.mxu0 %v1909
    %2006 = vmatmul.bf16.gmra.mxu0 %v1793
    %v2007 = vpop.f32.mrf.mxu0
    %v2008 = vadd.f32 %v1994, %v2007
    %v2009 = vpop.f32.mrf.mxu0
    %v2010 = vadd.f32 %v1996, %v2009
    %2011 = vdwg.mxu0
    %v2012 = vadd.f32 %v1500, %v1980
    %v2013 = vadd.f32 %v1501, %v2008
    %v2014 = vadd.f32 %v1502, %v1982
    %v2015 = vadd.f32 %v1503, %v2010
    %v2016 = vadd.f32 %v2012, %v2013
    %2017 = vadd.xlane.f32.xlu0 %v2016
    %v2018 = vpop.xlane.xlu0 %2017
    %v2019 = vadd.f32 %v2014, %v2015
    %2020 = vadd.xlane.f32.xlu0 %v2019
    %v2021 = vpop.xlane.xlu0 %2020
    %v2022 = vmul.f32 %v2018, %v1447
    %v2023 = vmul.f32 %v2021, %v1447
    %v2024 = vsub.f32 %v2012, %v2022
    %v2025 = vsub.f32 %v2013, %v2022
    %v2026 = vsub.f32 %v2014, %v2023
    %v2027 = vsub.f32 %v2015, %v2023
    %v2028 = vmul.f32 %v2024, %v2024
    %v2029 = vmul.f32 %v2025, %v2025
    %v2030 = vmul.f32 %v2026, %v2026
    %v2031 = vmul.f32 %v2027, %v2027
    %v2032 = vadd.f32 %v2028, %v2029
    %2033 = vadd.xlane.f32.xlu0 %v2032
    %v2034 = vpop.xlane.xlu0 %2033
    %v2035 = vadd.f32 %v2030, %v2031
    %2036 = vadd.xlane.f32.xlu0 %v2035
    %v2037 = vpop.xlane.xlu0 %2036
    %v2038 = vmul.f32 %v2034, %v1447
    %v2039 = vmul.f32 %v2037, %v1447
    %v2040 = vadd.f32 %v2038, 1e-05
    %v2041 = vadd.f32 %v2039, 1e-05
    %v2042 = vrsqrt.pop %v2040
    %v2043 = vmul.f32 %v2042, %v2040
    %v2044 = vmul.f32 %v2043, %v2042
    %v2045 = vmul.f32 0.5, %v2044
    %v2046 = vsub.f32 1.5, %v2045
    %v2047 = vmul.f32 %v2042, %v2046
    %vm2048 = vweird.f32 %v2040
    %vm2049 = vweird.f32 %v2042
    %vm2050 = vmor %vm2048, %vm2049
    %v2051 = vsel %vm2050, %v2042, %v2047
    %v2052 = vrsqrt.pop %v2041
    %v2053 = vmul.f32 %v2052, %v2041
    %v2054 = vmul.f32 %v2053, %v2052
    %v2055 = vmul.f32 0.5, %v2054
    %v2056 = vsub.f32 1.5, %v2055
    %v2057 = vmul.f32 %v2052, %v2056
    %vm2058 = vweird.f32 %v2041
    %vm2059 = vweird.f32 %v2052
    %vm2060 = vmor %vm2058, %vm2059
    %v2061 = vsel %vm2060, %v2052, %v2057
    %v2062 = vmul.f32 %v2024, %v2051
    %v2063 = vmul.f32 %v2025, %v2051
    %v2064 = vmul.f32 %v2026, %v2061
    %v2065 = vmul.f32 %v2027, %v2061
    %v2066 = vperm.slane %v167, 0
    %v2067 = vperm.slane %v168, 0
    %v2068 = vmul.f32 %v2062, %v2066
    %v2069 = vmul.f32 %v2063, %v2067
    %v2070 = vmul.f32 %v2064, %v2066
    %v2071 = vmul.f32 %v2065, %v2067
    %v2072 = vperm.slane %v167, 1
    %v2073 = vperm.slane %v168, 1
    %v2074 = vadd.f32 %v2068, %v2072
    %v2075 = vadd.f32 %v2069, %v2073
    %v2076 = vadd.f32 %v2070, %v2072
    %v2077 = vadd.f32 %v2071, %v2073
    %s2078 = scalar_lea.vmem %s7, 32
    %v2079 = vld [vmem:[%s2078] sm:$0xff]
    %v2080 = vld [vmem:[%s2078 + $0x8] sm:$0xff]
    %v2081 = vld [vmem:[%s2078 + $0x10] sm:$0x3]
    %v2082 = vld [vmem:[%s2078 + $0x18] sm:$0x3]
    %s2083 = scalar_lea.vmem [#allocation2], 768
    %v2084 = vld [vmem:[%s2083] sm:$0xff]
    %v2085 = vld [vmem:[%s2083 + $0x8] sm:$0xff]
    %v2086 = vld [vmem:[%s2083 + $0x10] sm:$0xff]
    %v2087 = vld [vmem:[%s2083 + $0x18] sm:$0xff]
    %v2088 = vld [vmem:[%s2083 + $0x20] sm:$0xff]
    %v2089 = vld [vmem:[%s2083 + $0x28] sm:$0xff]
    %v2090 = vld [vmem:[%s2083 + $0x30] sm:$0xff]
    %v2091 = vld [vmem:[%s2083 + $0x38] sm:$0xff]
    %v2092 = vld [vmem:[%s2083 + $0x40] sm:$0xff]
    %v2093 = vld [vmem:[%s2083 + $0x48] sm:$0xff]
    %v2094 = vld [vmem:[%s2083 + $0x50] sm:$0xff]
    %v2095 = vld [vmem:[%s2083 + $0x58] sm:$0xff]
    %v2096 = vld [vmem:[%s2083 + $0x60] sm:$0xff]
    %v2097 = vld [vmem:[%s2083 + $0x68] sm:$0xff]
    %v2098 = vld [vmem:[%s2083 + $0x70] sm:$0xff]
    %v2099 = vld [vmem:[%s2083 + $0x78] sm:$0xff]
    %v2100 = vld [vmem:[%s2083 + $0x80] sm:$0xff]
    %v2101 = vld [vmem:[%s2083 + $0x88] sm:$0xff]
    %v2102 = vld [vmem:[%s2083 + $0x90] sm:$0xff]
    %v2103 = vld [vmem:[%s2083 + $0x98] sm:$0xff]
    %v2104 = vld [vmem:[%s2083 + $0xa0] sm:$0xff]
    %v2105 = vld [vmem:[%s2083 + $0xa8] sm:$0xff]
    %v2106 = vld [vmem:[%s2083 + $0xb0] sm:$0xff]
    %v2107 = vld [vmem:[%s2083 + $0xb8] sm:$0xff]
    %v2108 = vld [vmem:[%s2083 + $0xc0] sm:$0xff]
    %v2109 = vld [vmem:[%s2083 + $0xc8] sm:$0xff]
    %v2110 = vld [vmem:[%s2083 + $0xd0] sm:$0xff]
    %v2111 = vld [vmem:[%s2083 + $0xd8] sm:$0xff]
    %v2112 = vld [vmem:[%s2083 + $0xe0] sm:$0xff]
    %v2113 = vld [vmem:[%s2083 + $0xe8] sm:$0xff]
    %v2114 = vld [vmem:[%s2083 + $0xf0] sm:$0xff]
    %v2115 = vld [vmem:[%s2083 + $0xf8] sm:$0xff]
    %v2116 = vld [vmem:[%s2083 + $0x100] sm:$0xff]
    %v2117 = vld [vmem:[%s2083 + $0x108] sm:$0xff]
    %v2118 = vld [vmem:[%s2083 + $0x110] sm:$0xff]
    %v2119 = vld [vmem:[%s2083 + $0x118] sm:$0xff]
    %v2120 = vld [vmem:[%s2083 + $0x120] sm:$0xff]
    %v2121 = vld [vmem:[%s2083 + $0x128] sm:$0xff]
    %v2122 = vld [vmem:[%s2083 + $0x130] sm:$0xff]
    %v2123 = vld [vmem:[%s2083 + $0x138] sm:$0xff]
    %v2124 = vld [vmem:[%s2083 + $0x140] sm:$0xff]
    %v2125 = vld [vmem:[%s2083 + $0x148] sm:$0xff]
    %v2126 = vld [vmem:[%s2083 + $0x150] sm:$0xff]
    %v2127 = vld [vmem:[%s2083 + $0x158] sm:$0xff]
    %v2128 = vld [vmem:[%s2083 + $0x160] sm:$0xff]
    %v2129 = vld [vmem:[%s2083 + $0x168] sm:$0xff]
    %v2130 = vld [vmem:[%s2083 + $0x170] sm:$0xff]
    %v2131 = vld [vmem:[%s2083 + $0x178] sm:$0xff]
    %v2132 = vld [vmem:[%s2083 + $0x180] sm:$0xff]
    %v2133 = vld [vmem:[%s2083 + $0x188] sm:$0xff]
    %v2134 = vld [vmem:[%s2083 + $0x190] sm:$0xff]
    %v2135 = vld [vmem:[%s2083 + $0x198] sm:$0xff]
    %v2136 = vld [vmem:[%s2083 + $0x1a0] sm:$0xff]
    %v2137 = vld [vmem:[%s2083 + $0x1a8] sm:$0xff]
    %v2138 = vld [vmem:[%s2083 + $0x1b0] sm:$0xff]
    %v2139 = vld [vmem:[%s2083 + $0x1b8] sm:$0xff]
    %v2140 = vld [vmem:[%s2083 + $0x1c0] sm:$0xff]
    %v2141 = vld [vmem:[%s2083 + $0x1c8] sm:$0xff]
    %v2142 = vld [vmem:[%s2083 + $0x1d0] sm:$0xff]
    %v2143 = vld [vmem:[%s2083 + $0x1d8] sm:$0xff]
    %v2144 = vld [vmem:[%s2083 + $0x1e0] sm:$0xff]
    %v2145 = vld [vmem:[%s2083 + $0x1e8] sm:$0xff]
    %v2146 = vld [vmem:[%s2083 + $0x1f0] sm:$0xff]
    %v2147 = vld [vmem:[%s2083 + $0x1f8] sm:$0xff]
    %v2148 = vld [vmem:[%s2083 + $0x200] sm:$0xff]
    %v2149 = vld [vmem:[%s2083 + $0x208] sm:$0xff]
    %v2150 = vld [vmem:[%s2083 + $0x210] sm:$0xff]
    %v2151 = vld [vmem:[%s2083 + $0x218] sm:$0xff]
    %v2152 = vld [vmem:[%s2083 + $0x220] sm:$0xff]
    %v2153 = vld [vmem:[%s2083 + $0x228] sm:$0xff]
    %v2154 = vld [vmem:[%s2083 + $0x230] sm:$0xff]
    %v2155 = vld [vmem:[%s2083 + $0x238] sm:$0xff]
    %v2156 = vld [vmem:[%s2083 + $0x240] sm:$0xff]
    %v2157 = vld [vmem:[%s2083 + $0x248] sm:$0xff]
    %v2158 = vld [vmem:[%s2083 + $0x250] sm:$0xff]
    %v2159 = vld [vmem:[%s2083 + $0x258] sm:$0xff]
    %v2160 = vld [vmem:[%s2083 + $0x260] sm:$0xff]
    %v2161 = vld [vmem:[%s2083 + $0x268] sm:$0xff]
    %v2162 = vld [vmem:[%s2083 + $0x270] sm:$0xff]
    %v2163 = vld [vmem:[%s2083 + $0x278] sm:$0xff]
    %v2164 = vld [vmem:[%s2083 + $0x280] sm:$0xff]
    %v2165 = vld [vmem:[%s2083 + $0x288] sm:$0xff]
    %v2166 = vld [vmem:[%s2083 + $0x290] sm:$0xff]
    %v2167 = vld [vmem:[%s2083 + $0x298] sm:$0xff]
    %v2168 = vld [vmem:[%s2083 + $0x2a0] sm:$0xff]
    %v2169 = vld [vmem:[%s2083 + $0x2a8] sm:$0xff]
    %v2170 = vld [vmem:[%s2083 + $0x2b0] sm:$0xff]
    %v2171 = vld [vmem:[%s2083 + $0x2b8] sm:$0xff]
    %v2172 = vld [vmem:[%s2083 + $0x2c0] sm:$0xff]
    %v2173 = vld [vmem:[%s2083 + $0x2c8] sm:$0xff]
    %v2174 = vld [vmem:[%s2083 + $0x2d0] sm:$0xff]
    %v2175 = vld [vmem:[%s2083 + $0x2d8] sm:$0xff]
    %v2176 = vld [vmem:[%s2083 + $0x2e0] sm:$0xff]
    %v2177 = vld [vmem:[%s2083 + $0x2e8] sm:$0xff]
    %v2178 = vld [vmem:[%s2083 + $0x2f0] sm:$0xff]
    %v2179 = vld [vmem:[%s2083 + $0x2f8] sm:$0xff]
    %v2180 = vpack.c.bf16 %v2076, %v2074
    %v2181 = vpack.c.bf16 %v2077, %v2075
    %v2278 = vunpack.c.l.b16 %v2084
    %v2279 = vunpack.c.h.b16 %v2084
    %v2280 = vunpack.c.l.b16 %v2085
    %v2281 = vunpack.c.h.b16 %v2085
    %v2282 = vunpack.c.l.b16 %v2086
    %v2283 = vunpack.c.h.b16 %v2086
    %v2284 = vunpack.c.l.b16 %v2087
    %v2285 = vunpack.c.h.b16 %v2087
    %v2286 = vunpack.c.l.b16 %v2088
    %v2287 = vunpack.c.h.b16 %v2088
    %v2288 = vunpack.c.l.b16 %v2089
    %v2289 = vunpack.c.h.b16 %v2089
    %v2290 = vunpack.c.l.b16 %v2090
    %v2291 = vunpack.c.h.b16 %v2090
    %v2292 = vunpack.c.l.b16 %v2091
    %v2293 = vunpack.c.h.b16 %v2091
    %v2294 = vunpack.c.l.b16 %v2092
    %v2295 = vunpack.c.h.b16 %v2092
    %v2296 = vunpack.c.l.b16 %v2093
    %v2297 = vunpack.c.h.b16 %v2093
    %v2298 = vunpack.c.l.b16 %v2094
    %v2299 = vunpack.c.h.b16 %v2094
    %v2300 = vunpack.c.l.b16 %v2095
    %v2301 = vunpack.c.h.b16 %v2095
    %v2302 = vunpack.c.l.b16 %v2096
    %v2303 = vunpack.c.h.b16 %v2096
    %v2304 = vunpack.c.l.b16 %v2097
    %v2305 = vunpack.c.h.b16 %v2097
    %v2306 = vunpack.c.l.b16 %v2098
    %v2307 = vunpack.c.h.b16 %v2098
    %v2308 = vunpack.c.l.b16 %v2099
    %v2309 = vunpack.c.h.b16 %v2099
    %v2310 = vunpack.c.l.b16 %v2100
    %v2311 = vunpack.c.h.b16 %v2100
    %v2312 = vunpack.c.l.b16 %v2101
    %v2313 = vunpack.c.h.b16 %v2101
    %v2314 = vunpack.c.l.b16 %v2102
    %v2315 = vunpack.c.h.b16 %v2102
    %v2316 = vunpack.c.l.b16 %v2103
    %v2317 = vunpack.c.h.b16 %v2103
    %v2318 = vunpack.c.l.b16 %v2104
    %v2319 = vunpack.c.h.b16 %v2104
    %v2320 = vunpack.c.l.b16 %v2105
    %v2321 = vunpack.c.h.b16 %v2105
    %v2322 = vunpack.c.l.b16 %v2106
    %v2323 = vunpack.c.h.b16 %v2106
    %v2324 = vunpack.c.l.b16 %v2107
    %v2325 = vunpack.c.h.b16 %v2107
    %v2326 = vunpack.c.l.b16 %v2108
    %v2327 = vunpack.c.h.b16 %v2108
    %v2328 = vunpack.c.l.b16 %v2109
    %v2329 = vunpack.c.h.b16 %v2109
    %v2330 = vunpack.c.l.b16 %v2110
    %v2331 = vunpack.c.h.b16 %v2110
    %v2332 = vunpack.c.l.b16 %v2111
    %v2333 = vunpack.c.h.b16 %v2111
    %v2334 = vunpack.c.l.b16 %v2112
    %v2335 = vunpack.c.h.b16 %v2112
    %v2336 = vunpack.c.l.b16 %v2113
    %v2337 = vunpack.c.h.b16 %v2113
    %v2338 = vunpack.c.l.b16 %v2114
    %v2339 = vunpack.c.h.b16 %v2114
    %v2340 = vunpack.c.l.b16 %v2115
    %v2341 = vunpack.c.h.b16 %v2115
    %v2342 = vunpack.c.l.b16 %v2116
    %v2343 = vunpack.c.h.b16 %v2116
    %v2344 = vunpack.c.l.b16 %v2117
    %v2345 = vunpack.c.h.b16 %v2117
    %v2346 = vunpack.c.l.b16 %v2118
    %v2347 = vunpack.c.h.b16 %v2118
    %v2348 = vunpack.c.l.b16 %v2119
    %v2349 = vunpack.c.h.b16 %v2119
    %v2350 = vunpack.c.l.b16 %v2120
    %v2351 = vunpack.c.h.b16 %v2120
    %v2352 = vunpack.c.l.b16 %v2121
    %v2353 = vunpack.c.h.b16 %v2121
    %v2354 = vunpack.c.l.b16 %v2122
    %v2355 = vunpack.c.h.b16 %v2122
    %v2356 = vunpack.c.l.b16 %v2123
    %v2357 = vunpack.c.h.b16 %v2123
    %v2358 = vunpack.c.l.b16 %v2124
    %v2359 = vunpack.c.h.b16 %v2124
    %v2360 = vunpack.c.l.b16 %v2125
    %v2361 = vunpack.c.h.b16 %v2125
    %v2362 = vunpack.c.l.b16 %v2126
    %v2363 = vunpack.c.h.b16 %v2126
    %v2364 = vunpack.c.l.b16 %v2127
    %v2365 = vunpack.c.h.b16 %v2127
    %v2366 = vunpack.c.l.b16 %v2128
    %v2367 = vunpack.c.h.b16 %v2128
    %v2368 = vunpack.c.l.b16 %v2129
    %v2369 = vunpack.c.h.b16 %v2129
    %v2370 = vunpack.c.l.b16 %v2130
    %v2371 = vunpack.c.h.b16 %v2130
    %v2372 = vunpack.c.l.b16 %v2131
    %v2373 = vunpack.c.h.b16 %v2131
    %v2374 = vunpack.c.l.b16 %v2132
    %v2375 = vunpack.c.h.b16 %v2132
    %v2376 = vunpack.c.l.b16 %v2133
    %v2377 = vunpack.c.h.b16 %v2133
    %v2378 = vunpack.c.l.b16 %v2134
    %v2379 = vunpack.c.h.b16 %v2134
    %v2380 = vunpack.c.l.b16 %v2135
    %v2381 = vunpack.c.h.b16 %v2135
    %v2382 = vunpack.c.l.b16 %v2136
    %v2383 = vunpack.c.h.b16 %v2136
    %v2384 = vunpack.c.l.b16 %v2137
    %v2385 = vunpack.c.h.b16 %v2137
    %v2386 = vunpack.c.l.b16 %v2138
    %v2387 = vunpack.c.h.b16 %v2138
    %v2388 = vunpack.c.l.b16 %v2139
    %v2389 = vunpack.c.h.b16 %v2139
    %v2390 = vunpack.c.l.b16 %v2140
    %v2391 = vunpack.c.h.b16 %v2140
    %v2392 = vunpack.c.l.b16 %v2141
    %v2393 = vunpack.c.h.b16 %v2141
    %v2394 = vunpack.c.l.b16 %v2142
    %v2395 = vunpack.c.h.b16 %v2142
    %v2396 = vunpack.c.l.b16 %v2143
    %v2397 = vunpack.c.h.b16 %v2143
    %v2398 = vunpack.c.l.b16 %v2144
    %v2399 = vunpack.c.h.b16 %v2144
    %v2400 = vunpack.c.l.b16 %v2145
    %v2401 = vunpack.c.h.b16 %v2145
    %v2402 = vunpack.c.l.b16 %v2146
    %v2403 = vunpack.c.h.b16 %v2146
    %v2404 = vunpack.c.l.b16 %v2147
    %v2405 = vunpack.c.h.b16 %v2147
    %v2406 = vunpack.c.l.b16 %v2148
    %v2407 = vunpack.c.h.b16 %v2148
    %v2408 = vunpack.c.l.b16 %v2149
    %v2409 = vunpack.c.h.b16 %v2149
    %v2410 = vunpack.c.l.b16 %v2150
    %v2411 = vunpack.c.h.b16 %v2150
    %v2412 = vunpack.c.l.b16 %v2151
    %v2413 = vunpack.c.h.b16 %v2151
    %v2414 = vunpack.c.l.b16 %v2152
    %v2415 = vunpack.c.h.b16 %v2152
    %v2416 = vunpack.c.l.b16 %v2153
    %v2417 = vunpack.c.h.b16 %v2153
    %v2418 = vunpack.c.l.b16 %v2154
    %v2419 = vunpack.c.h.b16 %v2154
    %v2420 = vunpack.c.l.b16 %v2155
    %v2421 = vunpack.c.h.b16 %v2155
    %v2422 = vunpack.c.l.b16 %v2156
    %v2423 = vunpack.c.h.b16 %v2156
    %v2424 = vunpack.c.l.b16 %v2157
    %v2425 = vunpack.c.h.b16 %v2157
    %v2426 = vunpack.c.l.b16 %v2158
    %v2427 = vunpack.c.h.b16 %v2158
    %v2428 = vunpack.c.l.b16 %v2159
    %v2429 = vunpack.c.h.b16 %v2159
    %v2430 = vunpack.c.l.b16 %v2160
    %v2431 = vunpack.c.h.b16 %v2160
    %v2432 = vunpack.c.l.b16 %v2161
    %v2433 = vunpack.c.h.b16 %v2161
    %v2434 = vunpack.c.l.b16 %v2162
    %v2435 = vunpack.c.h.b16 %v2162
    %v2436 = vunpack.c.l.b16 %v2163
    %v2437 = vunpack.c.h.b16 %v2163
    %v2438 = vunpack.c.l.b16 %v2164
    %v2439 = vunpack.c.h.b16 %v2164
    %v2440 = vunpack.c.l.b16 %v2165
    %v2441 = vunpack.c.h.b16 %v2165
    %v2442 = vunpack.c.l.b16 %v2166
    %v2443 = vunpack.c.h.b16 %v2166
    %v2444 = vunpack.c.l.b16 %v2167
    %v2445 = vunpack.c.h.b16 %v2167
    %v2446 = vunpack.c.l.b16 %v2168
    %v2447 = vunpack.c.h.b16 %v2168
    %v2448 = vunpack.c.l.b16 %v2169
    %v2449 = vunpack.c.h.b16 %v2169
    %v2450 = vunpack.c.l.b16 %v2170
    %v2451 = vunpack.c.h.b16 %v2170
    %v2452 = vunpack.c.l.b16 %v2171
    %v2453 = vunpack.c.h.b16 %v2171
    %v2454 = vunpack.c.l.b16 %v2172
    %v2455 = vunpack.c.h.b16 %v2172
    %v2456 = vunpack.c.l.b16 %v2173
    %v2457 = vunpack.c.h.b16 %v2173
    %v2458 = vunpack.c.l.b16 %v2174
    %v2459 = vunpack.c.h.b16 %v2174
    %v2460 = vunpack.c.l.b16 %v2175
    %v2461 = vunpack.c.h.b16 %v2175
    %v2462 = vunpack.c.l.b16 %v2176
    %v2463 = vunpack.c.h.b16 %v2176
    %v2464 = vunpack.c.l.b16 %v2177
    %v2465 = vunpack.c.h.b16 %v2177
    %v2466 = vunpack.c.l.b16 %v2178
    %v2467 = vunpack.c.h.b16 %v2178
    %v2468 = vunpack.c.l.b16 %v2179
    %v2469 = vunpack.c.h.b16 %v2179
    %v2470 = vpack.c.b16 %v2284, %v2278
    %v2471 = vpack.c.b16 %v2285, %v2279
    %v2472 = vpack.c.b16 %v2286, %v2280
    %v2473 = vpack.c.b16 %v2287, %v2281
    %v2474 = vpack.c.b16 %v2288, %v2282
    %v2475 = vpack.c.b16 %v2289, %v2283
    %v2476 = vpack.c.b16 %v2296, %v2290
    %v2477 = vpack.c.b16 %v2297, %v2291
    %v2478 = vpack.c.b16 %v2298, %v2292
    %v2479 = vpack.c.b16 %v2299, %v2293
    %v2480 = vpack.c.b16 %v2300, %v2294
    %v2481 = vpack.c.b16 %v2301, %v2295
    %v2482 = vpack.c.b16 %v2308, %v2302
    %v2483 = vpack.c.b16 %v2309, %v2303
    %v2484 = vpack.c.b16 %v2310, %v2304
    %v2485 = vpack.c.b16 %v2311, %v2305
    %v2486 = vpack.c.b16 %v2312, %v2306
    %v2487 = vpack.c.b16 %v2313, %v2307
    %v2488 = vpack.c.b16 %v2320, %v2314
    %v2489 = vpack.c.b16 %v2321, %v2315
    %v2490 = vpack.c.b16 %v2322, %v2316
    %v2491 = vpack.c.b16 %v2323, %v2317
    %v2492 = vpack.c.b16 %v2324, %v2318
    %v2493 = vpack.c.b16 %v2325, %v2319
    %v2494 = vpack.c.b16 %v2332, %v2326
    %v2495 = vpack.c.b16 %v2333, %v2327
    %v2496 = vpack.c.b16 %v2334, %v2328
    %v2497 = vpack.c.b16 %v2335, %v2329
    %v2498 = vpack.c.b16 %v2336, %v2330
    %v2499 = vpack.c.b16 %v2337, %v2331
    %v2500 = vpack.c.b16 %v2344, %v2338
    %v2501 = vpack.c.b16 %v2345, %v2339
    %v2502 = vpack.c.b16 %v2346, %v2340
    %v2503 = vpack.c.b16 %v2347, %v2341
    %v2504 = vpack.c.b16 %v2348, %v2342
    %v2505 = vpack.c.b16 %v2349, %v2343
    %v2506 = vpack.c.b16 %v2356, %v2350
    %v2507 = vpack.c.b16 %v2357, %v2351
    %v2508 = vpack.c.b16 %v2358, %v2352
    %v2509 = vpack.c.b16 %v2359, %v2353
    %v2510 = vpack.c.b16 %v2360, %v2354
    %v2511 = vpack.c.b16 %v2361, %v2355
    %v2512 = vpack.c.b16 %v2368, %v2362
    %v2513 = vpack.c.b16 %v2369, %v2363
    %v2514 = vpack.c.b16 %v2370, %v2364
    %v2515 = vpack.c.b16 %v2371, %v2365
    %v2516 = vpack.c.b16 %v2372, %v2366
    %v2517 = vpack.c.b16 %v2373, %v2367
    %v2518 = vpack.c.b16 %v2380, %v2374
    %v2519 = vpack.c.b16 %v2381, %v2375
    %v2520 = vpack.c.b16 %v2382, %v2376
    %v2521 = vpack.c.b16 %v2383, %v2377
    %v2522 = vpack.c.b16 %v2384, %v2378
    %v2523 = vpack.c.b16 %v2385, %v2379
    %v2524 = vpack.c.b16 %v2392, %v2386
    %v2525 = vpack.c.b16 %v2393, %v2387
    %v2526 = vpack.c.b16 %v2394, %v2388
    %v2527 = vpack.c.b16 %v2395, %v2389
    %v2528 = vpack.c.b16 %v2396, %v2390
    %v2529 = vpack.c.b16 %v2397, %v2391
    %v2530 = vpack.c.b16 %v2404, %v2398
    %v2531 = vpack.c.b16 %v2405, %v2399
    %v2532 = vpack.c.b16 %v2406, %v2400
    %v2533 = vpack.c.b16 %v2407, %v2401
    %v2534 = vpack.c.b16 %v2408, %v2402
    %v2535 = vpack.c.b16 %v2409, %v2403
    %v2536 = vpack.c.b16 %v2416, %v2410
    %v2537 = vpack.c.b16 %v2417, %v2411
    %v2538 = vpack.c.b16 %v2418, %v2412
    %v2539 = vpack.c.b16 %v2419, %v2413
    %v2540 = vpack.c.b16 %v2420, %v2414
    %v2541 = vpack.c.b16 %v2421, %v2415
    %v2542 = vpack.c.b16 %v2428, %v2422
    %v2543 = vpack.c.b16 %v2429, %v2423
    %v2544 = vpack.c.b16 %v2430, %v2424
    %v2545 = vpack.c.b16 %v2431, %v2425
    %v2546 = vpack.c.b16 %v2432, %v2426
    %v2547 = vpack.c.b16 %v2433, %v2427
    %v2548 = vpack.c.b16 %v2440, %v2434
    %v2549 = vpack.c.b16 %v2441, %v2435
    %v2550 = vpack.c.b16 %v2442, %v2436
    %v2551 = vpack.c.b16 %v2443, %v2437
    %v2552 = vpack.c.b16 %v2444, %v2438
    %v2553 = vpack.c.b16 %v2445, %v2439
    %v2554 = vpack.c.b16 %v2452, %v2446
    %v2555 = vpack.c.b16 %v2453, %v2447
    %v2556 = vpack.c.b16 %v2454, %v2448
    %v2557 = vpack.c.b16 %v2455, %v2449
    %v2558 = vpack.c.b16 %v2456, %v2450
    %v2559 = vpack.c.b16 %v2457, %v2451
    %v2560 = vpack.c.b16 %v2464, %v2458
    %v2561 = vpack.c.b16 %v2465, %v2459
    %v2562 = vpack.c.b16 %v2466, %v2460
    %v2563 = vpack.c.b16 %v2467, %v2461
    %v2564 = vpack.c.b16 %v2468, %v2462
    %v2565 = vpack.c.b16 %v2469, %v2463
    %2662 = vmatpush.bf16.msra.mxu0 %v2512
    %2663 = vmatpush.bf16.msra.mxu0 %v2506
    %2664 = vmatpush.bf16.msra.mxu0 %v2500
    %2665 = vmatpush.bf16.msra.mxu0 %v2494
    %2666 = vmatpush.bf16.msra.mxu0 %v2488
    %2667 = vmatpush.bf16.msra.mxu0 %v2482
    %2668 = vmatpush.bf16.msra.mxu0 %v2476
    %2669 = vmatpush.bf16.msra.mxu0 %v2470
    %2670 = vmatmul.bf16.gmra.mxu0 %v2180
    %v2671 = vpop.f32.mrf.mxu0
    %v2672 = vadd.f32 0.0, %v2671
    %v2673 = vpop.f32.mrf.mxu0
    %v2674 = vadd.f32 0.0, %v2673
    %2675 = vdwg.mxu0
    %2676 = vmatpush.bf16.msra.mxu0 %v2560
    %2677 = vmatpush.bf16.msra.mxu0 %v2554
    %2678 = vmatpush.bf16.msra.mxu0 %v2548
    %2679 = vmatpush.bf16.msra.mxu0 %v2542
    %2680 = vmatpush.bf16.msra.mxu0 %v2536
    %2681 = vmatpush.bf16.msra.mxu0 %v2530
    %2682 = vmatpush.bf16.msra.mxu0 %v2524
    %2683 = vmatpush.bf16.msra.mxu0 %v2518
    %2684 = vmatmul.bf16.gmra.mxu0 %v2181
    %v2685 = vpop.f32.mrf.mxu0
    %v2686 = vadd.f32 %v2672, %v2685
    %v2687 = vpop.f32.mrf.mxu0
    %v2688 = vadd.f32 %v2674, %v2687
    %2689 = vdwg.mxu0
    %2690 = vmatpush.bf16.msra.mxu0 %v2513
    %2691 = vmatpush.bf16.msra.mxu0 %v2507
    %2692 = vmatpush.bf16.msra.mxu0 %v2501
    %2693 = vmatpush.bf16.msra.mxu0 %v2495
    %2694 = vmatpush.bf16.msra.mxu0 %v2489
    %2695 = vmatpush.bf16.msra.mxu0 %v2483
    %2696 = vmatpush.bf16.msra.mxu0 %v2477
    %2697 = vmatpush.bf16.msra.mxu0 %v2471
    %2698 = vmatmul.bf16.gmra.mxu0 %v2180
    %v2699 = vpop.f32.mrf.mxu0
    %v2700 = vadd.f32 0.0, %v2699
    %v2701 = vpop.f32.mrf.mxu0
    %v2702 = vadd.f32 0.0, %v2701
    %2703 = vdwg.mxu0
    %2704 = vmatpush.bf16.msra.mxu0 %v2561
    %2705 = vmatpush.bf16.msra.mxu0 %v2555
    %2706 = vmatpush.bf16.msra.mxu0 %v2549
    %2707 = vmatpush.bf16.msra.mxu0 %v2543
    %2708 = vmatpush.bf16.msra.mxu0 %v2537
    %2709 = vmatpush.bf16.msra.mxu0 %v2531
    %2710 = vmatpush.bf16.msra.mxu0 %v2525
    %2711 = vmatpush.bf16.msra.mxu0 %v2519
    %2712 = vmatmul.bf16.gmra.mxu0 %v2181
    %v2713 = vpop.f32.mrf.mxu0
    %v2714 = vadd.f32 %v2700, %v2713
    %v2715 = vpop.f32.mrf.mxu0
    %v2716 = vadd.f32 %v2702, %v2715
    %2717 = vdwg.mxu0
    %2718 = vmatpush.bf16.msra.mxu0 %v2514
    %2719 = vmatpush.bf16.msra.mxu0 %v2508
    %2720 = vmatpush.bf16.msra.mxu0 %v2502
    %2721 = vmatpush.bf16.msra.mxu0 %v2496
    %2722 = vmatpush.bf16.msra.mxu0 %v2490
    %2723 = vmatpush.bf16.msra.mxu0 %v2484
    %2724 = vmatpush.bf16.msra.mxu0 %v2478
    %2725 = vmatpush.bf16.msra.mxu0 %v2472
    %2726 = vmatmul.bf16.gmra.mxu0 %v2180
    %v2727 = vpop.f32.mrf.mxu0
    %v2728 = vadd.f32 0.0, %v2727
    %v2729 = vpop.f32.mrf.mxu0
    %v2730 = vadd.f32 0.0, %v2729
    %2731 = vdwg.mxu0
    %2732 = vmatpush.bf16.msra.mxu0 %v2562
    %2733 = vmatpush.bf16.msra.mxu0 %v2556
    %2734 = vmatpush.bf16.msra.mxu0 %v2550
    %2735 = vmatpush.bf16.msra.mxu0 %v2544
    %2736 = vmatpush.bf16.msra.mxu0 %v2538
    %2737 = vmatpush.bf16.msra.mxu0 %v2532
    %2738 = vmatpush.bf16.msra.mxu0 %v2526
    %2739 = vmatpush.bf16.msra.mxu0 %v2520
    %2740 = vmatmul.bf16.gmra.mxu0 %v2181
    %v2741 = vpop.f32.mrf.mxu0
    %v2742 = vadd.f32 %v2728, %v2741
    %v2743 = vpop.f32.mrf.mxu0
    %v2744 = vadd.f32 %v2730, %v2743
    %2745 = vdwg.mxu0
    %2746 = vmatpush.bf16.msra.mxu0 %v2515
    %2747 = vmatpush.bf16.msra.mxu0 %v2509
    %2748 = vmatpush.bf16.msra.mxu0 %v2503
    %2749 = vmatpush.bf16.msra.mxu0 %v2497
    %2750 = vmatpush.bf16.msra.mxu0 %v2491
    %2751 = vmatpush.bf16.msra.mxu0 %v2485
    %2752 = vmatpush.bf16.msra.mxu0 %v2479
    %2753 = vmatpush.bf16.msra.mxu0 %v2473
    %2754 = vmatmul.bf16.gmra.mxu0 %v2180
    %v2755 = vpop.f32.mrf.mxu0
    %v2756 = vadd.f32 0.0, %v2755
    %v2757 = vpop.f32.mrf.mxu0
    %v2758 = vadd.f32 0.0, %v2757
    %2759 = vdwg.mxu0
    %2760 = vmatpush.bf16.msra.mxu0 %v2563
    %2761 = vmatpush.bf16.msra.mxu0 %v2557
    %2762 = vmatpush.bf16.msra.mxu0 %v2551
    %2763 = vmatpush.bf16.msra.mxu0 %v2545
    %2764 = vmatpush.bf16.msra.mxu0 %v2539
    %2765 = vmatpush.bf16.msra.mxu0 %v2533
    %2766 = vmatpush.bf16.msra.mxu0 %v2527
    %2767 = vmatpush.bf16.msra.mxu0 %v2521
    %2768 = vmatmul.bf16.gmra.mxu0 %v2181
    %v2769 = vpop.f32.mrf.mxu0
    %v2770 = vadd.f32 %v2756, %v2769
    %v2771 = vpop.f32.mrf.mxu0
    %v2772 = vadd.f32 %v2758, %v2771
    %2773 = vdwg.mxu0
    %2774 = vmatpush.bf16.msra.mxu0 %v2516
    %2775 = vmatpush.bf16.msra.mxu0 %v2510
    %2776 = vmatpush.bf16.msra.mxu0 %v2504
    %2777 = vmatpush.bf16.msra.mxu0 %v2498
    %2778 = vmatpush.bf16.msra.mxu0 %v2492
    %2779 = vmatpush.bf16.msra.mxu0 %v2486
    %2780 = vmatpush.bf16.msra.mxu0 %v2480
    %2781 = vmatpush.bf16.msra.mxu0 %v2474
    %2782 = vmatmul.bf16.gmra.mxu0 %v2180
    %v2783 = vpop.f32.mrf.mxu0
    %v2784 = vadd.f32 0.0, %v2783
    %v2785 = vpop.f32.mrf.mxu0
    %v2786 = vadd.f32 0.0, %v2785
    %2787 = vdwg.mxu0
    %2788 = vmatpush.bf16.msra.mxu0 %v2564
    %2789 = vmatpush.bf16.msra.mxu0 %v2558
    %2790 = vmatpush.bf16.msra.mxu0 %v2552
    %2791 = vmatpush.bf16.msra.mxu0 %v2546
    %2792 = vmatpush.bf16.msra.mxu0 %v2540
    %2793 = vmatpush.bf16.msra.mxu0 %v2534
    %2794 = vmatpush.bf16.msra.mxu0 %v2528
    %2795 = vmatpush.bf16.msra.mxu0 %v2522
    %2796 = vmatmul.bf16.gmra.mxu0 %v2181
    %v2797 = vpop.f32.mrf.mxu0
    %v2798 = vadd.f32 %v2784, %v2797
    %v2799 = vpop.f32.mrf.mxu0
    %v2800 = vadd.f32 %v2786, %v2799
    %2801 = vdwg.mxu0
    %2802 = vmatpush.bf16.msra.mxu0 %v2517
    %2803 = vmatpush.bf16.msra.mxu0 %v2511
    %2804 = vmatpush.bf16.msra.mxu0 %v2505
    %2805 = vmatpush.bf16.msra.mxu0 %v2499
    %2806 = vmatpush.bf16.msra.mxu0 %v2493
    %2807 = vmatpush.bf16.msra.mxu0 %v2487
    %2808 = vmatpush.bf16.msra.mxu0 %v2481
    %2809 = vmatpush.bf16.msra.mxu0 %v2475
    %2810 = vmatmul.bf16.gmra.mxu0 %v2180
    %v2811 = vpop.f32.mrf.mxu0
    %v2812 = vadd.f32 0.0, %v2811
    %v2813 = vpop.f32.mrf.mxu0
    %v2814 = vadd.f32 0.0, %v2813
    %2815 = vdwg.mxu0
    %2816 = vmatpush.bf16.msra.mxu0 %v2565
    %2817 = vmatpush.bf16.msra.mxu0 %v2559
    %2818 = vmatpush.bf16.msra.mxu0 %v2553
    %2819 = vmatpush.bf16.msra.mxu0 %v2547
    %2820 = vmatpush.bf16.msra.mxu0 %v2541
    %2821 = vmatpush.bf16.msra.mxu0 %v2535
    %2822 = vmatpush.bf16.msra.mxu0 %v2529
    %2823 = vmatpush.bf16.msra.mxu0 %v2523
    %2824 = vmatmul.bf16.gmra.mxu0 %v2181
    %v2825 = vpop.f32.mrf.mxu0
    %v2826 = vadd.f32 %v2812, %v2825
    %v2827 = vpop.f32.mrf.mxu0
    %v2828 = vadd.f32 %v2814, %v2827
    %2829 = vdwg.mxu0
    %v2830 = vperm.slane %v2079, 0
    %v2831 = vperm.slane %v2080, 0
    %v2832 = vadd.f32 %v2686, %v2830
    %v2833 = vadd.f32 %v2714, %v2831
    %v2834 = vadd.f32 %v2688, %v2830
    %v2835 = vadd.f32 %v2716, %v2831
    %v2836 = vperm.slane %v2079, 1
    %v2837 = vperm.slane %v2080, 1
    %v2838 = vadd.f32 %v2742, %v2836
    %v2839 = vadd.f32 %v2770, %v2837
    %v2840 = vadd.f32 %v2744, %v2836
    %v2841 = vadd.f32 %v2772, %v2837
    %v2842 = vperm.slane %v2079, 2
    %v2843 = vperm.slane %v2080, 2
    %v2844 = vadd.f32 %v2798, %v2842
    %v2845 = vadd.f32 %v2826, %v2843
    %v2846 = vadd.f32 %v2800, %v2842
    %v2847 = vadd.f32 %v2828, %v2843
    %v2848 = vpack.c.bf16 %v2832, %v2832
    %v2849 = vpack.c.bf16 %v2834, %v2834
    %v2850 = vpack.c.bf16 %v2833, %v2833
    %v2851 = vpack.c.bf16 %v2835, %v2835
    %v2852 = vpack.c.bf16 %v2838, %v2838
    %v2853 = vpack.c.bf16 %v2840, %v2840
    %v2854 = vpack.c.bf16 %v2839, %v2839
    %v2855 = vpack.c.bf16 %v2841, %v2841
    %2856 = vmatpush.bf16.xpose.msra.mxu0 0
    %2857 = vmatpush.bf16.xpose.msra.mxu0 0
    %2858 = vmatpush.bf16.xpose.msra.mxu0 0
    %2859 = vmatpush.bf16.xpose.msra.mxu0 0
    %2860 = vmatpush.bf16.xpose.msra.mxu0 0
    %2861 = vmatpush.bf16.xpose.msra.mxu0 0
    %2862 = vmatpush.bf16.xpose.msra.mxu0 0
    %2863 = vmatpush.bf16.xpose.msra.mxu0 %v2852
    %2864 = vmatmul.bf16.gmra.mxu0 %v2848
    %v2865 = vpop.f32.mrf.mxu0
    %v2866 = vadd.f32 0.0, %v2865
    %v2867 = vpop.f32.mrf.mxu0
    %2868 = vdwg.mxu0
    %2869 = vmatpush.bf16.xpose.msra.mxu0 0
    %2870 = vmatpush.bf16.xpose.msra.mxu0 0
    %2871 = vmatpush.bf16.xpose.msra.mxu0 0
    %2872 = vmatpush.bf16.xpose.msra.mxu0 0
    %2873 = vmatpush.bf16.xpose.msra.mxu0 0
    %2874 = vmatpush.bf16.xpose.msra.mxu0 0
    %2875 = vmatpush.bf16.xpose.msra.mxu0 0
    %2876 = vmatpush.bf16.xpose.msra.mxu0 %v2853
    %2877 = vmatmul.bf16.gmra.mxu0 %v2849
    %v2878 = vpop.f32.mrf.mxu0
    %v2879 = vadd.f32 0.0, %v2878
    %v2880 = vpop.f32.mrf.mxu0
    %2881 = vdwg.mxu0
    %2882 = vmatpush.bf16.xpose.msra.mxu0 0
    %2883 = vmatpush.bf16.xpose.msra.mxu0 0
    %2884 = vmatpush.bf16.xpose.msra.mxu0 0
    %2885 = vmatpush.bf16.xpose.msra.mxu0 0
    %2886 = vmatpush.bf16.xpose.msra.mxu0 0
    %2887 = vmatpush.bf16.xpose.msra.mxu0 0
    %2888 = vmatpush.bf16.xpose.msra.mxu0 0
    %2889 = vmatpush.bf16.xpose.msra.mxu0 %v2854
    %2890 = vmatmul.bf16.gmra.mxu0 %v2850
    %v2891 = vpop.f32.mrf.mxu0
    %v2892 = vadd.f32 0.0, %v2891
    %v2893 = vpop.f32.mrf.mxu0
    %2894 = vdwg.mxu0
    %2895 = vmatpush.bf16.xpose.msra.mxu0 0
    %2896 = vmatpush.bf16.xpose.msra.mxu0 0
    %2897 = vmatpush.bf16.xpose.msra.mxu0 0
    %2898 = vmatpush.bf16.xpose.msra.mxu0 0
    %2899 = vmatpush.bf16.xpose.msra.mxu0 0
    %2900 = vmatpush.bf16.xpose.msra.mxu0 0
    %2901 = vmatpush.bf16.xpose.msra.mxu0 0
    %2902 = vmatpush.bf16.xpose.msra.mxu0 %v2855
    %2903 = vmatmul.bf16.gmra.mxu0 %v2851
    %v2904 = vpop.f32.mrf.mxu0
    %v2905 = vadd.f32 0.0, %v2904
    %v2906 = vpop.f32.mrf.mxu0
    %2907 = vdwg.mxu0
    %v2908 = vmul.f32 %v2866, 0.088388346
    %v2909 = vmul.f32 %v2879, 0.088388346
    %v2910 = vmul.f32 %v2892, 0.088388346
    %v2911 = vmul.f32 %v2905, 0.088388346
    %v2912 = vsel %vm997, %v2908, -inf
    %2913 = vmax.xlane.f32.xlu0 %v2912
    %v2914 = vpop.xlane.xlu0 %2913
    %v2915 = vsel %vm997, %v2909, -inf
    %2916 = vmax.xlane.f32.xlu0 %v2915
    %v2917 = vpop.xlane.xlu0 %2916
    %v2918 = vsel %vm997, %v2910, -inf
    %2919 = vmax.xlane.f32.xlu0 %v2918
    %v2920 = vpop.xlane.xlu0 %2919
    %v2921 = vsel %vm997, %v2911, -inf
    %2922 = vmax.xlane.f32.xlu0 %v2921
    %v2923 = vpop.xlane.xlu0 %2922
    %v2924 = vsub.f32 %v2908, %v2914
    %v2925 = vsub.f32 %v2909, %v2917
    %v2926 = vsub.f32 %v2910, %v2920
    %v2927 = vsub.f32 %v2911, %v2923
    %v2928 = vmul.f32 %v2924, 1.442695
    %v2929 = vpow.pop %v2928
    %v2930 = vmul.f32 %v2925, 1.442695
    %v2931 = vpow.pop %v2930
    %v2932 = vmul.f32 %v2926, 1.442695
    %v2933 = vpow.pop %v2932
    %v2934 = vmul.f32 %v2927, 1.442695
    %v2935 = vpow.pop %v2934
    %v2936 = vsel %vm997, %v2929, 0.0
    %2937 = vadd.xlane.f32.xlu0 %v2936
    %v2938 = vpop.xlane.xlu0 %2937
    %v2939 = vsel %vm997, %v2931, 0.0
    %2940 = vadd.xlane.f32.xlu0 %v2939
    %v2941 = vpop.xlane.xlu0 %2940
    %v2942 = vsel %vm997, %v2933, 0.0
    %2943 = vadd.xlane.f32.xlu0 %v2942
    %v2944 = vpop.xlane.xlu0 %2943
    %v2945 = vsel %vm997, %v2935, 0.0
    %2946 = vadd.xlane.f32.xlu0 %v2945
    %v2947 = vpop.xlane.xlu0 %2946
    %v2948 = vrcp.pop %v2938
    %v2949 = vmul.f32 %v2938, %v2948
    %v2950 = vsub.f32 1.0, %v2949
    %v2951 = vmul.f32 %v2948, %v2950
    %v2952 = vadd.f32 %v2948, %v2951
    %vm2953 = vweird.f32 %v2938
    %vm2954 = vweird.f32 %v2948
    %vm2955 = vmor %vm2953, %vm2954
    %v2956 = vsel %vm2955, %v2948, %v2952
    %v2957 = vand.u32 2147483647, %v2938
    %vm2958 = vcmp.eq.f32.partialorder %v2957, 8.507059e+37
    %v2959 = vand.u32 %v2938, 2147483648
    %v2960 = vor.u32 1.1754944e-38, %v2959
    %v2961 = vsel %vm2958, %v2960, %v2956
    %v2962 = vmul.f32 %v2929, %v2961
    %v2963 = vrcp.pop %v2941
    %v2964 = vmul.f32 %v2941, %v2963
    %v2965 = vsub.f32 1.0, %v2964
    %v2966 = vmul.f32 %v2963, %v2965
    %v2967 = vadd.f32 %v2963, %v2966
    %vm2968 = vweird.f32 %v2941
    %vm2969 = vweird.f32 %v2963
    %vm2970 = vmor %vm2968, %vm2969
    %v2971 = vsel %vm2970, %v2963, %v2967
    %v2972 = vand.u32 2147483647, %v2941
    %vm2973 = vcmp.eq.f32.partialorder %v2972, 8.507059e+37
    %v2974 = vand.u32 %v2941, 2147483648
    %v2975 = vor.u32 1.1754944e-38, %v2974
    %v2976 = vsel %vm2973, %v2975, %v2971
    %v2977 = vmul.f32 %v2931, %v2976
    %v2978 = vrcp.pop %v2944
    %v2979 = vmul.f32 %v2944, %v2978
    %v2980 = vsub.f32 1.0, %v2979
    %v2981 = vmul.f32 %v2978, %v2980
    %v2982 = vadd.f32 %v2978, %v2981
    %vm2983 = vweird.f32 %v2944
    %vm2984 = vweird.f32 %v2978
    %vm2985 = vmor %vm2983, %vm2984
    %v2986 = vsel %vm2985, %v2978, %v2982
    %v2987 = vand.u32 2147483647, %v2944
    %vm2988 = vcmp.eq.f32.partialorder %v2987, 8.507059e+37
    %v2989 = vand.u32 %v2944, 2147483648
    %v2990 = vor.u32 1.1754944e-38, %v2989
    %v2991 = vsel %vm2988, %v2990, %v2986
    %v2992 = vmul.f32 %v2933, %v2991
    %v2993 = vrcp.pop %v2947
    %v2994 = vmul.f32 %v2947, %v2993
    %v2995 = vsub.f32 1.0, %v2994
    %v2996 = vmul.f32 %v2993, %v2995
    %v2997 = vadd.f32 %v2993, %v2996
    %vm2998 = vweird.f32 %v2947
    %vm2999 = vweird.f32 %v2993
    %vm3000 = vmor %vm2998, %vm2999
    %v3001 = vsel %vm3000, %v2993, %v2997
    %v3002 = vand.u32 2147483647, %v2947
    %vm3003 = vcmp.eq.f32.partialorder %v3002, 8.507059e+37
    %v3004 = vand.u32 %v2947, 2147483648
    %v3005 = vor.u32 1.1754944e-38, %v3004
    %v3006 = vsel %vm3003, %v3005, %v3001
    %v3007 = vmul.f32 %v2935, %v3006
    %v3008 = vpack.c.bf16 %v2962, %v2962
    %v3009 = vpack.c.bf16 %v2977, %v2977
    %v3010 = vpack.c.bf16 %v2992, %v2992
    %v3011 = vpack.c.bf16 %v3007, %v3007
    %v3012 = vpack.c.bf16 %v2844, %v2844
    %v3013 = vpack.c.bf16 %v2846, %v2846
    %v3014 = vpack.c.bf16 %v2845, %v2845
    %v3015 = vpack.c.bf16 %v2847, %v2847
    %v3017 = vsel %vm997, %v3008, 0
    %v3020 = vsel %vm1105, %v3012, 0
    %3022 = vmatpush.bf16.msra.mxu0 0
    %3023 = vmatpush.bf16.msra.mxu0 0
    %3024 = vmatpush.bf16.msra.mxu0 0
    %3025 = vmatpush.bf16.msra.mxu0 0
    %3026 = vmatpush.bf16.msra.mxu0 0
    %3027 = vmatpush.bf16.msra.mxu0 0
    %3028 = vmatpush.bf16.msra.mxu0 0
    %3029 = vmatpush.bf16.msra.mxu0 %v3020
    %3030 = vmatmul.bf16.gmra.mxu0 %v3017
    %v3031 = vpop.f32.mrf.mxu0
    %v3032 = vadd.f32 0.0, %v3031
    %v3033 = vpop.f32.mrf.mxu0
    %3034 = vdwg.mxu0
    %v3036 = vsel %vm997, %v3009, 0
    %v3039 = vsel %vm1105, %v3013, 0
    %3041 = vmatpush.bf16.msra.mxu0 0
    %3042 = vmatpush.bf16.msra.mxu0 0
    %3043 = vmatpush.bf16.msra.mxu0 0
    %3044 = vmatpush.bf16.msra.mxu0 0
    %3045 = vmatpush.bf16.msra.mxu0 0
    %3046 = vmatpush.bf16.msra.mxu0 0
    %3047 = vmatpush.bf16.msra.mxu0 0
    %3048 = vmatpush.bf16.msra.mxu0 %v3039
    %3049 = vmatmul.bf16.gmra.mxu0 %v3036
    %v3050 = vpop.f32.mrf.mxu0
    %v3051 = vadd.f32 0.0, %v3050
    %v3052 = vpop.f32.mrf.mxu0
    %3053 = vdwg.mxu0
    %v3055 = vsel %vm997, %v3010, 0
    %v3058 = vsel %vm1105, %v3014, 0
    %3060 = vmatpush.bf16.msra.mxu0 0
    %3061 = vmatpush.bf16.msra.mxu0 0
    %3062 = vmatpush.bf16.msra.mxu0 0
    %3063 = vmatpush.bf16.msra.mxu0 0
    %3064 = vmatpush.bf16.msra.mxu0 0
    %3065 = vmatpush.bf16.msra.mxu0 0
    %3066 = vmatpush.bf16.msra.mxu0 0
    %3067 = vmatpush.bf16.msra.mxu0 %v3058
    %3068 = vmatmul.bf16.gmra.mxu0 %v3055
    %v3069 = vpop.f32.mrf.mxu0
    %v3070 = vadd.f32 0.0, %v3069
    %v3071 = vpop.f32.mrf.mxu0
    %3072 = vdwg.mxu0
    %v3074 = vsel %vm997, %v3011, 0
    %v3077 = vsel %vm1105, %v3015, 0
    %3079 = vmatpush.bf16.msra.mxu0 0
    %3080 = vmatpush.bf16.msra.mxu0 0
    %3081 = vmatpush.bf16.msra.mxu0 0
    %3082 = vmatpush.bf16.msra.mxu0 0
    %3083 = vmatpush.bf16.msra.mxu0 0
    %3084 = vmatpush.bf16.msra.mxu0 0
    %3085 = vmatpush.bf16.msra.mxu0 0
    %3086 = vmatpush.bf16.msra.mxu0 %v3077
    %3087 = vmatmul.bf16.gmra.mxu0 %v3074
    %v3088 = vpop.f32.mrf.mxu0
    %v3089 = vadd.f32 0.0, %v3088
    %v3090 = vpop.f32.mrf.mxu0
    %3091 = vdwg.mxu0
    %s3092 = scalar_lea.vmem [#allocation4], 256
    %v3093 = vld [vmem:[%s3092] sm:$0xff]
    %v3094 = vld [vmem:[%s3092 + $0x8] sm:$0xff]
    %v3095 = vld [vmem:[%s3092 + $0x10] sm:$0xff]
    %v3096 = vld [vmem:[%s3092 + $0x18] sm:$0xff]
    %v3097 = vld [vmem:[%s3092 + $0x20] sm:$0xff]
    %v3098 = vld [vmem:[%s3092 + $0x28] sm:$0xff]
    %v3099 = vld [vmem:[%s3092 + $0x30] sm:$0xff]
    %v3100 = vld [vmem:[%s3092 + $0x38] sm:$0xff]
    %v3101 = vld [vmem:[%s3092 + $0x40] sm:$0xff]
    %v3102 = vld [vmem:[%s3092 + $0x48] sm:$0xff]
    %v3103 = vld [vmem:[%s3092 + $0x50] sm:$0xff]
    %v3104 = vld [vmem:[%s3092 + $0x58] sm:$0xff]
    %v3105 = vld [vmem:[%s3092 + $0x60] sm:$0xff]
    %v3106 = vld [vmem:[%s3092 + $0x68] sm:$0xff]
    %v3107 = vld [vmem:[%s3092 + $0x70] sm:$0xff]
    %v3108 = vld [vmem:[%s3092 + $0x78] sm:$0xff]
    %v3109 = vld [vmem:[%s3092 + $0x80] sm:$0xff]
    %v3110 = vld [vmem:[%s3092 + $0x88] sm:$0xff]
    %v3111 = vld [vmem:[%s3092 + $0x90] sm:$0xff]
    %v3112 = vld [vmem:[%s3092 + $0x98] sm:$0xff]
    %v3113 = vld [vmem:[%s3092 + $0xa0] sm:$0xff]
    %v3114 = vld [vmem:[%s3092 + $0xa8] sm:$0xff]
    %v3115 = vld [vmem:[%s3092 + $0xb0] sm:$0xff]
    %v3116 = vld [vmem:[%s3092 + $0xb8] sm:$0xff]
    %v3117 = vld [vmem:[%s3092 + $0xc0] sm:$0xff]
    %v3118 = vld [vmem:[%s3092 + $0xc8] sm:$0xff]
    %v3119 = vld [vmem:[%s3092 + $0xd0] sm:$0xff]
    %v3120 = vld [vmem:[%s3092 + $0xd8] sm:$0xff]
    %v3121 = vld [vmem:[%s3092 + $0xe0] sm:$0xff]
    %v3122 = vld [vmem:[%s3092 + $0xe8] sm:$0xff]
    %v3123 = vld [vmem:[%s3092 + $0xf0] sm:$0xff]
    %v3124 = vld [vmem:[%s3092 + $0xf8] sm:$0xff]
    %v3125 = vpack.c.bf16 %v3051, %v3032
    %v3126 = vpack.c.bf16 %v3089, %v3070
    %v3127 = vperm.slane %v2079, 3
    %v3128 = vperm.slane %v2080, 3
    %v3161 = vunpack.c.l.b16 %v3093
    %v3162 = vunpack.c.h.b16 %v3093
    %v3163 = vunpack.c.l.b16 %v3094
    %v3164 = vunpack.c.h.b16 %v3094
    %v3165 = vunpack.c.l.b16 %v3095
    %v3166 = vunpack.c.h.b16 %v3095
    %v3167 = vunpack.c.l.b16 %v3096
    %v3168 = vunpack.c.h.b16 %v3096
    %v3169 = vunpack.c.l.b16 %v3097
    %v3170 = vunpack.c.h.b16 %v3097
    %v3171 = vunpack.c.l.b16 %v3098
    %v3172 = vunpack.c.h.b16 %v3098
    %v3173 = vunpack.c.l.b16 %v3099
    %v3174 = vunpack.c.h.b16 %v3099
    %v3175 = vunpack.c.l.b16 %v3100
    %v3176 = vunpack.c.h.b16 %v3100
    %v3177 = vunpack.c.l.b16 %v3101
    %v3178 = vunpack.c.h.b16 %v3101
    %v3179 = vunpack.c.l.b16 %v3102
    %v3180 = vunpack.c.h.b16 %v3102
    %v3181 = vunpack.c.l.b16 %v3103
    %v3182 = vunpack.c.h.b16 %v3103
    %v3183 = vunpack.c.l.b16 %v3104
    %v3184 = vunpack.c.h.b16 %v3104
    %v3185 = vunpack.c.l.b16 %v3105
    %v3186 = vunpack.c.h.b16 %v3105
    %v3187 = vunpack.c.l.b16 %v3106
    %v3188 = vunpack.c.h.b16 %v3106
    %v3189 = vunpack.c.l.b16 %v3107
    %v3190 = vunpack.c.h.b16 %v3107
    %v3191 = vunpack.c.l.b16 %v3108
    %v3192 = vunpack.c.h.b16 %v3108
    %v3193 = vunpack.c.l.b16 %v3109
    %v3194 = vunpack.c.h.b16 %v3109
    %v3195 = vunpack.c.l.b16 %v3110
    %v3196 = vunpack.c.h.b16 %v3110
    %v3197 = vunpack.c.l.b16 %v3111
    %v3198 = vunpack.c.h.b16 %v3111
    %v3199 = vunpack.c.l.b16 %v3112
    %v3200 = vunpack.c.h.b16 %v3112
    %v3201 = vunpack.c.l.b16 %v3113
    %v3202 = vunpack.c.h.b16 %v3113
    %v3203 = vunpack.c.l.b16 %v3114
    %v3204 = vunpack.c.h.b16 %v3114
    %v3205 = vunpack.c.l.b16 %v3115
    %v3206 = vunpack.c.h.b16 %v3115
    %v3207 = vunpack.c.l.b16 %v3116
    %v3208 = vunpack.c.h.b16 %v3116
    %v3209 = vunpack.c.l.b16 %v3117
    %v3210 = vunpack.c.h.b16 %v3117
    %v3211 = vunpack.c.l.b16 %v3118
    %v3212 = vunpack.c.h.b16 %v3118
    %v3213 = vunpack.c.l.b16 %v3119
    %v3214 = vunpack.c.h.b16 %v3119
    %v3215 = vunpack.c.l.b16 %v3120
    %v3216 = vunpack.c.h.b16 %v3120
    %v3217 = vunpack.c.l.b16 %v3121
    %v3218 = vunpack.c.h.b16 %v3121
    %v3219 = vunpack.c.l.b16 %v3122
    %v3220 = vunpack.c.h.b16 %v3122
    %v3221 = vunpack.c.l.b16 %v3123
    %v3222 = vunpack.c.h.b16 %v3123
    %v3223 = vunpack.c.l.b16 %v3124
    %v3224 = vunpack.c.h.b16 %v3124
    %v3225 = vpack.c.b16 %v3163, %v3161
    %v3226 = vpack.c.b16 %v3164, %v3162
    %v3227 = vpack.c.b16 %v3167, %v3165
    %v3228 = vpack.c.b16 %v3168, %v3166
    %v3229 = vpack.c.b16 %v3171, %v3169
    %v3230 = vpack.c.b16 %v3172, %v3170
    %v3231 = vpack.c.b16 %v3175, %v3173
    %v3232 = vpack.c.b16 %v3176, %v3174
    %v3233 = vpack.c.b16 %v3179, %v3177
    %v3234 = vpack.c.b16 %v3180, %v3178
    %v3235 = vpack.c.b16 %v3183, %v3181
    %v3236 = vpack.c.b16 %v3184, %v3182
    %v3237 = vpack.c.b16 %v3187, %v3185
    %v3238 = vpack.c.b16 %v3188, %v3186
    %v3239 = vpack.c.b16 %v3191, %v3189
    %v3240 = vpack.c.b16 %v3192, %v3190
    %v3241 = vpack.c.b16 %v3195, %v3193
    %v3242 = vpack.c.b16 %v3196, %v3194
    %v3243 = vpack.c.b16 %v3199, %v3197
    %v3244 = vpack.c.b16 %v3200, %v3198
    %v3245 = vpack.c.b16 %v3203, %v3201
    %v3246 = vpack.c.b16 %v3204, %v3202
    %v3247 = vpack.c.b16 %v3207, %v3205
    %v3248 = vpack.c.b16 %v3208, %v3206
    %v3249 = vpack.c.b16 %v3211, %v3209
    %v3250 = vpack.c.b16 %v3212, %v3210
    %v3251 = vpack.c.b16 %v3215, %v3213
    %v3252 = vpack.c.b16 %v3216, %v3214
    %v3253 = vpack.c.b16 %v3219, %v3217
    %v3254 = vpack.c.b16 %v3220, %v3218
    %v3255 = vpack.c.b16 %v3223, %v3221
    %v3256 = vpack.c.b16 %v3224, %v3222
    %3289 = vmatpush.bf16.msra.mxu0 %v3239
    %3290 = vmatpush.bf16.msra.mxu0 %v3237
    %3291 = vmatpush.bf16.msra.mxu0 %v3235
    %3292 = vmatpush.bf16.msra.mxu0 %v3233
    %3293 = vmatpush.bf16.msra.mxu0 %v3231
    %3294 = vmatpush.bf16.msra.mxu0 %v3229
    %3295 = vmatpush.bf16.msra.mxu0 %v3227
    %3296 = vmatpush.bf16.msra.mxu0 %v3225
    %3297 = vmatmul.bf16.gmra.mxu0 %v3125
    %v3298 = vpop.f32.mrf.mxu0
    %v3299 = vadd.f32 %v3127, %v3298
    %v3300 = vpop.f32.mrf.mxu0
    %v3301 = vadd.f32 %v3127, %v3300
    %3302 = vdwg.mxu0
    %3303 = vmatpush.bf16.msra.mxu0 %v3255
    %3304 = vmatpush.bf16.msra.mxu0 %v3253
    %3305 = vmatpush.bf16.msra.mxu0 %v3251
    %3306 = vmatpush.bf16.msra.mxu0 %v3249
    %3307 = vmatpush.bf16.msra.mxu0 %v3247
    %3308 = vmatpush.bf16.msra.mxu0 %v3245
    %3309 = vmatpush.bf16.msra.mxu0 %v3243
    %3310 = vmatpush.bf16.msra.mxu0 %v3241
    %3311 = vmatmul.bf16.gmra.mxu0 %v3126
    %v3312 = vpop.f32.mrf.mxu0
    %v3313 = vadd.f32 %v3299, %v3312
    %v3314 = vpop.f32.mrf.mxu0
    %v3315 = vadd.f32 %v3301, %v3314
    %3316 = vdwg.mxu0
    %3317 = vmatpush.bf16.msra.mxu0 %v3240
    %3318 = vmatpush.bf16.msra.mxu0 %v3238
    %3319 = vmatpush.bf16.msra.mxu0 %v3236
    %3320 = vmatpush.bf16.msra.mxu0 %v3234
    %3321 = vmatpush.bf16.msra.mxu0 %v3232
    %3322 = vmatpush.bf16.msra.mxu0 %v3230
    %3323 = vmatpush.bf16.msra.mxu0 %v3228
    %3324 = vmatpush.bf16.msra.mxu0 %v3226
    %3325 = vmatmul.bf16.gmra.mxu0 %v3125
    %v3326 = vpop.f32.mrf.mxu0
    %v3327 = vadd.f32 %v3128, %v3326
    %v3328 = vpop.f32.mrf.mxu0
    %v3329 = vadd.f32 %v3128, %v3328
    %3330 = vdwg.mxu0
    %3331 = vmatpush.bf16.msra.mxu0 %v3256
    %3332 = vmatpush.bf16.msra.mxu0 %v3254
    %3333 = vmatpush.bf16.msra.mxu0 %v3252
    %3334 = vmatpush.bf16.msra.mxu0 %v3250
    %3335 = vmatpush.bf16.msra.mxu0 %v3248
    %3336 = vmatpush.bf16.msra.mxu0 %v3246
    %3337 = vmatpush.bf16.msra.mxu0 %v3244
    %3338 = vmatpush.bf16.msra.mxu0 %v3242
    %3339 = vmatmul.bf16.gmra.mxu0 %v3126
    %v3340 = vpop.f32.mrf.mxu0
    %v3341 = vadd.f32 %v3327, %v3340
    %v3342 = vpop.f32.mrf.mxu0
    %v3343 = vadd.f32 %v3329, %v3342
    %3344 = vdwg.mxu0
    %v3345 = vadd.f32 %v2074, %v3313
    %v3346 = vadd.f32 %v2075, %v3341
    %v3347 = vadd.f32 %v2076, %v3315
    %v3348 = vadd.f32 %v2077, %v3343
    %v3349 = vadd.f32 %v3345, %v3346
    %3350 = vadd.xlane.f32.xlu0 %v3349
    %v3351 = vpop.xlane.xlu0 %3350
    %v3352 = vadd.f32 %v3347, %v3348
    %3353 = vadd.xlane.f32.xlu0 %v3352
    %v3354 = vpop.xlane.xlu0 %3353
    %v3355 = vmul.f32 %v3351, %v1447
    %v3356 = vmul.f32 %v3354, %v1447
    %v3357 = vsub.f32 %v3345, %v3355
    %v3358 = vsub.f32 %v3346, %v3355
    %v3359 = vsub.f32 %v3347, %v3356
    %v3360 = vsub.f32 %v3348, %v3356
    %v3361 = vmul.f32 %v3357, %v3357
    %v3362 = vmul.f32 %v3358, %v3358
    %v3363 = vmul.f32 %v3359, %v3359
    %v3364 = vmul.f32 %v3360, %v3360
    %v3365 = vadd.f32 %v3361, %v3362
    %3366 = vadd.xlane.f32.xlu0 %v3365
    %v3367 = vpop.xlane.xlu0 %3366
    %v3368 = vadd.f32 %v3363, %v3364
    %3369 = vadd.xlane.f32.xlu0 %v3368
    %v3370 = vpop.xlane.xlu0 %3369
    %v3371 = vmul.f32 %v3367, %v1447
    %v3372 = vmul.f32 %v3370, %v1447
    %v3373 = vadd.f32 %v3371, 1e-05
    %v3374 = vadd.f32 %v3372, 1e-05
    %v3375 = vrsqrt.pop %v3373
    %v3376 = vmul.f32 %v3375, %v3373
    %v3377 = vmul.f32 %v3376, %v3375
    %v3378 = vmul.f32 0.5, %v3377
    %v3379 = vsub.f32 1.5, %v3378
    %v3380 = vmul.f32 %v3375, %v3379
    %vm3381 = vweird.f32 %v3373
    %vm3382 = vweird.f32 %v3375
    %vm3383 = vmor %vm3381, %vm3382
    %v3384 = vsel %vm3383, %v3375, %v3380
    %v3385 = vrsqrt.pop %v3374
    %v3386 = vmul.f32 %v3385, %v3374
    %v3387 = vmul.f32 %v3386, %v3385
    %v3388 = vmul.f32 0.5, %v3387
    %v3389 = vsub.f32 1.5, %v3388
    %v3390 = vmul.f32 %v3385, %v3389
    %vm3391 = vweird.f32 %v3374
    %vm3392 = vweird.f32 %v3385
    %vm3393 = vmor %vm3391, %vm3392
    %v3394 = vsel %vm3393, %v3385, %v3390
    %v3395 = vmul.f32 %v3357, %v3384
    %v3396 = vmul.f32 %v3358, %v3384
    %v3397 = vmul.f32 %v3359, %v3394
    %v3398 = vmul.f32 %v3360, %v3394
    %v3399 = vperm.slane %v2079, 4
    %v3400 = vperm.slane %v2080, 4
    %v3401 = vmul.f32 %v3395, %v3399
    %v3402 = vmul.f32 %v3396, %v3400
    %v3403 = vmul.f32 %v3397, %v3399
    %v3404 = vmul.f32 %v3398, %v3400
    %v3405 = vperm.slane %v2079, 5
    %v3406 = vperm.slane %v2080, 5
    %v3407 = vadd.f32 %v3401, %v3405
    %v3408 = vadd.f32 %v3402, %v3406
    %v3409 = vadd.f32 %v3403, %v3405
    %v3410 = vadd.f32 %v3404, %v3406
    %s3411 = scalar_lea.vmem [#allocation6], 256
    %v3412 = vld [vmem:[%s3411] sm:$0xff]
    %v3413 = vld [vmem:[%s3411 + $0x8] sm:$0xff]
    %v3414 = vld [vmem:[%s3411 + $0x10] sm:$0xff]
    %v3415 = vld [vmem:[%s3411 + $0x18] sm:$0xff]
    %v3416 = vld [vmem:[%s3411 + $0x20] sm:$0xff]
    %v3417 = vld [vmem:[%s3411 + $0x28] sm:$0xff]
    %v3418 = vld [vmem:[%s3411 + $0x30] sm:$0xff]
    %v3419 = vld [vmem:[%s3411 + $0x38] sm:$0xff]
    %v3420 = vld [vmem:[%s3411 + $0x40] sm:$0xff]
    %v3421 = vld [vmem:[%s3411 + $0x48] sm:$0xff]
    %v3422 = vld [vmem:[%s3411 + $0x50] sm:$0xff]
    %v3423 = vld [vmem:[%s3411 + $0x58] sm:$0xff]
    %v3424 = vld [vmem:[%s3411 + $0x60] sm:$0xff]
    %v3425 = vld [vmem:[%s3411 + $0x68] sm:$0xff]
    %v3426 = vld [vmem:[%s3411 + $0x70] sm:$0xff]
    %v3427 = vld [vmem:[%s3411 + $0x78] sm:$0xff]
    %v3428 = vld [vmem:[%s3411 + $0x80] sm:$0xff]
    %v3429 = vld [vmem:[%s3411 + $0x88] sm:$0xff]
    %v3430 = vld [vmem:[%s3411 + $0x90] sm:$0xff]
    %v3431 = vld [vmem:[%s3411 + $0x98] sm:$0xff]
    %v3432 = vld [vmem:[%s3411 + $0xa0] sm:$0xff]
    %v3433 = vld [vmem:[%s3411 + $0xa8] sm:$0xff]
    %v3434 = vld [vmem:[%s3411 + $0xb0] sm:$0xff]
    %v3435 = vld [vmem:[%s3411 + $0xb8] sm:$0xff]
    %v3436 = vld [vmem:[%s3411 + $0xc0] sm:$0xff]
    %v3437 = vld [vmem:[%s3411 + $0xc8] sm:$0xff]
    %v3438 = vld [vmem:[%s3411 + $0xd0] sm:$0xff]
    %v3439 = vld [vmem:[%s3411 + $0xd8] sm:$0xff]
    %v3440 = vld [vmem:[%s3411 + $0xe0] sm:$0xff]
    %v3441 = vld [vmem:[%s3411 + $0xe8] sm:$0xff]
    %v3442 = vld [vmem:[%s3411 + $0xf0] sm:$0xff]
    %v3443 = vld [vmem:[%s3411 + $0xf8] sm:$0xff]
    %v3444 = vpack.c.bf16 %v3409, %v3407
    %v3445 = vpack.c.bf16 %v3410, %v3408
    %v3446 = vperm.slane %v2079, 6
    %v3447 = vperm.slane %v2080, 6
    %v3480 = vunpack.c.l.b16 %v3412
    %v3481 = vunpack.c.h.b16 %v3412
    %v3482 = vunpack.c.l.b16 %v3413
    %v3483 = vunpack.c.h.b16 %v3413
    %v3484 = vunpack.c.l.b16 %v3414
    %v3485 = vunpack.c.h.b16 %v3414
    %v3486 = vunpack.c.l.b16 %v3415
    %v3487 = vunpack.c.h.b16 %v3415
    %v3488 = vunpack.c.l.b16 %v3416
    %v3489 = vunpack.c.h.b16 %v3416
    %v3490 = vunpack.c.l.b16 %v3417
    %v3491 = vunpack.c.h.b16 %v3417
    %v3492 = vunpack.c.l.b16 %v3418
    %v3493 = vunpack.c.h.b16 %v3418
    %v3494 = vunpack.c.l.b16 %v3419
    %v3495 = vunpack.c.h.b16 %v3419
    %v3496 = vunpack.c.l.b16 %v3420
    %v3497 = vunpack.c.h.b16 %v3420
    %v3498 = vunpack.c.l.b16 %v3421
    %v3499 = vunpack.c.h.b16 %v3421
    %v3500 = vunpack.c.l.b16 %v3422
    %v3501 = vunpack.c.h.b16 %v3422
    %v3502 = vunpack.c.l.b16 %v3423
    %v3503 = vunpack.c.h.b16 %v3423
    %v3504 = vunpack.c.l.b16 %v3424
    %v3505 = vunpack.c.h.b16 %v3424
    %v3506 = vunpack.c.l.b16 %v3425
    %v3507 = vunpack.c.h.b16 %v3425
    %v3508 = vunpack.c.l.b16 %v3426
    %v3509 = vunpack.c.h.b16 %v3426
    %v3510 = vunpack.c.l.b16 %v3427
    %v3511 = vunpack.c.h.b16 %v3427
    %v3512 = vunpack.c.l.b16 %v3428
    %v3513 = vunpack.c.h.b16 %v3428
    %v3514 = vunpack.c.l.b16 %v3429
    %v3515 = vunpack.c.h.b16 %v3429
    %v3516 = vunpack.c.l.b16 %v3430
    %v3517 = vunpack.c.h.b16 %v3430
    %v3518 = vunpack.c.l.b16 %v3431
    %v3519 = vunpack.c.h.b16 %v3431
    %v3520 = vunpack.c.l.b16 %v3432
    %v3521 = vunpack.c.h.b16 %v3432
    %v3522 = vunpack.c.l.b16 %v3433
    %v3523 = vunpack.c.h.b16 %v3433
    %v3524 = vunpack.c.l.b16 %v3434
    %v3525 = vunpack.c.h.b16 %v3434
    %v3526 = vunpack.c.l.b16 %v3435
    %v3527 = vunpack.c.h.b16 %v3435
    %v3528 = vunpack.c.l.b16 %v3436
    %v3529 = vunpack.c.h.b16 %v3436
    %v3530 = vunpack.c.l.b16 %v3437
    %v3531 = vunpack.c.h.b16 %v3437
    %v3532 = vunpack.c.l.b16 %v3438
    %v3533 = vunpack.c.h.b16 %v3438
    %v3534 = vunpack.c.l.b16 %v3439
    %v3535 = vunpack.c.h.b16 %v3439
    %v3536 = vunpack.c.l.b16 %v3440
    %v3537 = vunpack.c.h.b16 %v3440
    %v3538 = vunpack.c.l.b16 %v3441
    %v3539 = vunpack.c.h.b16 %v3441
    %v3540 = vunpack.c.l.b16 %v3442
    %v3541 = vunpack.c.h.b16 %v3442
    %v3542 = vunpack.c.l.b16 %v3443
    %v3543 = vunpack.c.h.b16 %v3443
    %v3544 = vpack.c.b16 %v3482, %v3480
    %v3545 = vpack.c.b16 %v3483, %v3481
    %v3546 = vpack.c.b16 %v3486, %v3484
    %v3547 = vpack.c.b16 %v3487, %v3485
    %v3548 = vpack.c.b16 %v3490, %v3488
    %v3549 = vpack.c.b16 %v3491, %v3489
    %v3550 = vpack.c.b16 %v3494, %v3492
    %v3551 = vpack.c.b16 %v3495, %v3493
    %v3552 = vpack.c.b16 %v3498, %v3496
    %v3553 = vpack.c.b16 %v3499, %v3497
    %v3554 = vpack.c.b16 %v3502, %v3500
    %v3555 = vpack.c.b16 %v3503, %v3501
    %v3556 = vpack.c.b16 %v3506, %v3504
    %v3557 = vpack.c.b16 %v3507, %v3505
    %v3558 = vpack.c.b16 %v3510, %v3508
    %v3559 = vpack.c.b16 %v3511, %v3509
    %v3560 = vpack.c.b16 %v3514, %v3512
    %v3561 = vpack.c.b16 %v3515, %v3513
    %v3562 = vpack.c.b16 %v3518, %v3516
    %v3563 = vpack.c.b16 %v3519, %v3517
    %v3564 = vpack.c.b16 %v3522, %v3520
    %v3565 = vpack.c.b16 %v3523, %v3521
    %v3566 = vpack.c.b16 %v3526, %v3524
    %v3567 = vpack.c.b16 %v3527, %v3525
    %v3568 = vpack.c.b16 %v3530, %v3528
    %v3569 = vpack.c.b16 %v3531, %v3529
    %v3570 = vpack.c.b16 %v3534, %v3532
    %v3571 = vpack.c.b16 %v3535, %v3533
    %v3572 = vpack.c.b16 %v3538, %v3536
    %v3573 = vpack.c.b16 %v3539, %v3537
    %v3574 = vpack.c.b16 %v3542, %v3540
    %v3575 = vpack.c.b16 %v3543, %v3541
    %3608 = vmatpush.bf16.msra.mxu0 %v3558
    %3609 = vmatpush.bf16.msra.mxu0 %v3556
    %3610 = vmatpush.bf16.msra.mxu0 %v3554
    %3611 = vmatpush.bf16.msra.mxu0 %v3552
    %3612 = vmatpush.bf16.msra.mxu0 %v3550
    %3613 = vmatpush.bf16.msra.mxu0 %v3548
    %3614 = vmatpush.bf16.msra.mxu0 %v3546
    %3615 = vmatpush.bf16.msra.mxu0 %v3544
    %3616 = vmatmul.bf16.gmra.mxu0 %v3444
    %v3617 = vpop.f32.mrf.mxu0
    %v3618 = vadd.f32 %v3446, %v3617
    %v3619 = vpop.f32.mrf.mxu0
    %v3620 = vadd.f32 %v3446, %v3619
    %3621 = vdwg.mxu0
    %3622 = vmatpush.bf16.msra.mxu0 %v3574
    %3623 = vmatpush.bf16.msra.mxu0 %v3572
    %3624 = vmatpush.bf16.msra.mxu0 %v3570
    %3625 = vmatpush.bf16.msra.mxu0 %v3568
    %3626 = vmatpush.bf16.msra.mxu0 %v3566
    %3627 = vmatpush.bf16.msra.mxu0 %v3564
    %3628 = vmatpush.bf16.msra.mxu0 %v3562
    %3629 = vmatpush.bf16.msra.mxu0 %v3560
    %3630 = vmatmul.bf16.gmra.mxu0 %v3445
    %v3631 = vpop.f32.mrf.mxu0
    %v3632 = vadd.f32 %v3618, %v3631
    %v3633 = vpop.f32.mrf.mxu0
    %v3634 = vadd.f32 %v3620, %v3633
    %3635 = vdwg.mxu0
    %3636 = vmatpush.bf16.msra.mxu0 %v3559
    %3637 = vmatpush.bf16.msra.mxu0 %v3557
    %3638 = vmatpush.bf16.msra.mxu0 %v3555
    %3639 = vmatpush.bf16.msra.mxu0 %v3553
    %3640 = vmatpush.bf16.msra.mxu0 %v3551
    %3641 = vmatpush.bf16.msra.mxu0 %v3549
    %3642 = vmatpush.bf16.msra.mxu0 %v3547
    %3643 = vmatpush.bf16.msra.mxu0 %v3545
    %3644 = vmatmul.bf16.gmra.mxu0 %v3444
    %v3645 = vpop.f32.mrf.mxu0
    %v3646 = vadd.f32 %v3447, %v3645
    %v3647 = vpop.f32.mrf.mxu0
    %v3648 = vadd.f32 %v3447, %v3647
    %3649 = vdwg.mxu0
    %3650 = vmatpush.bf16.msra.mxu0 %v3575
    %3651 = vmatpush.bf16.msra.mxu0 %v3573
    %3652 = vmatpush.bf16.msra.mxu0 %v3571
    %3653 = vmatpush.bf16.msra.mxu0 %v3569
    %3654 = vmatpush.bf16.msra.mxu0 %v3567
    %3655 = vmatpush.bf16.msra.mxu0 %v3565
    %3656 = vmatpush.bf16.msra.mxu0 %v3563
    %3657 = vmatpush.bf16.msra.mxu0 %v3561
    %3658 = vmatmul.bf16.gmra.mxu0 %v3445
    %v3659 = vpop.f32.mrf.mxu0
    %v3660 = vadd.f32 %v3646, %v3659
    %v3661 = vpop.f32.mrf.mxu0
    %v3662 = vadd.f32 %v3648, %v3661
    %3663 = vdwg.mxu0
    %v3664 = vmax.f32 %v3632, 0.0
    %v3665 = vmax.f32 %v3660, 0.0
    %v3666 = vmax.f32 %v3634, 0.0
    %v3667 = vmax.f32 %v3662, 0.0
    %s3668 = scalar_lea.vmem [#allocation7], 256
    %v3669 = vld [vmem:[%s3668] sm:$0xff]
    %v3670 = vld [vmem:[%s3668 + $0x8] sm:$0xff]
    %v3671 = vld [vmem:[%s3668 + $0x10] sm:$0xff]
    %v3672 = vld [vmem:[%s3668 + $0x18] sm:$0xff]
    %v3673 = vld [vmem:[%s3668 + $0x20] sm:$0xff]
    %v3674 = vld [vmem:[%s3668 + $0x28] sm:$0xff]
    %v3675 = vld [vmem:[%s3668 + $0x30] sm:$0xff]
    %v3676 = vld [vmem:[%s3668 + $0x38] sm:$0xff]
    %v3677 = vld [vmem:[%s3668 + $0x40] sm:$0xff]
    %v3678 = vld [vmem:[%s3668 + $0x48] sm:$0xff]
    %v3679 = vld [vmem:[%s3668 + $0x50] sm:$0xff]
    %v3680 = vld [vmem:[%s3668 + $0x58] sm:$0xff]
    %v3681 = vld [vmem:[%s3668 + $0x60] sm:$0xff]
    %v3682 = vld [vmem:[%s3668 + $0x68] sm:$0xff]
    %v3683 = vld [vmem:[%s3668 + $0x70] sm:$0xff]
    %v3684 = vld [vmem:[%s3668 + $0x78] sm:$0xff]
    %v3685 = vld [vmem:[%s3668 + $0x80] sm:$0xff]
    %v3686 = vld [vmem:[%s3668 + $0x88] sm:$0xff]
    %v3687 = vld [vmem:[%s3668 + $0x90] sm:$0xff]
    %v3688 = vld [vmem:[%s3668 + $0x98] sm:$0xff]
    %v3689 = vld [vmem:[%s3668 + $0xa0] sm:$0xff]
    %v3690 = vld [vmem:[%s3668 + $0xa8] sm:$0xff]
    %v3691 = vld [vmem:[%s3668 + $0xb0] sm:$0xff]
    %v3692 = vld [vmem:[%s3668 + $0xb8] sm:$0xff]
    %v3693 = vld [vmem:[%s3668 + $0xc0] sm:$0xff]
    %v3694 = vld [vmem:[%s3668 + $0xc8] sm:$0xff]
    %v3695 = vld [vmem:[%s3668 + $0xd0] sm:$0xff]
    %v3696 = vld [vmem:[%s3668 + $0xd8] sm:$0xff]
    %v3697 = vld [vmem:[%s3668 + $0xe0] sm:$0xff]
    %v3698 = vld [vmem:[%s3668 + $0xe8] sm:$0xff]
    %v3699 = vld [vmem:[%s3668 + $0xf0] sm:$0xff]
    %v3700 = vld [vmem:[%s3668 + $0xf8] sm:$0xff]
    %v3701 = vpack.c.bf16 %v3666, %v3664
    %v3702 = vpack.c.bf16 %v3667, %v3665
    %v3703 = vperm.slane %v2079, 7
    %v3704 = vperm.slane %v2080, 7
    %v3737 = vunpack.c.l.b16 %v3669
    %v3738 = vunpack.c.h.b16 %v3669
    %v3739 = vunpack.c.l.b16 %v3670
    %v3740 = vunpack.c.h.b16 %v3670
    %v3741 = vunpack.c.l.b16 %v3671
    %v3742 = vunpack.c.h.b16 %v3671
    %v3743 = vunpack.c.l.b16 %v3672
    %v3744 = vunpack.c.h.b16 %v3672
    %v3745 = vunpack.c.l.b16 %v3673
    %v3746 = vunpack.c.h.b16 %v3673
    %v3747 = vunpack.c.l.b16 %v3674
    %v3748 = vunpack.c.h.b16 %v3674
    %v3749 = vunpack.c.l.b16 %v3675
    %v3750 = vunpack.c.h.b16 %v3675
    %v3751 = vunpack.c.l.b16 %v3676
    %v3752 = vunpack.c.h.b16 %v3676
    %v3753 = vunpack.c.l.b16 %v3677
    %v3754 = vunpack.c.h.b16 %v3677
    %v3755 = vunpack.c.l.b16 %v3678
    %v3756 = vunpack.c.h.b16 %v3678
    %v3757 = vunpack.c.l.b16 %v3679
    %v3758 = vunpack.c.h.b16 %v3679
    %v3759 = vunpack.c.l.b16 %v3680
    %v3760 = vunpack.c.h.b16 %v3680
    %v3761 = vunpack.c.l.b16 %v3681
    %v3762 = vunpack.c.h.b16 %v3681
    %v3763 = vunpack.c.l.b16 %v3682
    %v3764 = vunpack.c.h.b16 %v3682
    %v3765 = vunpack.c.l.b16 %v3683
    %v3766 = vunpack.c.h.b16 %v3683
    %v3767 = vunpack.c.l.b16 %v3684
    %v3768 = vunpack.c.h.b16 %v3684
    %v3769 = vunpack.c.l.b16 %v3685
    %v3770 = vunpack.c.h.b16 %v3685
    %v3771 = vunpack.c.l.b16 %v3686
    %v3772 = vunpack.c.h.b16 %v3686
    %v3773 = vunpack.c.l.b16 %v3687
    %v3774 = vunpack.c.h.b16 %v3687
    %v3775 = vunpack.c.l.b16 %v3688
    %v3776 = vunpack.c.h.b16 %v3688
    %v3777 = vunpack.c.l.b16 %v3689
    %v3778 = vunpack.c.h.b16 %v3689
    %v3779 = vunpack.c.l.b16 %v3690
    %v3780 = vunpack.c.h.b16 %v3690
    %v3781 = vunpack.c.l.b16 %v3691
    %v3782 = vunpack.c.h.b16 %v3691
    %v3783 = vunpack.c.l.b16 %v3692
    %v3784 = vunpack.c.h.b16 %v3692
    %v3785 = vunpack.c.l.b16 %v3693
    %v3786 = vunpack.c.h.b16 %v3693
    %v3787 = vunpack.c.l.b16 %v3694
    %v3788 = vunpack.c.h.b16 %v3694
    %v3789 = vunpack.c.l.b16 %v3695
    %v3790 = vunpack.c.h.b16 %v3695
    %v3791 = vunpack.c.l.b16 %v3696
    %v3792 = vunpack.c.h.b16 %v3696
    %v3793 = vunpack.c.l.b16 %v3697
    %v3794 = vunpack.c.h.b16 %v3697
    %v3795 = vunpack.c.l.b16 %v3698
    %v3796 = vunpack.c.h.b16 %v3698
    %v3797 = vunpack.c.l.b16 %v3699
    %v3798 = vunpack.c.h.b16 %v3699
    %v3799 = vunpack.c.l.b16 %v3700
    %v3800 = vunpack.c.h.b16 %v3700
    %v3801 = vpack.c.b16 %v3739, %v3737
    %v3802 = vpack.c.b16 %v3740, %v3738
    %v3803 = vpack.c.b16 %v3743, %v3741
    %v3804 = vpack.c.b16 %v3744, %v3742
    %v3805 = vpack.c.b16 %v3747, %v3745
    %v3806 = vpack.c.b16 %v3748, %v3746
    %v3807 = vpack.c.b16 %v3751, %v3749
    %v3808 = vpack.c.b16 %v3752, %v3750
    %v3809 = vpack.c.b16 %v3755, %v3753
    %v3810 = vpack.c.b16 %v3756, %v3754
    %v3811 = vpack.c.b16 %v3759, %v3757
    %v3812 = vpack.c.b16 %v3760, %v3758
    %v3813 = vpack.c.b16 %v3763, %v3761
    %v3814 = vpack.c.b16 %v3764, %v3762
    %v3815 = vpack.c.b16 %v3767, %v3765
    %v3816 = vpack.c.b16 %v3768, %v3766
    %v3817 = vpack.c.b16 %v3771, %v3769
    %v3818 = vpack.c.b16 %v3772, %v3770
    %v3819 = vpack.c.b16 %v3775, %v3773
    %v3820 = vpack.c.b16 %v3776, %v3774
    %v3821 = vpack.c.b16 %v3779, %v3777
    %v3822 = vpack.c.b16 %v3780, %v3778
    %v3823 = vpack.c.b16 %v3783, %v3781
    %v3824 = vpack.c.b16 %v3784, %v3782
    %v3825 = vpack.c.b16 %v3787, %v3785
    %v3826 = vpack.c.b16 %v3788, %v3786
    %v3827 = vpack.c.b16 %v3791, %v3789
    %v3828 = vpack.c.b16 %v3792, %v3790
    %v3829 = vpack.c.b16 %v3795, %v3793
    %v3830 = vpack.c.b16 %v3796, %v3794
    %v3831 = vpack.c.b16 %v3799, %v3797
    %v3832 = vpack.c.b16 %v3800, %v3798
    %3865 = vmatpush.bf16.msra.mxu0 %v3815
    %3866 = vmatpush.bf16.msra.mxu0 %v3813
    %3867 = vmatpush.bf16.msra.mxu0 %v3811
    %3868 = vmatpush.bf16.msra.mxu0 %v3809
    %3869 = vmatpush.bf16.msra.mxu0 %v3807
    %3870 = vmatpush.bf16.msra.mxu0 %v3805
    %3871 = vmatpush.bf16.msra.mxu0 %v3803
    %3872 = vmatpush.bf16.msra.mxu0 %v3801
    %3873 = vmatmul.bf16.gmra.mxu0 %v3701
    %v3874 = vpop.f32.mrf.mxu0
    %v3875 = vadd.f32 %v3703, %v3874
    %v3876 = vpop.f32.mrf.mxu0
    %v3877 = vadd.f32 %v3703, %v3876
    %3878 = vdwg.mxu0
    %3879 = vmatpush.bf16.msra.mxu0 %v3831
    %3880 = vmatpush.bf16.msra.mxu0 %v3829
    %3881 = vmatpush.bf16.msra.mxu0 %v3827
    %3882 = vmatpush.bf16.msra.mxu0 %v3825
    %3883 = vmatpush.bf16.msra.mxu0 %v3823
    %3884 = vmatpush.bf16.msra.mxu0 %v3821
    %3885 = vmatpush.bf16.msra.mxu0 %v3819
    %3886 = vmatpush.bf16.msra.mxu0 %v3817
    %3887 = vmatmul.bf16.gmra.mxu0 %v3702
    %v3888 = vpop.f32.mrf.mxu0
    %v3889 = vadd.f32 %v3875, %v3888
    %v3890 = vpop.f32.mrf.mxu0
    %v3891 = vadd.f32 %v3877, %v3890
    %3892 = vdwg.mxu0
    %3893 = vmatpush.bf16.msra.mxu0 %v3816
    %3894 = vmatpush.bf16.msra.mxu0 %v3814
    %3895 = vmatpush.bf16.msra.mxu0 %v3812
    %3896 = vmatpush.bf16.msra.mxu0 %v3810
    %3897 = vmatpush.bf16.msra.mxu0 %v3808
    %3898 = vmatpush.bf16.msra.mxu0 %v3806
    %3899 = vmatpush.bf16.msra.mxu0 %v3804
    %3900 = vmatpush.bf16.msra.mxu0 %v3802
    %3901 = vmatmul.bf16.gmra.mxu0 %v3701
    %v3902 = vpop.f32.mrf.mxu0
    %v3903 = vadd.f32 %v3704, %v3902
    %v3904 = vpop.f32.mrf.mxu0
    %v3905 = vadd.f32 %v3704, %v3904
    %3906 = vdwg.mxu0
    %3907 = vmatpush.bf16.msra.mxu0 %v3832
    %3908 = vmatpush.bf16.msra.mxu0 %v3830
    %3909 = vmatpush.bf16.msra.mxu0 %v3828
    %3910 = vmatpush.bf16.msra.mxu0 %v3826
    %3911 = vmatpush.bf16.msra.mxu0 %v3824
    %3912 = vmatpush.bf16.msra.mxu0 %v3822
    %3913 = vmatpush.bf16.msra.mxu0 %v3820
    %3914 = vmatpush.bf16.msra.mxu0 %v3818
    %3915 = vmatmul.bf16.gmra.mxu0 %v3702
    %v3916 = vpop.f32.mrf.mxu0
    %v3917 = vadd.f32 %v3903, %v3916
    %v3918 = vpop.f32.mrf.mxu0
    %v3919 = vadd.f32 %v3905, %v3918
    %3920 = vdwg.mxu0
    %v3921 = vadd.f32 %v3407, %v3889
    %v3922 = vadd.f32 %v3408, %v3917
    %v3923 = vadd.f32 %v3409, %v3891
    %v3924 = vadd.f32 %v3410, %v3919
    %v3925 = vadd.f32 %v3921, %v3922
    %3926 = vadd.xlane.f32.xlu0 %v3925
    %v3927 = vpop.xlane.xlu0 %3926
    %v3928 = vadd.f32 %v3923, %v3924
    %3929 = vadd.xlane.f32.xlu0 %v3928
    %v3930 = vpop.xlane.xlu0 %3929
    %v3931 = vmul.f32 %v3927, %v1447
    %v3932 = vmul.f32 %v3930, %v1447
    %v3933 = vsub.f32 %v3921, %v3931
    %v3934 = vsub.f32 %v3922, %v3931
    %v3935 = vsub.f32 %v3923, %v3932
    %v3936 = vsub.f32 %v3924, %v3932
    %v3937 = vmul.f32 %v3933, %v3933
    %v3938 = vmul.f32 %v3934, %v3934
    %v3939 = vmul.f32 %v3935, %v3935
    %v3940 = vmul.f32 %v3936, %v3936
    %v3941 = vadd.f32 %v3937, %v3938
    %3942 = vadd.xlane.f32.xlu0 %v3941
    %v3943 = vpop.xlane.xlu0 %3942
    %v3944 = vadd.f32 %v3939, %v3940
    %3945 = vadd.xlane.f32.xlu0 %v3944
    %v3946 = vpop.xlane.xlu0 %3945
    %v3947 = vmul.f32 %v3943, %v1447
    %v3948 = vmul.f32 %v3946, %v1447
    %v3949 = vadd.f32 %v3947, 1e-05
    %v3950 = vadd.f32 %v3948, 1e-05
    %v3951 = vrsqrt.pop %v3949
    %v3952 = vmul.f32 %v3951, %v3949
    %v3953 = vmul.f32 %v3952, %v3951
    %v3954 = vmul.f32 0.5, %v3953
    %v3955 = vsub.f32 1.5, %v3954
    %v3956 = vmul.f32 %v3951, %v3955
    %vm3957 = vweird.f32 %v3949
    %vm3958 = vweird.f32 %v3951
    %vm3959 = vmor %vm3957, %vm3958
    %v3960 = vsel %vm3959, %v3951, %v3956
    %v3961 = vrsqrt.pop %v3950
    %v3962 = vmul.f32 %v3961, %v3950
    %v3963 = vmul.f32 %v3962, %v3961
    %v3964 = vmul.f32 0.5, %v3963
    %v3965 = vsub.f32 1.5, %v3964
    %v3966 = vmul.f32 %v3961, %v3965
    %vm3967 = vweird.f32 %v3950
    %vm3968 = vweird.f32 %v3961
    %vm3969 = vmor %vm3967, %vm3968
    %v3970 = vsel %vm3969, %v3961, %v3966
    %v3971 = vmul.f32 %v3933, %v3960
    %v3972 = vmul.f32 %v3934, %v3960
    %v3973 = vmul.f32 %v3935, %v3970
    %v3974 = vmul.f32 %v3936, %v3970
    %v3975 = vperm.slane %v2081, 0
    %v3976 = vperm.slane %v2082, 0
    %v3977 = vmul.f32 %v3971, %v3975
    %v3978 = vmul.f32 %v3972, %v3976
    %v3979 = vmul.f32 %v3973, %v3975
    %v3980 = vmul.f32 %v3974, %v3976
    %v3981 = vperm.slane %v2081, 1
    %v3982 = vperm.slane %v2082, 1
    %v3983 = vadd.f32 %v3977, %v3981
    %v3984 = vadd.f32 %v3978, %v3982
    %v3985 = vadd.f32 %v3979, %v3981
    %v3986 = vadd.f32 %v3980, %v3982
    %v3987 = vrot.slane %v3983, 4
    %v3988 = vadd.f32 %v3983, %v3987
    %v3989 = vrot.slane %v3988, 2
    %v3990 = vadd.f32 %v3988, %v3989
    %v3991 = vrot.slane %v3990, 1
    %v3992 = vadd.f32 %v3990, %v3991
    %v3993 = vrot.slane %v3984, 4
    %v3994 = vadd.f32 %v3984, %v3993
    %v3995 = vrot.slane %v3994, 2
    %v3996 = vadd.f32 %v3994, %v3995
    %v3997 = vrot.slane %v3996, 1
    %v3998 = vadd.f32 %v3996, %v3997
    %v3999 = vrot.slane %v3985, 4
    %v4000 = vadd.f32 %v3985, %v3999
    %v4001 = vrot.slane %v4000, 2
    %v4002 = vadd.f32 %v4000, %v4001
    %v4003 = vrot.slane %v4002, 1
    %v4004 = vadd.f32 %v4002, %v4003
    %v4005 = vrot.slane %v3986, 4
    %v4006 = vadd.f32 %v3986, %v4005
    %v4007 = vrot.slane %v4006, 2
    %v4008 = vadd.f32 %v4006, %v4007
    %v4009 = vrot.slane %v4008, 1
    %v4010 = vadd.f32 %v4008, %v4009
    %v4011 = vrcp.pop 8.0
    %v4012 = vmul.f32 8.0, %v4011
    %v4013 = vsub.f32 1.0, %v4012
    %v4014 = vmul.f32 %v4011, %v4013
    %v4015 = vadd.f32 %v4011, %v4014
    %vm4016 = vweird.f32 %v4011
    %v4017 = vsel %vm4016, %v4011, %v4015
    %v4018 = vmul.f32 %v3992, %v4017
    %v4019 = vmul.f32 %v3998, %v4017
    %v4020 = vmul.f32 %v4004, %v4017
    %v4021 = vmul.f32 %v4010, %v4017
    %v4022 = vld [vmem:[%s9] sm:$0x77]
    %v4023 = vld [vmem:[#allocation9] sm:$0xff]
    %v4024 = vld [vmem:[#allocation9 + $0x8] sm:$0xff]
    %v4025 = vld [vmem:[#allocation9 + $0x10] sm:$0xff]
    %v4026 = vld [vmem:[#allocation9 + $0x18] sm:$0xff]
    %v4027 = vld [vmem:[#allocation9 + $0x20] sm:$0xff]
    %v4028 = vld [vmem:[#allocation9 + $0x28] sm:$0xff]
    %v4029 = vld [vmem:[#allocation9 + $0x30] sm:$0xff]
    %v4030 = vld [vmem:[#allocation9 + $0x38] sm:$0xff]
    %v4031 = vld [vmem:[#allocation9 + $0x40] sm:$0xff]
    %v4032 = vld [vmem:[#allocation9 + $0x48] sm:$0xff]
    %v4033 = vld [vmem:[#allocation9 + $0x50] sm:$0xff]
    %v4034 = vld [vmem:[#allocation9 + $0x58] sm:$0xff]
    %v4035 = vld [vmem:[#allocation9 + $0x60] sm:$0xff]
    %v4036 = vld [vmem:[#allocation9 + $0x68] sm:$0xff]
    %v4037 = vld [vmem:[#allocation9 + $0x70] sm:$0xff]
    %v4038 = vld [vmem:[#allocation9 + $0x78] sm:$0xff]
    %v4039 = vld [vmem:[#allocation9 + $0x80] sm:$0xff]
    %v4040 = vld [vmem:[#allocation9 + $0x88] sm:$0xff]
    %v4041 = vld [vmem:[#allocation9 + $0x90] sm:$0xff]
    %v4042 = vld [vmem:[#allocation9 + $0x98] sm:$0xff]
    %v4043 = vld [vmem:[#allocation9 + $0xa0] sm:$0xff]
    %v4044 = vld [vmem:[#allocation9 + $0xa8] sm:$0xff]
    %v4045 = vld [vmem:[#allocation9 + $0xb0] sm:$0xff]
    %v4046 = vld [vmem:[#allocation9 + $0xb8] sm:$0xff]
    %v4047 = vld [vmem:[#allocation9 + $0xc0] sm:$0xff]
    %v4048 = vld [vmem:[#allocation9 + $0xc8] sm:$0xff]
    %v4049 = vld [vmem:[#allocation9 + $0xd0] sm:$0xff]
    %v4050 = vld [vmem:[#allocation9 + $0xd8] sm:$0xff]
    %v4051 = vld [vmem:[#allocation9 + $0xe0] sm:$0xff]
    %v4052 = vld [vmem:[#allocation9 + $0xe8] sm:$0xff]
    %v4053 = vld [vmem:[#allocation9 + $0xf0] sm:$0xff]
    %v4054 = vld [vmem:[#allocation9 + $0xf8] sm:$0xff]
    %v4055 = vpack.c.bf16 %v4018, %v4018
    %v4056 = vpack.c.bf16 %v4019, %v4019
    %v4057 = vpack.c.bf16 %v4020, %v4020
    %v4058 = vpack.c.bf16 %v4021, %v4021
    %v4060 = vperm.slane %v4022, 0
    %v4061 = vperm.slane %v4022, 4
    %v4064 = vperm.slane %v4060, 0
    %v4065 = vperm.slane %v4061, 0
    %v4070 = vunpack.c.l.b16 %v4055
    %v4071 = vunpack.c.l.b16 %v4056
    %v4072 = vunpack.c.l.b16 %v4057
    %v4073 = vunpack.c.l.b16 %v4058
    %vm4074 = vcmask 1041409
    %v4075 = vsel %vm4074, %v4072, %v4070
    %v4076 = vsel %vm4074, %v4073, %v4071
    %v4077 = vpack.c.b16 %v4075, %v4075
    %v4078 = vpack.c.b16 %v4076, %v4076
    %v4113 = vunpack.c.l.b16 %v4023
    %v4114 = vunpack.c.h.b16 %v4023
    %v4115 = vunpack.c.l.b16 %v4024
    %v4116 = vunpack.c.h.b16 %v4024
    %v4117 = vunpack.c.l.b16 %v4025
    %v4118 = vunpack.c.h.b16 %v4025
    %v4119 = vunpack.c.l.b16 %v4026
    %v4120 = vunpack.c.h.b16 %v4026
    %v4121 = vunpack.c.l.b16 %v4027
    %v4122 = vunpack.c.h.b16 %v4027
    %v4123 = vunpack.c.l.b16 %v4028
    %v4124 = vunpack.c.h.b16 %v4028
    %v4125 = vunpack.c.l.b16 %v4029
    %v4126 = vunpack.c.h.b16 %v4029
    %v4127 = vunpack.c.l.b16 %v4030
    %v4128 = vunpack.c.h.b16 %v4030
    %v4129 = vunpack.c.l.b16 %v4031
    %v4130 = vunpack.c.h.b16 %v4031
    %v4131 = vunpack.c.l.b16 %v4032
    %v4132 = vunpack.c.h.b16 %v4032
    %v4133 = vunpack.c.l.b16 %v4033
    %v4134 = vunpack.c.h.b16 %v4033
    %v4135 = vunpack.c.l.b16 %v4034
    %v4136 = vunpack.c.h.b16 %v4034
    %v4137 = vunpack.c.l.b16 %v4035
    %v4138 = vunpack.c.h.b16 %v4035
    %v4139 = vunpack.c.l.b16 %v4036
    %v4140 = vunpack.c.h.b16 %v4036
    %v4141 = vunpack.c.l.b16 %v4037
    %v4142 = vunpack.c.h.b16 %v4037
    %v4143 = vunpack.c.l.b16 %v4038
    %v4144 = vunpack.c.h.b16 %v4038
    %v4145 = vunpack.c.l.b16 %v4039
    %v4146 = vunpack.c.h.b16 %v4039
    %v4147 = vunpack.c.l.b16 %v4040
    %v4148 = vunpack.c.h.b16 %v4040
    %v4149 = vunpack.c.l.b16 %v4041
    %v4150 = vunpack.c.h.b16 %v4041
    %v4151 = vunpack.c.l.b16 %v4042
    %v4152 = vunpack.c.h.b16 %v4042
    %v4153 = vunpack.c.l.b16 %v4043
    %v4154 = vunpack.c.h.b16 %v4043
    %v4155 = vunpack.c.l.b16 %v4044
    %v4156 = vunpack.c.h.b16 %v4044
    %v4157 = vunpack.c.l.b16 %v4045
    %v4158 = vunpack.c.h.b16 %v4045
    %v4159 = vunpack.c.l.b16 %v4046
    %v4160 = vunpack.c.h.b16 %v4046
    %v4161 = vunpack.c.l.b16 %v4047
    %v4162 = vunpack.c.h.b16 %v4047
    %v4163 = vunpack.c.l.b16 %v4048
    %v4164 = vunpack.c.h.b16 %v4048
    %v4165 = vunpack.c.l.b16 %v4049
    %v4166 = vunpack.c.h.b16 %v4049
    %v4167 = vunpack.c.l.b16 %v4050
    %v4168 = vunpack.c.h.b16 %v4050
    %v4169 = vunpack.c.l.b16 %v4051
    %v4170 = vunpack.c.h.b16 %v4051
    %v4171 = vunpack.c.l.b16 %v4052
    %v4172 = vunpack.c.h.b16 %v4052
    %v4173 = vunpack.c.l.b16 %v4053
    %v4174 = vunpack.c.h.b16 %v4053
    %v4175 = vunpack.c.l.b16 %v4054
    %v4176 = vunpack.c.h.b16 %v4054
    %v4177 = vpack.c.b16 %v4115, %v4113
    %v4178 = vpack.c.b16 %v4116, %v4114
    %v4179 = vpack.c.b16 %v4119, %v4117
    %v4180 = vpack.c.b16 %v4120, %v4118
    %v4181 = vpack.c.b16 %v4123, %v4121
    %v4182 = vpack.c.b16 %v4124, %v4122
    %v4183 = vpack.c.b16 %v4127, %v4125
    %v4184 = vpack.c.b16 %v4128, %v4126
    %v4185 = vpack.c.b16 %v4131, %v4129
    %v4186 = vpack.c.b16 %v4132, %v4130
    %v4187 = vpack.c.b16 %v4135, %v4133
    %v4188 = vpack.c.b16 %v4136, %v4134
    %v4189 = vpack.c.b16 %v4139, %v4137
    %v4190 = vpack.c.b16 %v4140, %v4138
    %v4191 = vpack.c.b16 %v4143, %v4141
    %v4192 = vpack.c.b16 %v4144, %v4142
    %v4193 = vpack.c.b16 %v4147, %v4145
    %v4194 = vpack.c.b16 %v4148, %v4146
    %v4195 = vpack.c.b16 %v4151, %v4149
    %v4196 = vpack.c.b16 %v4152, %v4150
    %v4197 = vpack.c.b16 %v4155, %v4153
    %v4198 = vpack.c.b16 %v4156, %v4154
    %v4199 = vpack.c.b16 %v4159, %v4157
    %v4200 = vpack.c.b16 %v4160, %v4158
    %v4201 = vpack.c.b16 %v4163, %v4161
    %v4202 = vpack.c.b16 %v4164, %v4162
    %v4203 = vpack.c.b16 %v4167, %v4165
    %v4204 = vpack.c.b16 %v4168, %v4166
    %v4205 = vpack.c.b16 %v4171, %v4169
    %v4206 = vpack.c.b16 %v4172, %v4170
    %v4207 = vpack.c.b16 %v4175, %v4173
    %v4208 = vpack.c.b16 %v4176, %v4174
    %4241 = vmatpush.bf16.msra.mxu0 %v4191
    %4242 = vmatpush.bf16.msra.mxu0 %v4189
    %4243 = vmatpush.bf16.msra.mxu0 %v4187
    %4244 = vmatpush.bf16.msra.mxu0 %v4185
    %4245 = vmatpush.bf16.msra.mxu0 %v4183
    %4246 = vmatpush.bf16.msra.mxu0 %v4181
    %4247 = vmatpush.bf16.msra.mxu0 %v4179
    %4248 = vmatpush.bf16.msra.mxu0 %v4177
    %4249 = vmatmul.bf16.gmra.mxu0 %v4077
    %v4250 = vpop.f32.mrf.mxu0
    %v4251 = vadd.f32 %v4064, %v4250
    %v4252 = vpop.f32.mrf.mxu0
    %4253 = vdwg.mxu0
    %4254 = vmatpush.bf16.msra.mxu0 %v4207
    %4255 = vmatpush.bf16.msra.mxu0 %v4205
    %4256 = vmatpush.bf16.msra.mxu0 %v4203
    %4257 = vmatpush.bf16.msra.mxu0 %v4201
    %4258 = vmatpush.bf16.msra.mxu0 %v4199
    %4259 = vmatpush.bf16.msra.mxu0 %v4197
    %4260 = vmatpush.bf16.msra.mxu0 %v4195
    %4261 = vmatpush.bf16.msra.mxu0 %v4193
    %4262 = vmatmul.bf16.gmra.mxu0 %v4078
    %v4263 = vpop.f32.mrf.mxu0
    %v4264 = vadd.f32 %v4251, %v4263
    %v4265 = vpop.f32.mrf.mxu0
    %4266 = vdwg.mxu0
    %4267 = vmatpush.bf16.msra.mxu0 %v4192
    %4268 = vmatpush.bf16.msra.mxu0 %v4190
    %4269 = vmatpush.bf16.msra.mxu0 %v4188
    %4270 = vmatpush.bf16.msra.mxu0 %v4186
    %4271 = vmatpush.bf16.msra.mxu0 %v4184
    %4272 = vmatpush.bf16.msra.mxu0 %v4182
    %4273 = vmatpush.bf16.msra.mxu0 %v4180
    %4274 = vmatpush.bf16.msra.mxu0 %v4178
    %4275 = vmatmul.bf16.gmra.mxu0 %v4077
    %v4276 = vpop.f32.mrf.mxu0
    %v4277 = vadd.f32 %v4065, %v4276
    %v4278 = vpop.f32.mrf.mxu0
    %4279 = vdwg.mxu0
    %4280 = vmatpush.bf16.msra.mxu0 %v4208
    %4281 = vmatpush.bf16.msra.mxu0 %v4206
    %4282 = vmatpush.bf16.msra.mxu0 %v4204
    %4283 = vmatpush.bf16.msra.mxu0 %v4202
    %4284 = vmatpush.bf16.msra.mxu0 %v4200
    %4285 = vmatpush.bf16.msra.mxu0 %v4198
    %4286 = vmatpush.bf16.msra.mxu0 %v4196
    %4287 = vmatpush.bf16.msra.mxu0 %v4194
    %4288 = vmatmul.bf16.gmra.mxu0 %v4078
    %v4289 = vpop.f32.mrf.mxu0
    %v4290 = vadd.f32 %v4277, %v4289
    %v4291 = vpop.f32.mrf.mxu0
    %4292 = vdwg.mxu0
    %vm4293 = vcmp.gt.f32.partialorder %v4264, 0.0
    %vm4294 = vcmp.gt.f32.partialorder %v4290, 0.0
    %v4295 = vmul.f32 %v4264, 0.01
    %v4296 = vmul.f32 %v4290, 0.01
    %v4297 = vsel %vm4293, %v4264, %v4295
    %v4298 = vsel %vm4294, %v4290, %v4296
    %v4299 = vperm.slane %v4022, 1
    %v4300 = vperm.slane %v4022, 5
    %v4303 = vperm.slane %v4299, 1
    %v4304 = vperm.slane %v4300, 1
    %v4305 = vmul.f32 %v4297, %v4303
    %v4306 = vmul.f32 %v4298, %v4304
    %vm4307 = vcmask 1041408
    %v4308 = vsel %vm4307, %v4305, 0.0
    %v4309 = vsel %vm4307, %v4306, 0.0
    %v4310 = vadd.f32 %v4308, %v4309
    %4311 = vadd.xlane.f32.xlu0 %v4310
    %v4312 = vpop.xlane.xlu0 %4311
    %v4313 = vperm.slane %v4022, 2
    %v4314 = vadd.f32 %v4312, %v4313
    %vm4315 = vcmask 1024
    %4316 = vst.msk [vmem:[%s10] sm:$0x3] %vm4315, %v4314
    // Predicated region
    $region62: #{transformer_forward.1} parent=1 // pred_check
      _
    $region63: #{transformer_forward.1} parent=1 // pred_check_branch
      %4318 = sbr.rel (0) target = $region65
    $region64: #{transformer_forward.1} parent=1 // pred_region
      _
    $region65: #{transformer_forward.1} parent=1 // pred_fallthru
      _
    // Predicated region
    $region66: #{transformer_forward.1} parent=1 // pred_check
      _
    $region67: #{transformer_forward.1} parent=1 // pred_check_branch
      %4320 = sbr.rel (0) target = $region69
    $region68: #{transformer_forward.1} parent=1 // pred_region
      _
    $region69: #{transformer_forward.1} parent=1 // pred_fallthru
      _
    %4321 = vsyncpa [#allocation3], 1
    %4322 = vsyncpa [#allocation5], 1
    %4323 = vsyncpa [#allocation8], 1

</llo_original>
